<compile_context>
chip_gen: v7x
topology: tpu7x:2x2x1
jax: 0.10.0
libtpu: 0.0.40
codegen_flags: <defaults>
</compile_context>

<pallas_src>
import functools

import numpy as np
import jax
import jax.numpy as jnp
from jax.experimental import pallas as pl
from jax.experimental.pallas import tpu as pltpu

LANE = 128
SUBLANE = 8


def _layer_sizes(in_ch, out_ch, deep):
    """Emulate torch.linspace(in_ch, out_ch, steps=deep) (float32, two-sided
    evaluation as in ATen's RangeFactories kernel) followed by int() truncation."""
    start = np.float32(in_ch)
    end = np.float32(out_ch)
    if deep == 1:
        return [int(start)]
    step = np.float32((end - start) / np.float32(deep - 1))
    halfway = deep // 2
    vals = []
    for i in range(deep):
        if i < halfway:
            v = np.float32(start + np.float32(step * np.float32(i)))
        else:
            v = np.float32(end - np.float32(step * np.float32(deep - 1 - i)))
        vals.append(v)
    return [int(v) for v in vals]


def mlp_kernel(x_ref, w_ref, b_ref, out_ref, wpad_ref, *, n_layers, k_compact):
    """x_ref: (TILE_M, PAD)   w_ref: (L, K, PAD) compact-K weights
    b_ref: (L, 1, PAD)        out_ref: (TILE_M, PAD)
    wpad_ref: (PAD, PAD) VMEM scratch; rows [K:PAD) stay exactly zero."""
    # Zero the scratch every grid step (scratch is per-core under "parallel"
    # semantics, so we must not gate this on program_id).  16 vreg stores: cheap.
    wpad_ref[...] = jnp.zeros_like(wpad_ref)

    h = x_ref[...]                                   # f32, lane-dense (TILE_M, PAD)
    for i in range(n_layers):                        # statically unrolled: static offsets
        # Expand the compact (K, PAD) slab into a full (PAD, PAD) MXU operand;
        # rows >= K are zero, so padded lanes of h contribute nothing.
        wpad_ref[0:k_compact, :] = w_ref[i]
        h = jnp.dot(h, wpad_ref[...], preferred_element_type=jnp.float32) + b_ref[i]
        if i < n_layers - 1:                         # nn.Sequential drops the last ReLU
            h = jnp.maximum(h, 0.0)
    out_ref[...] = h


def ai_model_forward(x_pad, w_stack, b_stack, *, tile_m):
    """x_pad: (B_pad, PAD) f32, B_pad % tile_m == 0.  Returns padded (B_pad, PAD)."""
    b_pad, pad = x_pad.shape
    n_layers, k_compact, pad_w = w_stack.shape
    assert pad_w == pad and b_pad % tile_m == 0
    kernel = functools.partial(mlp_kernel, n_layers=n_layers, k_compact=k_compact)
    return pl.pallas_call(
        kernel,
        out_shape=jax.ShapeDtypeStruct((b_pad, pad), jnp.float32),
        grid=(b_pad // tile_m,),
        in_specs=[
            # Activations: one tile per grid step.
            pl.BlockSpec((tile_m, pad), lambda i: (i, 0)),
            # Parameters: constant index_map -> resident in VMEM across all tiles.
            pl.BlockSpec((n_layers, k_compact, pad), lambda i: (0, 0, 0)),
            pl.BlockSpec((n_layers, 1, pad), lambda i: (0, 0, 0)),
        ],
        out_specs=pl.BlockSpec((tile_m, pad), lambda i: (i, 0)),
        scratch_shapes=[pltpu.VMEM((pad, pad), jnp.float32)],
        compiler_params=pltpu.CompilerParams(
            dimension_semantics=("parallel",)),      # shards batch tiles across v7x TCs
    )(x_pad, w_stack, b_stack)


def init_params(key, sizes):
    # Deterministic init mimicking PyTorch's default uniform(-1/sqrt(in), 1/sqrt(in)).
    # Weights stored as (in_features, out_features) so the kernel computes
    # y = x @ W + b  ==  PyTorch's  x @ weight.T + bias .
    weights, biases = [], []
    for i in range(len(sizes) - 1):
        in_c, out_c = sizes[i], sizes[i + 1]
        key, kw, kb = jax.random.split(key, 3)
        bound = 1.0 / np.sqrt(in_c)
        w = jax.random.uniform(kw, (in_c, out_c), jnp.float32, -bound, bound)
        b = jax.random.uniform(kb, (out_c,), jnp.float32, -bound, bound)
        weights.append(w)
        biases.append(b)
    return weights, biases


def pad_and_stack_params(weights, biases, pad, k_compact):
    """Compact-K stacking: weights -> (L, K, pad), biases -> (L, 1, pad).

    K rows / pad cols beyond the real (in_c, out_c) are exactly 0, so padded
    lanes stay 0 through every matmul + bias + ReLU (no leakage into real lanes).
    """
    n_layers = len(weights)
    w_stack = np.zeros((n_layers, k_compact, pad), dtype=np.float32)
    b_stack = np.zeros((n_layers, 1, pad), dtype=np.float32)
    for i, (w, b) in enumerate(zip(weights, biases)):
        in_c, out_c = w.shape
        assert in_c <= k_compact and out_c <= pad
        w_stack[i, :in_c, :out_c] = np.asarray(w, dtype=np.float32)
        b_stack[i, 0, :out_c] = np.asarray(b, dtype=np.float32)
    return jnp.asarray(w_stack), jnp.asarray(b_stack)


def pad_input(x, pad, tile_m):
    b, f = x.shape
    b_pad = -(-b // tile_m) * tile_m
    x_pad = np.zeros((b_pad, pad), dtype=np.float32)
    x_pad[:b, :f] = np.asarray(x, dtype=np.float32)
    return jnp.asarray(x_pad)


def reference_forward(x, weights, biases):
    h = x
    n = len(weights)
    for i, (w, b) in enumerate(zip(weights, biases)):
        h = h @ w + b[None, :]
        if i < n - 1:
            h = jnp.maximum(h, 0.0)
    return h


if __name__ == "__main__":
    in_ch, out_ch, deep = 32, 8, 10   # AI_model(in_ch=32, out_ch=8, deep=10)
    batch = 512                       # batched workload: exercises the parallel batch grid

    sizes = _layer_sizes(in_ch, out_ch, deep)   # [32,29,26,24,21,18,16,13,10,8]
    assert max(sizes) <= LANE
    pad = LANE
    # Compact contraction width: max in_features, rounded up to the sublane (8).
    k_compact = -(-max(sizes[:-1]) // SUBLANE) * SUBLANE
    # >=256-row tiles fill the MXU on v6e/v7x; small batches collapse to one tile.
    tile_m = 256 if batch >= 256 else -(-batch // SUBLANE) * SUBLANE

    key = jax.random.PRNGKey(0)
    key, kx = jax.random.split(key)
    x = jax.random.normal(kx, (batch, in_ch), dtype=jnp.float32)

    weights, biases = init_params(key, sizes)
    w_stack, b_stack = pad_and_stack_params(weights, biases, pad, k_compact)
    x_pad = pad_input(x, pad, tile_m)

    y_pad = ai_model_forward(x_pad, w_stack, b_stack, tile_m=tile_m)
    y_pad = jax.block_until_ready(y_pad)
    y = y_pad[:batch, :sizes[-1]]               # slice padded lanes/rows back off

    y_ref = reference_forward(x, weights, biases)
    np.testing.assert_allclose(np.asarray(y), np.asarray(y_ref), rtol=1e-5, atol=1e-5)

    # Padded lanes must be exactly zero (checks the zero-pad invariant).
    np.testing.assert_array_equal(np.asarray(y_pad[:, sizes[-1]:]), 0.0)

    print("KERNEL_OK")
</pallas_src>

<mosaic_0001>
module attributes {stable_mosaic.version = 11 : i64} {
  func.func @mlp_kernel(%arg0: i32, %arg1: memref<256x128xf32, #tpu.memory_space<vmem>>, %arg2: memref<9x32x128xf32, #tpu.memory_space<vmem>>, %arg3: memref<9x1x128xf32, #tpu.memory_space<vmem>>, %arg4: memref<256x128xf32, #tpu.memory_space<vmem>>, %arg5: memref<128x128xf32, #tpu.memory_space<vmem>>) attributes {dimension_semantics = [#tpu.dimension_semantics<parallel>], iteration_bounds = array<i64: 2>, scalar_prefetch = 0 : i64, scratch_operands = 1 : i64, tpu.core_type = #tpu.core_type<tc>, window_params = [{transform_indices = @transform_0, window_bounds = array<i64: 256, 128>}, {pipeline_mode = #tpu.pipeline_mode<synchronous>, transform_indices = @transform_1, window_bounds = array<i64: 9, 32, 128>}, {pipeline_mode = #tpu.pipeline_mode<synchronous>, transform_indices = @transform_2, window_bounds = array<i64: 9, 1, 128>}, {transform_indices = @transform_3, window_bounds = array<i64: 256, 128>}]} {
    %cst = arith.constant 0.000000e+00 : f32
    %0 = vector.broadcast %cst : f32 to vector<128x128xf32>
    %c0 = arith.constant 0 : index
    %c0_0 = arith.constant 0 : index
    %1 = vector.load %arg5[%c0, %c0_0] : memref<128x128xf32, #tpu.memory_space<vmem>>, vector<128x128xf32>
    tpu.vector_store %arg5[%c0, %c0_0], %0 {strides = array<i32>} : memref<128x128xf32, #tpu.memory_space<vmem>>, vector<128x128xf32>,
    %c0_1 = arith.constant 0 : index
    %c0_2 = arith.constant 0 : index
    %2 = vector.load %arg1[%c0_1, %c0_2] : memref<256x128xf32, #tpu.memory_space<vmem>>, vector<256x128xf32>
    %c0_3 = arith.constant 0 : index
    %c0_4 = arith.constant 0 : index
    %c0_5 = arith.constant 0 : index
    %3 = vector.load %arg2[%c0_3, %c0_4, %c0_5] : memref<9x32x128xf32, #tpu.memory_space<vmem>>, vector<1x32x128xf32>
    %4 = vector.shape_cast %3 : vector<1x32x128xf32> to vector<32x128xf32>
    %c0_6 = arith.constant 0 : index
    %c0_7 = arith.constant 0 : index
    %5 = vector.load %arg5[%c0_6, %c0_7] : memref<128x128xf32, #tpu.memory_space<vmem>>, vector<32x128xf32>
    tpu.vector_store %arg5[%c0_6, %c0_7], %4 {strides = array<i32>} : memref<128x128xf32, #tpu.memory_space<vmem>>, vector<32x128xf32>,
    %c0_8 = arith.constant 0 : index
    %c0_9 = arith.constant 0 : index
    %6 = vector.load %arg5[%c0_8, %c0_9] : memref<128x128xf32, #tpu.memory_space<vmem>>, vector<128x128xf32>
    %cst_10 = arith.constant dense<0.000000e+00> : vector<256x128xf32>
    %7 = tpu.matmul %2, %6, %cst_10 {dimension_numbers = #tpu.dot_dimension_numbers<[1], [0], [0], [1], [0, 0, 1, 1], [], []>} : vector<256x128xf32>, vector<128x128xf32>, vector<256x128xf32> -> vector<256x128xf32>
    %c0_11 = arith.constant 0 : index
    %c0_12 = arith.constant 0 : index
    %c0_13 = arith.constant 0 : index
    %8 = vector.load %arg3[%c0_11, %c0_12, %c0_13] : memref<9x1x128xf32, #tpu.memory_space<vmem>>, vector<1x1x128xf32>
    %9 = vector.shape_cast %8 : vector<1x1x128xf32> to vector<1x128xf32>
    %10 = vector.broadcast %9 : vector<1x128xf32> to vector<256x128xf32>
    %11 = arith.addf %7, %10 : vector<256x128xf32>
    %cst_14 = arith.constant 0.000000e+00 : f32
    %12 = vector.broadcast %cst_14 : f32 to vector<256x128xf32>
    %13 = arith.maximumf %11, %12 : vector<256x128xf32>
    %c1 = arith.constant 1 : index
    %c0_15 = arith.constant 0 : index
    %c0_16 = arith.constant 0 : index
    %14 = vector.load %arg2[%c1, %c0_15, %c0_16] : memref<9x32x128xf32, #tpu.memory_space<vmem>>, vector<1x32x128xf32>
    %15 = vector.shape_cast %14 : vector<1x32x128xf32> to vector<32x128xf32>
    %c0_17 = arith.constant 0 : index
    %c0_18 = arith.constant 0 : index
    %16 = vector.load %arg5[%c0_17, %c0_18] : memref<128x128xf32, #tpu.memory_space<vmem>>, vector<32x128xf32>
    tpu.vector_store %arg5[%c0_17, %c0_18], %15 {strides = array<i32>} : memref<128x128xf32, #tpu.memory_space<vmem>>, vector<32x128xf32>,
    %c0_19 = arith.constant 0 : index
    %c0_20 = arith.constant 0 : index
    %17 = vector.load %arg5[%c0_19, %c0_20] : memref<128x128xf32, #tpu.memory_space<vmem>>, vector<128x128xf32>
    %cst_21 = arith.constant dense<0.000000e+00> : vector<256x128xf32>
    %18 = tpu.matmul %13, %17, %cst_21 {dimension_numbers = #tpu.dot_dimension_numbers<[1], [0], [0], [1], [0, 0, 1, 1], [], []>} : vector<256x128xf32>, vector<128x128xf32>, vector<256x128xf32> -> vector<256x128xf32>
    %c1_22 = arith.constant 1 : index
    %c0_23 = arith.constant 0 : index
    %c0_24 = arith.constant 0 : index
    %19 = vector.load %arg3[%c1_22, %c0_23, %c0_24] : memref<9x1x128xf32, #tpu.memory_space<vmem>>, vector<1x1x128xf32>
    %20 = vector.shape_cast %19 : vector<1x1x128xf32> to vector<1x128xf32>
    %21 = vector.broadcast %20 : vector<1x128xf32> to vector<256x128xf32>
    %22 = arith.addf %18, %21 : vector<256x128xf32>
    %cst_25 = arith.constant 0.000000e+00 : f32
    %23 = vector.broadcast %cst_25 : f32 to vector<256x128xf32>
    %24 = arith.maximumf %22, %23 : vector<256x128xf32>
    %c2 = arith.constant 2 : index
    %c0_26 = arith.constant 0 : index
    %c0_27 = arith.constant 0 : index
    %25 = vector.load %arg2[%c2, %c0_26, %c0_27] : memref<9x32x128xf32, #tpu.memory_space<vmem>>, vector<1x32x128xf32>
    %26 = vector.shape_cast %25 : vector<1x32x128xf32> to vector<32x128xf32>
    %c0_28 = arith.constant 0 : index
    %c0_29 = arith.constant 0 : index
    %27 = vector.load %arg5[%c0_28, %c0_29] : memref<128x128xf32, #tpu.memory_space<vmem>>, vector<32x128xf32>
    tpu.vector_store %arg5[%c0_28, %c0_29], %26 {strides = array<i32>} : memref<128x128xf32, #tpu.memory_space<vmem>>, vector<32x128xf32>,
    %c0_30 = arith.constant 0 : index
    %c0_31 = arith.constant 0 : index
    %28 = vector.load %arg5[%c0_30, %c0_31] : memref<128x128xf32, #tpu.memory_space<vmem>>, vector<128x128xf32>
    %cst_32 = arith.constant dense<0.000000e+00> : vector<256x128xf32>
    %29 = tpu.matmul %24, %28, %cst_32 {dimension_numbers = #tpu.dot_dimension_numbers<[1], [0], [0], [1], [0, 0, 1, 1], [], []>} : vector<256x128xf32>, vector<128x128xf32>, vector<256x128xf32> -> vector<256x128xf32>
    %c2_33 = arith.constant 2 : index
    %c0_34 = arith.constant 0 : index
    %c0_35 = arith.constant 0 : index
    %30 = vector.load %arg3[%c2_33, %c0_34, %c0_35] : memref<9x1x128xf32, #tpu.memory_space<vmem>>, vector<1x1x128xf32>
    %31 = vector.shape_cast %30 : vector<1x1x128xf32> to vector<1x128xf32>
    %32 = vector.broadcast %31 : vector<1x128xf32> to vector<256x128xf32>
    %33 = arith.addf %29, %32 : vector<256x128xf32>
    %cst_36 = arith.constant 0.000000e+00 : f32
    %34 = vector.broadcast %cst_36 : f32 to vector<256x128xf32>
    %35 = arith.maximumf %33, %34 : vector<256x128xf32>
    %c3 = arith.constant 3 : index
    %c0_37 = arith.constant 0 : index
    %c0_38 = arith.constant 0 : index
    %36 = vector.load %arg2[%c3, %c0_37, %c0_38] : memref<9x32x128xf32, #tpu.memory_space<vmem>>, vector<1x32x128xf32>
    %37 = vector.shape_cast %36 : vector<1x32x128xf32> to vector<32x128xf32>
    %c0_39 = arith.constant 0 : index
    %c0_40 = arith.constant 0 : index
    %38 = vector.load %arg5[%c0_39, %c0_40] : memref<128x128xf32, #tpu.memory_space<vmem>>, vector<32x128xf32>
    tpu.vector_store %arg5[%c0_39, %c0_40], %37 {strides = array<i32>} : memref<128x128xf32, #tpu.memory_space<vmem>>, vector<32x128xf32>,
    %c0_41 = arith.constant 0 : index
    %c0_42 = arith.constant 0 : index
    %39 = vector.load %arg5[%c0_41, %c0_42] : memref<128x128xf32, #tpu.memory_space<vmem>>, vector<128x128xf32>
    %cst_43 = arith.constant dense<0.000000e+00> : vector<256x128xf32>
    %40 = tpu.matmul %35, %39, %cst_43 {dimension_numbers = #tpu.dot_dimension_numbers<[1], [0], [0], [1], [0, 0, 1, 1], [], []>} : vector<256x128xf32>, vector<128x128xf32>, vector<256x128xf32> -> vector<256x128xf32>
    %c3_44 = arith.constant 3 : index
    %c0_45 = arith.constant 0 : index
    %c0_46 = arith.constant 0 : index
    %41 = vector.load %arg3[%c3_44, %c0_45, %c0_46] : memref<9x1x128xf32, #tpu.memory_space<vmem>>, vector<1x1x128xf32>
    %42 = vector.shape_cast %41 : vector<1x1x128xf32> to vector<1x128xf32>
    %43 = vector.broadcast %42 : vector<1x128xf32> to vector<256x128xf32>
    %44 = arith.addf %40, %43 : vector<256x128xf32>
    %cst_47 = arith.constant 0.000000e+00 : f32
    %45 = vector.broadcast %cst_47 : f32 to vector<256x128xf32>
    %46 = arith.maximumf %44, %45 : vector<256x128xf32>
    %c4 = arith.constant 4 : index
    %c0_48 = arith.constant 0 : index
    %c0_49 = arith.constant 0 : index
    %47 = vector.load %arg2[%c4, %c0_48, %c0_49] : memref<9x32x128xf32, #tpu.memory_space<vmem>>, vector<1x32x128xf32>
    %48 = vector.shape_cast %47 : vector<1x32x128xf32> to vector<32x128xf32>
    %c0_50 = arith.constant 0 : index
    %c0_51 = arith.constant 0 : index
    %49 = vector.load %arg5[%c0_50, %c0_51] : memref<128x128xf32, #tpu.memory_space<vmem>>, vector<32x128xf32>
    tpu.vector_store %arg5[%c0_50, %c0_51], %48 {strides = array<i32>} : memref<128x128xf32, #tpu.memory_space<vmem>>, vector<32x128xf32>,
    %c0_52 = arith.constant 0 : index
    %c0_53 = arith.constant 0 : index
    %50 = vector.load %arg5[%c0_52, %c0_53] : memref<128x128xf32, #tpu.memory_space<vmem>>, vector<128x128xf32>
    %cst_54 = arith.constant dense<0.000000e+00> : vector<256x128xf32>
    %51 = tpu.matmul %46, %50, %cst_54 {dimension_numbers = #tpu.dot_dimension_numbers<[1], [0], [0], [1], [0, 0, 1, 1], [], []>} : vector<256x128xf32>, vector<128x128xf32>, vector<256x128xf32> -> vector<256x128xf32>
    %c4_55 = arith.constant 4 : index
    %c0_56 = arith.constant 0 : index
    %c0_57 = arith.constant 0 : index
    %52 = vector.load %arg3[%c4_55, %c0_56, %c0_57] : memref<9x1x128xf32, #tpu.memory_space<vmem>>, vector<1x1x128xf32>
    %53 = vector.shape_cast %52 : vector<1x1x128xf32> to vector<1x128xf32>
    %54 = vector.broadcast %53 : vector<1x128xf32> to vector<256x128xf32>
    %55 = arith.addf %51, %54 : vector<256x128xf32>
    %cst_58 = arith.constant 0.000000e+00 : f32
    %56 = vector.broadcast %cst_58 : f32 to vector<256x128xf32>
    %57 = arith.maximumf %55, %56 : vector<256x128xf32>
    %c5 = arith.constant 5 : index
    %c0_59 = arith.constant 0 : index
    %c0_60 = arith.constant 0 : index
    %58 = vector.load %arg2[%c5, %c0_59, %c0_60] : memref<9x32x128xf32, #tpu.memory_space<vmem>>, vector<1x32x128xf32>
    %59 = vector.shape_cast %58 : vector<1x32x128xf32> to vector<32x128xf32>
    %c0_61 = arith.constant 0 : index
    %c0_62 = arith.constant 0 : index
    %60 = vector.load %arg5[%c0_61, %c0_62] : memref<128x128xf32, #tpu.memory_space<vmem>>, vector<32x128xf32>
    tpu.vector_store %arg5[%c0_61, %c0_62], %59 {strides = array<i32>} : memref<128x128xf32, #tpu.memory_space<vmem>>, vector<32x128xf32>,
    %c0_63 = arith.constant 0 : index
    %c0_64 = arith.constant 0 : index
    %61 = vector.load %arg5[%c0_63, %c0_64] : memref<128x128xf32, #tpu.memory_space<vmem>>, vector<128x128xf32>
    %cst_65 = arith.constant dense<0.000000e+00> : vector<256x128xf32>
    %62 = tpu.matmul %57, %61, %cst_65 {dimension_numbers = #tpu.dot_dimension_numbers<[1], [0], [0], [1], [0, 0, 1, 1], [], []>} : vector<256x128xf32>, vector<128x128xf32>, vector<256x128xf32> -> vector<256x128xf32>
    %c5_66 = arith.constant 5 : index
    %c0_67 = arith.constant 0 : index
    %c0_68 = arith.constant 0 : index
    %63 = vector.load %arg3[%c5_66, %c0_67, %c0_68] : memref<9x1x128xf32, #tpu.memory_space<vmem>>, vector<1x1x128xf32>
    %64 = vector.shape_cast %63 : vector<1x1x128xf32> to vector<1x128xf32>
    %65 = vector.broadcast %64 : vector<1x128xf32> to vector<256x128xf32>
    %66 = arith.addf %62, %65 : vector<256x128xf32>
    %cst_69 = arith.constant 0.000000e+00 : f32
    %67 = vector.broadcast %cst_69 : f32 to vector<256x128xf32>
    %68 = arith.maximumf %66, %67 : vector<256x128xf32>
    %c6 = arith.constant 6 : index
    %c0_70 = arith.constant 0 : index
    %c0_71 = arith.constant 0 : index
    %69 = vector.load %arg2[%c6, %c0_70, %c0_71] : memref<9x32x128xf32, #tpu.memory_space<vmem>>, vector<1x32x128xf32>
    %70 = vector.shape_cast %69 : vector<1x32x128xf32> to vector<32x128xf32>
    %c0_72 = arith.constant 0 : index
    %c0_73 = arith.constant 0 : index
    %71 = vector.load %arg5[%c0_72, %c0_73] : memref<128x128xf32, #tpu.memory_space<vmem>>, vector<32x128xf32>
    tpu.vector_store %arg5[%c0_72, %c0_73], %70 {strides = array<i32>} : memref<128x128xf32, #tpu.memory_space<vmem>>, vector<32x128xf32>,
    %c0_74 = arith.constant 0 : index
    %c0_75 = arith.constant 0 : index
    %72 = vector.load %arg5[%c0_74, %c0_75] : memref<128x128xf32, #tpu.memory_space<vmem>>, vector<128x128xf32>
    %cst_76 = arith.constant dense<0.000000e+00> : vector<256x128xf32>
    %73 = tpu.matmul %68, %72, %cst_76 {dimension_numbers = #tpu.dot_dimension_numbers<[1], [0], [0], [1], [0, 0, 1, 1], [], []>} : vector<256x128xf32>, vector<128x128xf32>, vector<256x128xf32> -> vector<256x128xf32>
    %c6_77 = arith.constant 6 : index
    %c0_78 = arith.constant 0 : index
    %c0_79 = arith.constant 0 : index
    %74 = vector.load %arg3[%c6_77, %c0_78, %c0_79] : memref<9x1x128xf32, #tpu.memory_space<vmem>>, vector<1x1x128xf32>
    %75 = vector.shape_cast %74 : vector<1x1x128xf32> to vector<1x128xf32>
    %76 = vector.broadcast %75 : vector<1x128xf32> to vector<256x128xf32>
    %77 = arith.addf %73, %76 : vector<256x128xf32>
    %cst_80 = arith.constant 0.000000e+00 : f32
    %78 = vector.broadcast %cst_80 : f32 to vector<256x128xf32>
    %79 = arith.maximumf %77, %78 : vector<256x128xf32>
    %c7 = arith.constant 7 : index
    %c0_81 = arith.constant 0 : index
    %c0_82 = arith.constant 0 : index
    %80 = vector.load %arg2[%c7, %c0_81, %c0_82] : memref<9x32x128xf32, #tpu.memory_space<vmem>>, vector<1x32x128xf32>
    %81 = vector.shape_cast %80 : vector<1x32x128xf32> to vector<32x128xf32>
    %c0_83 = arith.constant 0 : index
    %c0_84 = arith.constant 0 : index
    %82 = vector.load %arg5[%c0_83, %c0_84] : memref<128x128xf32, #tpu.memory_space<vmem>>, vector<32x128xf32>
    tpu.vector_store %arg5[%c0_83, %c0_84], %81 {strides = array<i32>} : memref<128x128xf32, #tpu.memory_space<vmem>>, vector<32x128xf32>,
    %c0_85 = arith.constant 0 : index
    %c0_86 = arith.constant 0 : index
    %83 = vector.load %arg5[%c0_85, %c0_86] : memref<128x128xf32, #tpu.memory_space<vmem>>, vector<128x128xf32>
    %cst_87 = arith.constant dense<0.000000e+00> : vector<256x128xf32>
    %84 = tpu.matmul %79, %83, %cst_87 {dimension_numbers = #tpu.dot_dimension_numbers<[1], [0], [0], [1], [0, 0, 1, 1], [], []>} : vector<256x128xf32>, vector<128x128xf32>, vector<256x128xf32> -> vector<256x128xf32>
    %c7_88 = arith.constant 7 : index
    %c0_89 = arith.constant 0 : index
    %c0_90 = arith.constant 0 : index
    %85 = vector.load %arg3[%c7_88, %c0_89, %c0_90] : memref<9x1x128xf32, #tpu.memory_space<vmem>>, vector<1x1x128xf32>
    %86 = vector.shape_cast %85 : vector<1x1x128xf32> to vector<1x128xf32>
    %87 = vector.broadcast %86 : vector<1x128xf32> to vector<256x128xf32>
    %88 = arith.addf %84, %87 : vector<256x128xf32>
    %cst_91 = arith.constant 0.000000e+00 : f32
    %89 = vector.broadcast %cst_91 : f32 to vector<256x128xf32>
    %90 = arith.maximumf %88, %89 : vector<256x128xf32>
    %c8 = arith.constant 8 : index
    %c0_92 = arith.constant 0 : index
    %c0_93 = arith.constant 0 : index
    %91 = vector.load %arg2[%c8, %c0_92, %c0_93] : memref<9x32x128xf32, #tpu.memory_space<vmem>>, vector<1x32x128xf32>
    %92 = vector.shape_cast %91 : vector<1x32x128xf32> to vector<32x128xf32>
    %c0_94 = arith.constant 0 : index
    %c0_95 = arith.constant 0 : index
    %93 = vector.load %arg5[%c0_94, %c0_95] : memref<128x128xf32, #tpu.memory_space<vmem>>, vector<32x128xf32>
    tpu.vector_store %arg5[%c0_94, %c0_95], %92 {strides = array<i32>} : memref<128x128xf32, #tpu.memory_space<vmem>>, vector<32x128xf32>,
    %c0_96 = arith.constant 0 : index
    %c0_97 = arith.constant 0 : index
    %94 = vector.load %arg5[%c0_96, %c0_97] : memref<128x128xf32, #tpu.memory_space<vmem>>, vector<128x128xf32>
    %cst_98 = arith.constant dense<0.000000e+00> : vector<256x128xf32>
    %95 = tpu.matmul %90, %94, %cst_98 {dimension_numbers = #tpu.dot_dimension_numbers<[1], [0], [0], [1], [0, 0, 1, 1], [], []>} : vector<256x128xf32>, vector<128x128xf32>, vector<256x128xf32> -> vector<256x128xf32>
    %c8_99 = arith.constant 8 : index
    %c0_100 = arith.constant 0 : index
    %c0_101 = arith.constant 0 : index
    %96 = vector.load %arg3[%c8_99, %c0_100, %c0_101] : memref<9x1x128xf32, #tpu.memory_space<vmem>>, vector<1x1x128xf32>
    %97 = vector.shape_cast %96 : vector<1x1x128xf32> to vector<1x128xf32>
    %98 = vector.broadcast %97 : vector<1x128xf32> to vector<256x128xf32>
    %99 = arith.addf %95, %98 : vector<256x128xf32>
    %c0_102 = arith.constant 0 : index
    %c0_103 = arith.constant 0 : index
    %100 = vector.load %arg4[%c0_102, %c0_103] : memref<256x128xf32, #tpu.memory_space<vmem>>, vector<256x128xf32>
    tpu.vector_store %arg4[%c0_102, %c0_103], %99 {strides = array<i32>} : memref<256x128xf32, #tpu.memory_space<vmem>>, vector<256x128xf32>,
    return
  }
  func.func @transform_0(%arg0: i32) -> (i32, i32) {
    %c0_i32 = arith.constant 0 : i32
    %c0_i32_0 = arith.constant 0 : i32
    return %arg0, %c0_i32 : i32, i32
  }
  func.func @transform_1(%arg0: i32) -> (i32, i32, i32) {
    %c0_i32 = arith.constant 0 : i32
    %c0_i32_0 = arith.constant 0 : i32
    %c0_i32_1 = arith.constant 0 : i32
    %c0_i32_2 = arith.constant 0 : i32
    return %c0_i32, %c0_i32_0, %c0_i32_1 : i32, i32, i32
  }
  func.func @transform_2(%arg0: i32) -> (i32, i32, i32) {
    %c0_i32 = arith.constant 0 : i32
    %c0_i32_0 = arith.constant 0 : i32
    %c0_i32_1 = arith.constant 0 : i32
    %c0_i32_2 = arith.constant 0 : i32
    return %c0_i32, %c0_i32_0, %c0_i32_1 : i32, i32, i32
  }
  func.func @transform_3(%arg0: i32) -> (i32, i32) {
    %c0_i32 = arith.constant 0 : i32
    %c0_i32_0 = arith.constant 0 : i32
    return %arg0, %c0_i32 : i32, i32
  }
}

</mosaic_0001>

<llo_original>
// kernel: tpu_custom_call.1
$region0: #{tpu_custom_call.1}
  #allocation0 [shape = 'u32[]', space=smem, size = 0x4, offset = 0x4, fixed_abs, tag = 'smem constant byte address 0x4 - core index']
  #allocation1 [shape = 'u32[144,128]{1,0:T(1,128)}', space=vmem, size = 0x12000, scoped, tag = 'internal scratch']
  #allocation2 [shape = 'f32[128,128]{1,0:T(8,128)}', space=vmem, size = 0x10000, scoped, tag = 'scratch operand']
  %s0 = inlined_call_operand.hbm [shape: f32[512,128], index: 0, kind: input, shape index: {}]
  %s1 = inlined_call_operand.hbm [shape: f32[9,32,128], index: 1, kind: input, shape index: {}]
  %s2 = inlined_call_operand.hbm [shape: f32[9,1,128], index: 2, kind: input, shape index: {}]
  %s3 = inlined_call_operand.hbm [shape: f32[512,128], index: 3, kind: output, shape index: {}]
  %s4 = sld [smem:[#allocation0]]
  $region57: #{tpu_custom_call.1} parent=0
    _
  %s6 = ssub.s32 1, %s4
  %s7 = scalar_select 0, %s6, %s4
  $region1: #{tpu_custom_call.1} parent=0
    #allocation3 [shape = 'u8[262144]{0}', space=vmem, size = 0x40000, scoped, tag = 'input window, operand 0']
    #allocation4 [shape = 's32[2]{0}', space=sflag, size = 0x8, scoped, tag = 'scoped memory for tpu_custom_call.1']
    #allocation5 [shape = 's32[2]{0}', space=sflag, size = 0x8, scoped, tag = 'scoped memory for tpu_custom_call.1']
    #allocation6 [shape = 'u8[147456]{0}', space=vmem, size = 0x24000, scoped, tag = 'input window, operand 1, single buffered']
    #allocation7 [shape = 's32[1]{0}', space=sflag, size = 0x4, scoped, tag = 'scoped memory for tpu_custom_call.1']
    #allocation8 [shape = 'u8[4608]{0}', space=vmem, size = 0x1400, scoped, tag = 'input window, operand 2, single buffered']
    #allocation9 [shape = 'u8[262144]{0}', space=vmem, size = 0x40000, scoped, tag = 'output window, operand 0']
    %8 = vsyncpa [#allocation4], 0
    %s9 = scalar_lea.sflag [#allocation4], 1
    %10 = vsyncpa %s9, 0
    %11 = vsyncpa [#allocation7], 0
    %12 = vsyncpa [#allocation5], 0
    %s13 = scalar_lea.sflag [#allocation5], 1
    %14 = vsyncpa %s13, 0
    loop: start=0, step=1, limit=4
    $region2: #{tpu_custom_call.1} parent=1 // loop_pre_header
      _
    $region3: #{tpu_custom_call.1} parent=1 // loop_header
      %s16 = sphi 0, %s20
      %p17 = scmp.ge.s32.totalorder %s16, 4
      %s26 = sphi 0, %s28
      %s29 = sphi 0, %s26
      %s30 = sphi 0, %s29
      %s46 = sphi 0, %s30
      %s50 = sphi 0, %s50
      %s52 = sphi 0, %s50
      %s53 = sphi 0, %s52
      %s67 = sphi 0, %s53
      %s71 = sphi 0, %s71
      %s73 = sphi 0, %s71
      %s74 = sphi 0, %s73
      %s88 = sphi 0, %s74
      %s94 = sphi 0, %s96
      %s97 = sphi 0, %s94
      %s98 = sphi 0, %s97
      %s114 = sphi 0, %s98
    $region4: #{tpu_custom_call.1} parent=1 // loop_header_branch
      %19 = sbr.rel (%p17) target = $region8
    $region5: #{tpu_custom_call.1} parent=1 // loop_body
      %s21 = ssub.s32 %s16, 1
      %s22 = ssub.s32 %s16, 2
      %s23 = sadd.s32 %s16, 1
      %s24 = ssub.s32 %s16, %s23
      %p25 = scmp.eq.s32.totalorder %s24, 0
      %s27 = sadd.s32 %s26, 1
      %s28 = scalar_select %p25, %s26, %s27
      %p31 = pneg %p25
      %p32 = scmp.eq.s32.totalorder %s16, 1
      %p33 = por %p31, %p32
      %p34 = scmp.ne.s32.totalorder %s26, %s29
      %p35 = scmp.eq.s32.totalorder %s16, 0
      %p36 = por %p34, %p35
      %p37 = scmp.ne.s32.totalorder %s26, %s29
      %p38 = scmp.eq.s32.totalorder %s21, 1
      %p39 = por %p37, %p38
      %p40 = scmp.ne.s32.totalorder %s29, %s30
      %p41 = scmp.eq.s32.totalorder %s21, 0
      %p42 = por %p40, %p41
      %p43 = scmp.ne.s32.totalorder %s29, %s30
      %p44 = scmp.eq.s32.totalorder %s22, 1
      %p45 = por %p43, %p44
      %p47 = scmp.ne.s32.totalorder %s30, %s46
      %p48 = scmp.eq.s32.totalorder %s22, 0
      %p49 = por %p47, %p48
      %s51 = sadd.s32 %s50, 1
      %p54 = scmp.eq.s32.totalorder %s16, 1
      %p55 = scmp.ne.s32.totalorder %s50, %s52
      %p56 = scmp.eq.s32.totalorder %s16, 0
      %p57 = por %p55, %p56
      %p58 = scmp.ne.s32.totalorder %s50, %s52
      %p59 = scmp.eq.s32.totalorder %s21, 1
      %p60 = por %p58, %p59
      %p61 = scmp.ne.s32.totalorder %s52, %s53
      %p62 = scmp.eq.s32.totalorder %s21, 0
      %p63 = por %p61, %p62
      %p64 = scmp.ne.s32.totalorder %s52, %s53
      %p65 = scmp.eq.s32.totalorder %s22, 1
      %p66 = por %p64, %p65
      %p68 = scmp.ne.s32.totalorder %s53, %s67
      %p69 = scmp.eq.s32.totalorder %s22, 0
      %p70 = por %p68, %p69
      %s72 = sadd.s32 %s71, 1
      %p75 = scmp.eq.s32.totalorder %s16, 1
      %p76 = scmp.ne.s32.totalorder %s71, %s73
      %p77 = scmp.eq.s32.totalorder %s16, 0
      %p78 = por %p76, %p77
      %p79 = scmp.ne.s32.totalorder %s71, %s73
      %p80 = scmp.eq.s32.totalorder %s21, 1
      %p81 = por %p79, %p80
      %p82 = scmp.ne.s32.totalorder %s73, %s74
      %p83 = scmp.eq.s32.totalorder %s21, 0
      %p84 = por %p82, %p83
      %p85 = scmp.ne.s32.totalorder %s73, %s74
      %p86 = scmp.eq.s32.totalorder %s22, 1
      %p87 = por %p85, %p86
      %p89 = scmp.ne.s32.totalorder %s74, %s88
      %p90 = scmp.eq.s32.totalorder %s22, 0
      %p91 = por %p89, %p90
      %s92 = ssub.s32 %s16, %s23
      %p93 = scmp.eq.s32.totalorder %s92, 0
      %s95 = sadd.s32 %s94, 1
      %s96 = scalar_select %p93, %s94, %s95
      %p99 = pneg %p93
      %p100 = scmp.eq.s32.totalorder %s16, 1
      %p101 = por %p99, %p100
      %p102 = scmp.ne.s32.totalorder %s94, %s97
      %p103 = scmp.eq.s32.totalorder %s16, 0
      %p104 = por %p102, %p103
      %p105 = scmp.ne.s32.totalorder %s94, %s97
      %p106 = scmp.eq.s32.totalorder %s21, 1
      %p107 = por %p105, %p106
      %p108 = scmp.ne.s32.totalorder %s97, %s98
      %p109 = scmp.eq.s32.totalorder %s21, 0
      %p110 = por %p108, %p109
      %p111 = scmp.ne.s32.totalorder %s97, %s98
      %p112 = scmp.eq.s32.totalorder %s22, 1
      %p113 = por %p111, %p112
      %p115 = scmp.ne.s32.totalorder %s98, %s114
      %p116 = scmp.eq.s32.totalorder %s22, 0
      %p117 = por %p115, %p116
      %p118 = scmp.le.s32.totalorder 1, %s16
      %p119 = scmp.lt.s32.totalorder %s16, 3
      %p120 = pnand %p118, %p119
      %p121 = pneg %p120
      // Predicated region
      $region9: #{tpu_custom_call.1} parent=5 // pred_check
        _
      $region10: #{tpu_custom_call.1} parent=5 // pred_check_branch
        %123 = sbr.rel (%p120) target = $region12
      $region11: #{tpu_custom_call.1} parent=5 // pred_region
        %s124 = ssub.s32 %s16, 1
        // Predicated region
        $region13: #{tpu_custom_call.1} parent=11 // pred_check
          %p125 = pneg %p63
        $region14: #{tpu_custom_call.1} parent=11 // pred_check_branch
          %127 = sbr.rel (%p125) target = $region16
        $region15: #{tpu_custom_call.1} parent=11 // pred_region
          %s129 = ssub.s32 4608, 4608
          %130 = vsyncadd [#allocation7], %s129
          %s131 = sshll.u32 [#allocation6], 4
          %s132 = int_to_ptr.vmem [resolvable:$true] %s131
          %137 = dma.hbm_to_vmem [thread:$0]  %s1, 4608, %s132, [#allocation7], 128, 128, 8
        $region16: #{tpu_custom_call.1} parent=11 // pred_fallthru
          _
        // Predicated region
        $region17: #{tpu_custom_call.1} parent=11 // pred_check
          %p138 = pneg %p84
        $region18: #{tpu_custom_call.1} parent=11 // pred_check_branch
          %140 = sbr.rel (%p138) target = $region20
        $region19: #{tpu_custom_call.1} parent=11 // pred_region
          %s142 = ssub.s32 144, 144
          %143 = vsyncadd [#allocation7], %s142
          %s144 = sshll.u32 [#allocation8], 4
          %s145 = int_to_ptr.vmem [resolvable:$true] %s144
          %150 = dma.hbm_to_vmem [thread:$0]  %s2, 144, %s145, [#allocation7], 16, 16, 1
        $region20: #{tpu_custom_call.1} parent=11 // pred_fallthru
          _
      $region12: #{tpu_custom_call.1} parent=5 // pred_fallthru
        _
      %p151 = scmp.lt.s32.totalorder %s16, 2
      // Predicated region
      $region21: #{tpu_custom_call.1} parent=5 // pred_check
        %p152 = pneg %p151
      $region22: #{tpu_custom_call.1} parent=5 // pred_check_branch
        %154 = sbr.rel (%p152) target = $region24
      $region23: #{tpu_custom_call.1} parent=5 // pred_region
        // Predicated region
        $region25: #{tpu_custom_call.1} parent=23 // pred_check
          %p155 = pneg %p36
        $region26: #{tpu_custom_call.1} parent=23 // pred_check_branch
          %157 = sbr.rel (%p155) target = $region28
        $region27: #{tpu_custom_call.1} parent=23 // pred_region
          %s158 = sand.u32 %s26, 1
          %s159 = scalar_lea.sflag [#allocation4], %s158
          %s160 = sand.u32 %s26, 1
          %s161 = smul.addr %s160, 256
          %s162 = scalar_lea.vmem [#allocation3], %s161
          %s163 = smul.u32 32, %s16
          %s165 = ssub.s32 4096, 4096
          %166 = vsyncadd %s159, %s165
          %s167 = smul.addr %s163, 128
          %s168 = scalar_lea.hbm %s0, %s167
          %s169 = sshll.u32 %s162, 4
          %s170 = int_to_ptr.vmem [resolvable:$true] %s169
          %175 = dma.hbm_to_vmem [thread:$0]  %s168, 4096, %s170, %s159, 128, 128, 8
        $region28: #{tpu_custom_call.1} parent=23 // pred_fallthru
          _
      $region24: #{tpu_custom_call.1} parent=5 // pred_fallthru
        _
      %p176 = scmp.le.s32.totalorder 1, %s16
      %p177 = scmp.lt.s32.totalorder %s16, 3
      %p178 = pnand %p176, %p177
      %p179 = pneg %p178
      // Predicated region
      $region29: #{tpu_custom_call.1} parent=5 // pred_check
        _
      $region30: #{tpu_custom_call.1} parent=5 // pred_check_branch
        %181 = sbr.rel (%p178) target = $region32
      $region31: #{tpu_custom_call.1} parent=5 // pred_region
        %s182 = ssub.s32 %s16, 1
        %s183 = sand.u32 %s29, 1
        %s184 = scalar_lea.sflag [#allocation4], %s183
        %s185 = sand.u32 %s29, 1
        %s186 = smul.addr %s185, 256
        %s187 = scalar_lea.vmem [#allocation3], %s186
        // Predicated region
        $region33: #{tpu_custom_call.1} parent=31 // pred_check
          %p188 = pneg %p42
        $region34: #{tpu_custom_call.1} parent=31 // pred_check_branch
          %190 = sbr.rel (%p188) target = $region36
        $region35: #{tpu_custom_call.1} parent=31 // pred_region
          %191 = dma.done %s184, 4096
        $region36: #{tpu_custom_call.1} parent=31 // pred_fallthru
          _
        // Predicated region
        $region37: #{tpu_custom_call.1} parent=31 // pred_check
          %p192 = pneg %p63
        $region38: #{tpu_custom_call.1} parent=31 // pred_check_branch
          %194 = sbr.rel (%p192) target = $region40
        $region39: #{tpu_custom_call.1} parent=31 // pred_region
          %195 = dma.done [#allocation7], 4608
        $region40: #{tpu_custom_call.1} parent=31 // pred_fallthru
          _
        // Predicated region
        $region41: #{tpu_custom_call.1} parent=31 // pred_check
          %p196 = pneg %p84
        $region42: #{tpu_custom_call.1} parent=31 // pred_check_branch
          %198 = sbr.rel (%p196) target = $region44
        $region43: #{tpu_custom_call.1} parent=31 // pred_region
          %199 = dma.done [#allocation7], 144
        $region44: #{tpu_custom_call.1} parent=31 // pred_fallthru
          _
        %s200 = sand.u32 %s29, 1
        %s201 = scalar_lea.sflag [#allocation4], %s200
        %s202 = sand.u32 %s29, 1
        %s203 = smul.addr %s202, 256
        %s204 = scalar_lea.vmem [#allocation3], %s203
        %p205 = pneg %p42
        %p206 = pneg %p39
        %p207 = pneg %p63
        %p208 = pneg %p60
        %p209 = pneg %p84
        %p210 = pneg %p81
        %p211 = pneg %p110
        %p212 = pneg %p107
        %s213 = sand.u32 %s97, 1
        %s214 = scalar_lea.sflag [#allocation5], %s213
        %s215 = sand.u32 %s97, 1
        %s216 = smul.addr %s215, 256
        %s217 = scalar_lea.vmem [#allocation9], %s216
        %s218 = smul.u32 32, %s21
        %s219 = smul.u32 32, %s21
        %220 = vst [vmem:[#allocation2] sm:$0xff] 0.0
        %221 = vst [vmem:[#allocation2 + $0x8] sm:$0xff] 0.0
        %222 = vst [vmem:[#allocation2 + $0x10] sm:$0xff] 0.0
        %223 = vst [vmem:[#allocation2 + $0x18] sm:$0xff] 0.0
        %224 = vst [vmem:[#allocation2 + $0x20] sm:$0xff] 0.0
        %225 = vst [vmem:[#allocation2 + $0x28] sm:$0xff] 0.0
        %226 = vst [vmem:[#allocation2 + $0x30] sm:$0xff] 0.0
        %227 = vst [vmem:[#allocation2 + $0x38] sm:$0xff] 0.0
        %228 = vst [vmem:[#allocation2 + $0x40] sm:$0xff] 0.0
        %229 = vst [vmem:[#allocation2 + $0x48] sm:$0xff] 0.0
        %230 = vst [vmem:[#allocation2 + $0x50] sm:$0xff] 0.0
        %231 = vst [vmem:[#allocation2 + $0x58] sm:$0xff] 0.0
        %232 = vst [vmem:[#allocation2 + $0x60] sm:$0xff] 0.0
        %233 = vst [vmem:[#allocation2 + $0x68] sm:$0xff] 0.0
        %234 = vst [vmem:[#allocation2 + $0x70] sm:$0xff] 0.0
        %235 = vst [vmem:[#allocation2 + $0x78] sm:$0xff] 0.0
        %v236 = vld [vmem:[%s187] sm:$0xff]
        %v237 = vld [vmem:[%s187 + $0x8] sm:$0xff]
        %v238 = vld [vmem:[%s187 + $0x10] sm:$0xff]
        %v239 = vld [vmem:[%s187 + $0x18] sm:$0xff]
        %v240 = vld [vmem:[%s187 + $0x20] sm:$0xff]
        %v241 = vld [vmem:[%s187 + $0x28] sm:$0xff]
        %v242 = vld [vmem:[%s187 + $0x30] sm:$0xff]
        %v243 = vld [vmem:[%s187 + $0x38] sm:$0xff]
        %v244 = vld [vmem:[%s187 + $0x40] sm:$0xff]
        %v245 = vld [vmem:[%s187 + $0x48] sm:$0xff]
        %v246 = vld [vmem:[%s187 + $0x50] sm:$0xff]
        %v247 = vld [vmem:[%s187 + $0x58] sm:$0xff]
        %v248 = vld [vmem:[%s187 + $0x60] sm:$0xff]
        %v249 = vld [vmem:[%s187 + $0x68] sm:$0xff]
        %v250 = vld [vmem:[%s187 + $0x70] sm:$0xff]
        %v251 = vld [vmem:[%s187 + $0x78] sm:$0xff]
        %v252 = vld [vmem:[%s187 + $0x80] sm:$0xff]
        %v253 = vld [vmem:[%s187 + $0x88] sm:$0xff]
        %v254 = vld [vmem:[%s187 + $0x90] sm:$0xff]
        %v255 = vld [vmem:[%s187 + $0x98] sm:$0xff]
        %v256 = vld [vmem:[%s187 + $0xa0] sm:$0xff]
        %v257 = vld [vmem:[%s187 + $0xa8] sm:$0xff]
        %v258 = vld [vmem:[%s187 + $0xb0] sm:$0xff]
        %v259 = vld [vmem:[%s187 + $0xb8] sm:$0xff]
        %v260 = vld [vmem:[%s187 + $0xc0] sm:$0xff]
        %v261 = vld [vmem:[%s187 + $0xc8] sm:$0xff]
        %v262 = vld [vmem:[%s187 + $0xd0] sm:$0xff]
        %v263 = vld [vmem:[%s187 + $0xd8] sm:$0xff]
        %v264 = vld [vmem:[%s187 + $0xe0] sm:$0xff]
        %v265 = vld [vmem:[%s187 + $0xe8] sm:$0xff]
        %v266 = vld [vmem:[%s187 + $0xf0] sm:$0xff]
        %v267 = vld [vmem:[%s187 + $0xf8] sm:$0xff]
        %v268 = vld [vmem:[#allocation6] sm:$0xff]
        %v269 = vld [vmem:[#allocation6 + $0x8] sm:$0xff]
        %v270 = vld [vmem:[#allocation6 + $0x10] sm:$0xff]
        %v271 = vld [vmem:[#allocation6 + $0x18] sm:$0xff]
        %272 = vst [vmem:[#allocation2] sm:$0xff] %v268
        %273 = vst [vmem:[#allocation2 + $0x8] sm:$0xff] %v269
        %274 = vst [vmem:[#allocation2 + $0x10] sm:$0xff] %v270
        %275 = vst [vmem:[#allocation2 + $0x18] sm:$0xff] %v271
        %v276 = vld [vmem:[#allocation2] sm:$0xff]
        %v277 = vld [vmem:[#allocation2 + $0x8] sm:$0xff]
        %v278 = vld [vmem:[#allocation2 + $0x10] sm:$0xff]
        %v279 = vld [vmem:[#allocation2 + $0x18] sm:$0xff]
        %v280 = vld [vmem:[#allocation2 + $0x20] sm:$0xff]
        %v281 = vld [vmem:[#allocation2 + $0x28] sm:$0xff]
        %v282 = vld [vmem:[#allocation2 + $0x30] sm:$0xff]
        %v283 = vld [vmem:[#allocation2 + $0x38] sm:$0xff]
        %v284 = vld [vmem:[#allocation2 + $0x40] sm:$0xff]
        %v285 = vld [vmem:[#allocation2 + $0x48] sm:$0xff]
        %v286 = vld [vmem:[#allocation2 + $0x50] sm:$0xff]
        %v287 = vld [vmem:[#allocation2 + $0x58] sm:$0xff]
        %v288 = vld [vmem:[#allocation2 + $0x60] sm:$0xff]
        %v289 = vld [vmem:[#allocation2 + $0x68] sm:$0xff]
        %v290 = vld [vmem:[#allocation2 + $0x70] sm:$0xff]
        %v291 = vld [vmem:[#allocation2 + $0x78] sm:$0xff]
        %v292 = vld [vmem:[#allocation8] sm:$0x1]
        %v294 = vlaneseq
        %v295 = vshrl.u32 %v294, 7
        %v296 = vsub.s32 0, %v295
        %v297 = vrot.slane %v292, %v296
        %299 = vmatprep.subr.mxu0 0.0
        %300 = vmatpush1.msra.mxu0 %v276
        %301 = vmatprep.subr.mxu0 0.0
        %302 = vmatpush1.msra.mxu0 %v277
        %303 = vmatprep.subr.mxu0 0.0
        %304 = vmatpush1.msra.mxu0 %v278
        %305 = vmatprep.subr.mxu0 0.0
        %306 = vmatpush1.msra.mxu0 %v279
        %307 = vmatprep.subr.mxu0 0.0
        %308 = vmatpush1.msra.mxu0 %v280
        %309 = vmatprep.subr.mxu0 0.0
        %310 = vmatpush1.msra.mxu0 %v281
        %311 = vmatprep.subr.mxu0 0.0
        %312 = vmatpush1.msra.mxu0 %v282
        %313 = vmatprep.subr.mxu0 0.0
        %314 = vmatpush1.msra.mxu0 %v283
        %315 = vmatprep.subr.mxu0 0.0
        %316 = vmatpush1.msra.mxu0 %v284
        %317 = vmatprep.subr.mxu0 0.0
        %318 = vmatpush1.msra.mxu0 %v285
        %319 = vmatprep.subr.mxu0 0.0
        %320 = vmatpush1.msra.mxu0 %v286
        %321 = vmatprep.subr.mxu0 0.0
        %322 = vmatpush1.msra.mxu0 %v287
        %323 = vmatprep.subr.mxu0 0.0
        %324 = vmatpush1.msra.mxu0 %v288
        %325 = vmatprep.subr.mxu0 0.0
        %326 = vmatpush1.msra.mxu0 %v289
        %327 = vmatprep.subr.mxu0 0.0
        %328 = vmatpush1.msra.mxu0 %v290
        %329 = vmatprep.subr.mxu0 0.0
        %330 = vmatpush1.msra.mxu0 %v291
        %331 = vmatprep.subr.mxu0 0.0
        %332 = vmatpush1.msra.mxu0 0.0
        %333 = vmatprep.subr.mxu0 0.0
        %334 = vmatpush1.msra.mxu0 0.0
        %335 = vmatprep.subr.mxu0 0.0
        %336 = vmatpush1.msra.mxu0 0.0
        %337 = vmatprep.subr.mxu0 0.0
        %338 = vmatpush1.msra.mxu0 0.0
        %339 = vmatprep.subr.mxu0 0.0
        %340 = vmatpush1.msra.mxu0 0.0
        %341 = vmatprep.subr.mxu0 0.0
        %342 = vmatpush1.msra.mxu0 0.0
        %343 = vmatprep.subr.mxu0 0.0
        %344 = vmatpush1.msra.mxu0 0.0
        %345 = vmatprep.subr.mxu0 0.0
        %346 = vmatpush1.msra.mxu0 0.0
        %347 = vmatprep.subr.mxu0 0.0
        %348 = vmatpush1.msra.mxu0 0.0
        %349 = vmatprep.subr.mxu0 0.0
        %350 = vmatpush1.msra.mxu0 0.0
        %351 = vmatprep.subr.mxu0 0.0
        %352 = vmatpush1.msra.mxu0 0.0
        %353 = vmatprep.subr.mxu0 0.0
        %354 = vmatpush1.msra.mxu0 0.0
        %355 = vmatprep.subr.mxu0 0.0
        %356 = vmatpush1.msra.mxu0 0.0
        %357 = vmatprep.subr.mxu0 0.0
        %358 = vmatpush1.msra.mxu0 0.0
        %359 = vmatprep.subr.mxu0 0.0
        %360 = vmatpush1.msra.mxu0 0.0
        %361 = vmatprep.subr.mxu0 0.0
        %362 = vmatpush1.msra.mxu0 0.0
        %363 = vmatprep.mubr.f32.mxu0 0.0
        %364 = vmatmul.mubr.f32.gmra.mrb[0].mxu0 %v236
        %v365 = vpop.f32.mrb[0].mxu0
        %v366 = vadd.f32 %v297, %v365
        %v367 = vpop.f32.mrb[0].mxu0
        %368 = vmatprep.mubr.f32.mxu0 0.0
        %369 = vmatmul.mubr.f32.gmra.mrb[0].mxu0 %v237
        %v370 = vpop.f32.mrb[0].mxu0
        %v371 = vadd.f32 %v297, %v370
        %v372 = vpop.f32.mrb[0].mxu0
        %373 = vmatprep.mubr.f32.mxu0 0.0
        %374 = vmatmul.mubr.f32.gmra.mrb[0].mxu0 %v238
        %v375 = vpop.f32.mrb[0].mxu0
        %v376 = vadd.f32 %v297, %v375
        %v377 = vpop.f32.mrb[0].mxu0
        %378 = vmatprep.mubr.f32.mxu0 0.0
        %379 = vmatmul.mubr.f32.gmra.mrb[0].mxu0 %v239
        %v380 = vpop.f32.mrb[0].mxu0
        %v381 = vadd.f32 %v297, %v380
        %v382 = vpop.f32.mrb[0].mxu0
        %383 = vmatprep.mubr.f32.mxu0 0.0
        %384 = vmatmul.mubr.f32.gmra.mrb[0].mxu0 %v240
        %v385 = vpop.f32.mrb[0].mxu0
        %v386 = vadd.f32 %v297, %v385
        %v387 = vpop.f32.mrb[0].mxu0
        %388 = vmatprep.mubr.f32.mxu0 0.0
        %389 = vmatmul.mubr.f32.gmra.mrb[0].mxu0 %v241
        %v390 = vpop.f32.mrb[0].mxu0
        %v391 = vadd.f32 %v297, %v390
        %v392 = vpop.f32.mrb[0].mxu0
        %393 = vmatprep.mubr.f32.mxu0 0.0
        %394 = vmatmul.mubr.f32.gmra.mrb[0].mxu0 %v242
        %v395 = vpop.f32.mrb[0].mxu0
        %v396 = vadd.f32 %v297, %v395
        %v397 = vpop.f32.mrb[0].mxu0
        %398 = vmatprep.mubr.f32.mxu0 0.0
        %399 = vmatmul.mubr.f32.gmra.mrb[0].mxu0 %v243
        %v400 = vpop.f32.mrb[0].mxu0
        %v401 = vadd.f32 %v297, %v400
        %v402 = vpop.f32.mrb[0].mxu0
        %403 = vmatprep.mubr.f32.mxu0 0.0
        %404 = vmatmul.mubr.f32.gmra.mrb[0].mxu0 %v244
        %v405 = vpop.f32.mrb[0].mxu0
        %v406 = vadd.f32 %v297, %v405
        %v407 = vpop.f32.mrb[0].mxu0
        %408 = vmatprep.mubr.f32.mxu0 0.0
        %409 = vmatmul.mubr.f32.gmra.mrb[0].mxu0 %v245
        %v410 = vpop.f32.mrb[0].mxu0
        %v411 = vadd.f32 %v297, %v410
        %v412 = vpop.f32.mrb[0].mxu0
        %413 = vmatprep.mubr.f32.mxu0 0.0
        %414 = vmatmul.mubr.f32.gmra.mrb[0].mxu0 %v246
        %v415 = vpop.f32.mrb[0].mxu0
        %v416 = vadd.f32 %v297, %v415
        %v417 = vpop.f32.mrb[0].mxu0
        %418 = vmatprep.mubr.f32.mxu0 0.0
        %419 = vmatmul.mubr.f32.gmra.mrb[0].mxu0 %v247
        %v420 = vpop.f32.mrb[0].mxu0
        %v421 = vadd.f32 %v297, %v420
        %v422 = vpop.f32.mrb[0].mxu0
        %423 = vmatprep.mubr.f32.mxu0 0.0
        %424 = vmatmul.mubr.f32.gmra.mrb[0].mxu0 %v248
        %v425 = vpop.f32.mrb[0].mxu0
        %v426 = vadd.f32 %v297, %v425
        %v427 = vpop.f32.mrb[0].mxu0
        %428 = vmatprep.mubr.f32.mxu0 0.0
        %429 = vmatmul.mubr.f32.gmra.mrb[0].mxu0 %v249
        %v430 = vpop.f32.mrb[0].mxu0
        %v431 = vadd.f32 %v297, %v430
        %v432 = vpop.f32.mrb[0].mxu0
        %433 = vmatprep.mubr.f32.mxu0 0.0
        %434 = vmatmul.mubr.f32.gmra.mrb[0].mxu0 %v250
        %v435 = vpop.f32.mrb[0].mxu0
        %v436 = vadd.f32 %v297, %v435
        %v437 = vpop.f32.mrb[0].mxu0
        %438 = vmatprep.mubr.f32.mxu0 0.0
        %439 = vmatmul.mubr.f32.gmra.mrb[0].mxu0 %v251
        %v440 = vpop.f32.mrb[0].mxu0
        %v441 = vadd.f32 %v297, %v440
        %v442 = vpop.f32.mrb[0].mxu0
        %443 = vmatprep.mubr.f32.mxu0 0.0
        %444 = vmatmul.mubr.f32.gmra.mrb[0].mxu0 %v252
        %v445 = vpop.f32.mrb[0].mxu0
        %v446 = vadd.f32 %v297, %v445
        %v447 = vpop.f32.mrb[0].mxu0
        %448 = vmatprep.mubr.f32.mxu0 0.0
        %449 = vmatmul.mubr.f32.gmra.mrb[0].mxu0 %v253
        %v450 = vpop.f32.mrb[0].mxu0
        %v451 = vadd.f32 %v297, %v450
        %v452 = vpop.f32.mrb[0].mxu0
        %453 = vmatprep.mubr.f32.mxu0 0.0
        %454 = vmatmul.mubr.f32.gmra.mrb[0].mxu0 %v254
        %v455 = vpop.f32.mrb[0].mxu0
        %v456 = vadd.f32 %v297, %v455
        %v457 = vpop.f32.mrb[0].mxu0
        %458 = vmatprep.mubr.f32.mxu0 0.0
        %459 = vmatmul.mubr.f32.gmra.mrb[0].mxu0 %v255
        %v460 = vpop.f32.mrb[0].mxu0
        %v461 = vadd.f32 %v297, %v460
        %v462 = vpop.f32.mrb[0].mxu0
        %463 = vmatprep.mubr.f32.mxu0 0.0
        %464 = vmatmul.mubr.f32.gmra.mrb[0].mxu0 %v256
        %v465 = vpop.f32.mrb[0].mxu0
        %v466 = vadd.f32 %v297, %v465
        %v467 = vpop.f32.mrb[0].mxu0
        %468 = vmatprep.mubr.f32.mxu0 0.0
        %469 = vmatmul.mubr.f32.gmra.mrb[0].mxu0 %v257
        %v470 = vpop.f32.mrb[0].mxu0
        %v471 = vadd.f32 %v297, %v470
        %v472 = vpop.f32.mrb[0].mxu0
        %473 = vmatprep.mubr.f32.mxu0 0.0
        %474 = vmatmul.mubr.f32.gmra.mrb[0].mxu0 %v258
        %v475 = vpop.f32.mrb[0].mxu0
        %v476 = vadd.f32 %v297, %v475
        %v477 = vpop.f32.mrb[0].mxu0
        %478 = vmatprep.mubr.f32.mxu0 0.0
        %479 = vmatmul.mubr.f32.gmra.mrb[0].mxu0 %v259
        %v480 = vpop.f32.mrb[0].mxu0
        %v481 = vadd.f32 %v297, %v480
        %v482 = vpop.f32.mrb[0].mxu0
        %483 = vmatprep.mubr.f32.mxu0 0.0
        %484 = vmatmul.mubr.f32.gmra.mrb[0].mxu0 %v260
        %v485 = vpop.f32.mrb[0].mxu0
        %v486 = vadd.f32 %v297, %v485
        %v487 = vpop.f32.mrb[0].mxu0
        %488 = vmatprep.mubr.f32.mxu0 0.0
        %489 = vmatmul.mubr.f32.gmra.mrb[0].mxu0 %v261
        %v490 = vpop.f32.mrb[0].mxu0
        %v491 = vadd.f32 %v297, %v490
        %v492 = vpop.f32.mrb[0].mxu0
        %493 = vmatprep.mubr.f32.mxu0 0.0
        %494 = vmatmul.mubr.f32.gmra.mrb[0].mxu0 %v262
        %v495 = vpop.f32.mrb[0].mxu0
        %v496 = vadd.f32 %v297, %v495
        %v497 = vpop.f32.mrb[0].mxu0
        %498 = vmatprep.mubr.f32.mxu0 0.0
        %499 = vmatmul.mubr.f32.gmra.mrb[0].mxu0 %v263
        %v500 = vpop.f32.mrb[0].mxu0
        %v501 = vadd.f32 %v297, %v500
        %v502 = vpop.f32.mrb[0].mxu0
        %503 = vmatprep.mubr.f32.mxu0 0.0
        %504 = vmatmul.mubr.f32.gmra.mrb[0].mxu0 %v264
        %v505 = vpop.f32.mrb[0].mxu0
        %v506 = vadd.f32 %v297, %v505
        %v507 = vpop.f32.mrb[0].mxu0
        %508 = vmatprep.mubr.f32.mxu0 0.0
        %509 = vmatmul.mubr.f32.gmra.mrb[0].mxu0 %v265
        %v510 = vpop.f32.mrb[0].mxu0
        %v511 = vadd.f32 %v297, %v510
        %v512 = vpop.f32.mrb[0].mxu0
        %513 = vmatprep.mubr.f32.mxu0 0.0
        %514 = vmatmul.mubr.f32.gmra.mrb[0].mxu0 %v266
        %v515 = vpop.f32.mrb[0].mxu0
        %v516 = vadd.f32 %v297, %v515
        %v517 = vpop.f32.mrb[0].mxu0
        %518 = vmatprep.mubr.f32.mxu0 0.0
        %519 = vmatmul.mubr.f32.gmra.mrb[0].mxu0 %v267
        %v520 = vpop.f32.mrb[0].mxu0
        %v521 = vadd.f32 %v297, %v520
        %v522 = vpop.f32.mrb[0].mxu0
        %523 = vdwg.mxu0
        %v524 = vmax.f32 %v366, 0.0
        %v525 = vmax.f32 %v371, 0.0
        %v526 = vmax.f32 %v376, 0.0
        %v527 = vmax.f32 %v381, 0.0
        %v528 = vmax.f32 %v386, 0.0
        %v529 = vmax.f32 %v391, 0.0
        %v530 = vmax.f32 %v396, 0.0
        %v531 = vmax.f32 %v401, 0.0
        %v532 = vmax.f32 %v406, 0.0
        %v533 = vmax.f32 %v411, 0.0
        %v534 = vmax.f32 %v416, 0.0
        %v535 = vmax.f32 %v421, 0.0
        %v536 = vmax.f32 %v426, 0.0
        %v537 = vmax.f32 %v431, 0.0
        %v538 = vmax.f32 %v436, 0.0
        %v539 = vmax.f32 %v441, 0.0
        %v540 = vmax.f32 %v446, 0.0
        %v541 = vmax.f32 %v451, 0.0
        %v542 = vmax.f32 %v456, 0.0
        %v543 = vmax.f32 %v461, 0.0
        %v544 = vmax.f32 %v466, 0.0
        %v545 = vmax.f32 %v471, 0.0
        %v546 = vmax.f32 %v476, 0.0
        %v547 = vmax.f32 %v481, 0.0
        %v548 = vmax.f32 %v486, 0.0
        %v549 = vmax.f32 %v491, 0.0
        %v550 = vmax.f32 %v496, 0.0
        %v551 = vmax.f32 %v501, 0.0
        %v552 = vmax.f32 %v506, 0.0
        %v553 = vmax.f32 %v511, 0.0
        %v554 = vmax.f32 %v516, 0.0
        %v555 = vmax.f32 %v521, 0.0
        %s556 = scalar_lea.vmem [#allocation6], 32
        %v557 = vld [vmem:[%s556] sm:$0xff]
        %v558 = vld [vmem:[%s556 + $0x8] sm:$0xff]
        %v559 = vld [vmem:[%s556 + $0x10] sm:$0xff]
        %v560 = vld [vmem:[%s556 + $0x18] sm:$0xff]
        %561 = vst [vmem:[#allocation2] sm:$0xff] %v557
        %562 = vst [vmem:[#allocation2 + $0x8] sm:$0xff] %v558
        %563 = vst [vmem:[#allocation2 + $0x10] sm:$0xff] %v559
        %564 = vst [vmem:[#allocation2 + $0x18] sm:$0xff] %v560
        %v565 = vld [vmem:[#allocation2] sm:$0xff]
        %v566 = vld [vmem:[#allocation2 + $0x8] sm:$0xff]
        %v567 = vld [vmem:[#allocation2 + $0x10] sm:$0xff]
        %v568 = vld [vmem:[#allocation2 + $0x18] sm:$0xff]
        %v569 = vld [vmem:[#allocation2 + $0x20] sm:$0xff]
        %v570 = vld [vmem:[#allocation2 + $0x28] sm:$0xff]
        %v571 = vld [vmem:[#allocation2 + $0x30] sm:$0xff]
        %v572 = vld [vmem:[#allocation2 + $0x38] sm:$0xff]
        %v573 = vld [vmem:[#allocation2 + $0x40] sm:$0xff]
        %v574 = vld [vmem:[#allocation2 + $0x48] sm:$0xff]
        %v575 = vld [vmem:[#allocation2 + $0x50] sm:$0xff]
        %v576 = vld [vmem:[#allocation2 + $0x58] sm:$0xff]
        %v577 = vld [vmem:[#allocation2 + $0x60] sm:$0xff]
        %v578 = vld [vmem:[#allocation2 + $0x68] sm:$0xff]
        %v579 = vld [vmem:[#allocation2 + $0x70] sm:$0xff]
        %v580 = vld [vmem:[#allocation2 + $0x78] sm:$0xff]
        %s581 = scalar_lea.vmem [#allocation8], 1
        %v582 = vld [vmem:[%s581] sm:$0x1]
        %v584 = vlaneseq
        %v585 = vshrl.u32 %v584, 7
        %v586 = vsub.s32 0, %v585
        %v587 = vrot.slane %v582, %v586
        %589 = vmatprep.subr.mxu0 0.0
        %590 = vmatpush1.msra.mxu0 %v565
        %591 = vmatprep.subr.mxu0 0.0
        %592 = vmatpush1.msra.mxu0 %v566
        %593 = vmatprep.subr.mxu0 0.0
        %594 = vmatpush1.msra.mxu0 %v567
        %595 = vmatprep.subr.mxu0 0.0
        %596 = vmatpush1.msra.mxu0 %v568
        %597 = vmatprep.subr.mxu0 0.0
        %598 = vmatpush1.msra.mxu0 %v569
        %599 = vmatprep.subr.mxu0 0.0
        %600 = vmatpush1.msra.mxu0 %v570
        %601 = vmatprep.subr.mxu0 0.0
        %602 = vmatpush1.msra.mxu0 %v571
        %603 = vmatprep.subr.mxu0 0.0
        %604 = vmatpush1.msra.mxu0 %v572
        %605 = vmatprep.subr.mxu0 0.0
        %606 = vmatpush1.msra.mxu0 %v573
        %607 = vmatprep.subr.mxu0 0.0
        %608 = vmatpush1.msra.mxu0 %v574
        %609 = vmatprep.subr.mxu0 0.0
        %610 = vmatpush1.msra.mxu0 %v575
        %611 = vmatprep.subr.mxu0 0.0
        %612 = vmatpush1.msra.mxu0 %v576
        %613 = vmatprep.subr.mxu0 0.0
        %614 = vmatpush1.msra.mxu0 %v577
        %615 = vmatprep.subr.mxu0 0.0
        %616 = vmatpush1.msra.mxu0 %v578
        %617 = vmatprep.subr.mxu0 0.0
        %618 = vmatpush1.msra.mxu0 %v579
        %619 = vmatprep.subr.mxu0 0.0
        %620 = vmatpush1.msra.mxu0 %v580
        %621 = vmatprep.subr.mxu0 0.0
        %622 = vmatpush1.msra.mxu0 0.0
        %623 = vmatprep.subr.mxu0 0.0
        %624 = vmatpush1.msra.mxu0 0.0
        %625 = vmatprep.subr.mxu0 0.0
        %626 = vmatpush1.msra.mxu0 0.0
        %627 = vmatprep.subr.mxu0 0.0
        %628 = vmatpush1.msra.mxu0 0.0
        %629 = vmatprep.subr.mxu0 0.0
        %630 = vmatpush1.msra.mxu0 0.0
        %631 = vmatprep.subr.mxu0 0.0
        %632 = vmatpush1.msra.mxu0 0.0
        %633 = vmatprep.subr.mxu0 0.0
        %634 = vmatpush1.msra.mxu0 0.0
        %635 = vmatprep.subr.mxu0 0.0
        %636 = vmatpush1.msra.mxu0 0.0
        %637 = vmatprep.subr.mxu0 0.0
        %638 = vmatpush1.msra.mxu0 0.0
        %639 = vmatprep.subr.mxu0 0.0
        %640 = vmatpush1.msra.mxu0 0.0
        %641 = vmatprep.subr.mxu0 0.0
        %642 = vmatpush1.msra.mxu0 0.0
        %643 = vmatprep.subr.mxu0 0.0
        %644 = vmatpush1.msra.mxu0 0.0
        %645 = vmatprep.subr.mxu0 0.0
        %646 = vmatpush1.msra.mxu0 0.0
        %647 = vmatprep.subr.mxu0 0.0
        %648 = vmatpush1.msra.mxu0 0.0
        %649 = vmatprep.subr.mxu0 0.0
        %650 = vmatpush1.msra.mxu0 0.0
        %651 = vmatprep.subr.mxu0 0.0
        %652 = vmatpush1.msra.mxu0 0.0
        %653 = vmatprep.mubr.f32.mxu0 0.0
        %654 = vmatmul.mubr.f32.gmra.mrb[0].mxu0 %v524
        %v655 = vpop.f32.mrb[0].mxu0
        %v656 = vadd.f32 %v587, %v655
        %v657 = vpop.f32.mrb[0].mxu0
        %658 = vmatprep.mubr.f32.mxu0 0.0
        %659 = vmatmul.mubr.f32.gmra.mrb[0].mxu0 %v525
        %v660 = vpop.f32.mrb[0].mxu0
        %v661 = vadd.f32 %v587, %v660
        %v662 = vpop.f32.mrb[0].mxu0
        %663 = vmatprep.mubr.f32.mxu0 0.0
        %664 = vmatmul.mubr.f32.gmra.mrb[0].mxu0 %v526
        %v665 = vpop.f32.mrb[0].mxu0
        %v666 = vadd.f32 %v587, %v665
        %v667 = vpop.f32.mrb[0].mxu0
        %668 = vmatprep.mubr.f32.mxu0 0.0
        %669 = vmatmul.mubr.f32.gmra.mrb[0].mxu0 %v527
        %v670 = vpop.f32.mrb[0].mxu0
        %v671 = vadd.f32 %v587, %v670
        %v672 = vpop.f32.mrb[0].mxu0
        %673 = vmatprep.mubr.f32.mxu0 0.0
        %674 = vmatmul.mubr.f32.gmra.mrb[0].mxu0 %v528
        %v675 = vpop.f32.mrb[0].mxu0
        %v676 = vadd.f32 %v587, %v675
        %v677 = vpop.f32.mrb[0].mxu0
        %678 = vmatprep.mubr.f32.mxu0 0.0
        %679 = vmatmul.mubr.f32.gmra.mrb[0].mxu0 %v529
        %v680 = vpop.f32.mrb[0].mxu0
        %v681 = vadd.f32 %v587, %v680
        %v682 = vpop.f32.mrb[0].mxu0
        %683 = vmatprep.mubr.f32.mxu0 0.0
        %684 = vmatmul.mubr.f32.gmra.mrb[0].mxu0 %v530
        %v685 = vpop.f32.mrb[0].mxu0
        %v686 = vadd.f32 %v587, %v685
        %v687 = vpop.f32.mrb[0].mxu0
        %688 = vmatprep.mubr.f32.mxu0 0.0
        %689 = vmatmul.mubr.f32.gmra.mrb[0].mxu0 %v531
        %v690 = vpop.f32.mrb[0].mxu0
        %v691 = vadd.f32 %v587, %v690
        %v692 = vpop.f32.mrb[0].mxu0
        %693 = vmatprep.mubr.f32.mxu0 0.0
        %694 = vmatmul.mubr.f32.gmra.mrb[0].mxu0 %v532
        %v695 = vpop.f32.mrb[0].mxu0
        %v696 = vadd.f32 %v587, %v695
        %v697 = vpop.f32.mrb[0].mxu0
        %698 = vmatprep.mubr.f32.mxu0 0.0
        %699 = vmatmul.mubr.f32.gmra.mrb[0].mxu0 %v533
        %v700 = vpop.f32.mrb[0].mxu0
        %v701 = vadd.f32 %v587, %v700
        %v702 = vpop.f32.mrb[0].mxu0
        %703 = vmatprep.mubr.f32.mxu0 0.0
        %704 = vmatmul.mubr.f32.gmra.mrb[0].mxu0 %v534
        %v705 = vpop.f32.mrb[0].mxu0
        %v706 = vadd.f32 %v587, %v705
        %v707 = vpop.f32.mrb[0].mxu0
        %708 = vmatprep.mubr.f32.mxu0 0.0
        %709 = vmatmul.mubr.f32.gmra.mrb[0].mxu0 %v535
        %v710 = vpop.f32.mrb[0].mxu0
        %v711 = vadd.f32 %v587, %v710
        %v712 = vpop.f32.mrb[0].mxu0
        %713 = vmatprep.mubr.f32.mxu0 0.0
        %714 = vmatmul.mubr.f32.gmra.mrb[0].mxu0 %v536
        %v715 = vpop.f32.mrb[0].mxu0
        %v716 = vadd.f32 %v587, %v715
        %v717 = vpop.f32.mrb[0].mxu0
        %718 = vmatprep.mubr.f32.mxu0 0.0
        %719 = vmatmul.mubr.f32.gmra.mrb[0].mxu0 %v537
        %v720 = vpop.f32.mrb[0].mxu0
        %v721 = vadd.f32 %v587, %v720
        %v722 = vpop.f32.mrb[0].mxu0
        %723 = vmatprep.mubr.f32.mxu0 0.0
        %724 = vmatmul.mubr.f32.gmra.mrb[0].mxu0 %v538
        %v725 = vpop.f32.mrb[0].mxu0
        %v726 = vadd.f32 %v587, %v725
        %v727 = vpop.f32.mrb[0].mxu0
        %728 = vmatprep.mubr.f32.mxu0 0.0
        %729 = vmatmul.mubr.f32.gmra.mrb[0].mxu0 %v539
        %v730 = vpop.f32.mrb[0].mxu0
        %v731 = vadd.f32 %v587, %v730
        %v732 = vpop.f32.mrb[0].mxu0
        %733 = vmatprep.mubr.f32.mxu0 0.0
        %734 = vmatmul.mubr.f32.gmra.mrb[0].mxu0 %v540
        %v735 = vpop.f32.mrb[0].mxu0
        %v736 = vadd.f32 %v587, %v735
        %v737 = vpop.f32.mrb[0].mxu0
        %738 = vmatprep.mubr.f32.mxu0 0.0
        %739 = vmatmul.mubr.f32.gmra.mrb[0].mxu0 %v541
        %v740 = vpop.f32.mrb[0].mxu0
        %v741 = vadd.f32 %v587, %v740
        %v742 = vpop.f32.mrb[0].mxu0
        %743 = vmatprep.mubr.f32.mxu0 0.0
        %744 = vmatmul.mubr.f32.gmra.mrb[0].mxu0 %v542
        %v745 = vpop.f32.mrb[0].mxu0
        %v746 = vadd.f32 %v587, %v745
        %v747 = vpop.f32.mrb[0].mxu0
        %748 = vmatprep.mubr.f32.mxu0 0.0
        %749 = vmatmul.mubr.f32.gmra.mrb[0].mxu0 %v543
        %v750 = vpop.f32.mrb[0].mxu0
        %v751 = vadd.f32 %v587, %v750
        %v752 = vpop.f32.mrb[0].mxu0
        %753 = vmatprep.mubr.f32.mxu0 0.0
        %754 = vmatmul.mubr.f32.gmra.mrb[0].mxu0 %v544
        %v755 = vpop.f32.mrb[0].mxu0
        %v756 = vadd.f32 %v587, %v755
        %v757 = vpop.f32.mrb[0].mxu0
        %758 = vmatprep.mubr.f32.mxu0 0.0
        %759 = vmatmul.mubr.f32.gmra.mrb[0].mxu0 %v545
        %v760 = vpop.f32.mrb[0].mxu0
        %v761 = vadd.f32 %v587, %v760
        %v762 = vpop.f32.mrb[0].mxu0
        %763 = vmatprep.mubr.f32.mxu0 0.0
        %764 = vmatmul.mubr.f32.gmra.mrb[0].mxu0 %v546
        %v765 = vpop.f32.mrb[0].mxu0
        %v766 = vadd.f32 %v587, %v765
        %v767 = vpop.f32.mrb[0].mxu0
        %768 = vmatprep.mubr.f32.mxu0 0.0
        %769 = vmatmul.mubr.f32.gmra.mrb[0].mxu0 %v547
        %v770 = vpop.f32.mrb[0].mxu0
        %v771 = vadd.f32 %v587, %v770
        %v772 = vpop.f32.mrb[0].mxu0
        %773 = vmatprep.mubr.f32.mxu0 0.0
        %774 = vmatmul.mubr.f32.gmra.mrb[0].mxu0 %v548
        %v775 = vpop.f32.mrb[0].mxu0
        %v776 = vadd.f32 %v587, %v775
        %v777 = vpop.f32.mrb[0].mxu0
        %778 = vmatprep.mubr.f32.mxu0 0.0
        %779 = vmatmul.mubr.f32.gmra.mrb[0].mxu0 %v549
        %v780 = vpop.f32.mrb[0].mxu0
        %v781 = vadd.f32 %v587, %v780
        %v782 = vpop.f32.mrb[0].mxu0
        %783 = vmatprep.mubr.f32.mxu0 0.0
        %784 = vmatmul.mubr.f32.gmra.mrb[0].mxu0 %v550
        %v785 = vpop.f32.mrb[0].mxu0
        %v786 = vadd.f32 %v587, %v785
        %v787 = vpop.f32.mrb[0].mxu0
        %788 = vmatprep.mubr.f32.mxu0 0.0
        %789 = vmatmul.mubr.f32.gmra.mrb[0].mxu0 %v551
        %v790 = vpop.f32.mrb[0].mxu0
        %v791 = vadd.f32 %v587, %v790
        %v792 = vpop.f32.mrb[0].mxu0
        %793 = vmatprep.mubr.f32.mxu0 0.0
        %794 = vmatmul.mubr.f32.gmra.mrb[0].mxu0 %v552
        %v795 = vpop.f32.mrb[0].mxu0
        %v796 = vadd.f32 %v587, %v795
        %v797 = vpop.f32.mrb[0].mxu0
        %798 = vmatprep.mubr.f32.mxu0 0.0
        %799 = vmatmul.mubr.f32.gmra.mrb[0].mxu0 %v553
        %v800 = vpop.f32.mrb[0].mxu0
        %v801 = vadd.f32 %v587, %v800
        %v802 = vpop.f32.mrb[0].mxu0
        %803 = vmatprep.mubr.f32.mxu0 0.0
        %804 = vmatmul.mubr.f32.gmra.mrb[0].mxu0 %v554
        %v805 = vpop.f32.mrb[0].mxu0
        %v806 = vadd.f32 %v587, %v805
        %v807 = vpop.f32.mrb[0].mxu0
        %808 = vmatprep.mubr.f32.mxu0 0.0
        %809 = vmatmul.mubr.f32.gmra.mrb[0].mxu0 %v555
        %v810 = vpop.f32.mrb[0].mxu0
        %v811 = vadd.f32 %v587, %v810
        %v812 = vpop.f32.mrb[0].mxu0
        %813 = vdwg.mxu0
        %v814 = vmax.f32 %v656, 0.0
        %v815 = vmax.f32 %v661, 0.0
        %v816 = vmax.f32 %v666, 0.0
        %v817 = vmax.f32 %v671, 0.0
        %v818 = vmax.f32 %v676, 0.0
        %v819 = vmax.f32 %v681, 0.0
        %v820 = vmax.f32 %v686, 0.0
        %v821 = vmax.f32 %v691, 0.0
        %v822 = vmax.f32 %v696, 0.0
        %v823 = vmax.f32 %v701, 0.0
        %v824 = vmax.f32 %v706, 0.0
        %v825 = vmax.f32 %v711, 0.0
        %v826 = vmax.f32 %v716, 0.0
        %v827 = vmax.f32 %v721, 0.0
        %v828 = vmax.f32 %v726, 0.0
        %v829 = vmax.f32 %v731, 0.0
        %v830 = vmax.f32 %v736, 0.0
        %v831 = vmax.f32 %v741, 0.0
        %v832 = vmax.f32 %v746, 0.0
        %v833 = vmax.f32 %v751, 0.0
        %v834 = vmax.f32 %v756, 0.0
        %v835 = vmax.f32 %v761, 0.0
        %v836 = vmax.f32 %v766, 0.0
        %v837 = vmax.f32 %v771, 0.0
        %v838 = vmax.f32 %v776, 0.0
        %v839 = vmax.f32 %v781, 0.0
        %v840 = vmax.f32 %v786, 0.0
        %v841 = vmax.f32 %v791, 0.0
        %v842 = vmax.f32 %v796, 0.0
        %v843 = vmax.f32 %v801, 0.0
        %v844 = vmax.f32 %v806, 0.0
        %v845 = vmax.f32 %v811, 0.0
        %s846 = scalar_lea.vmem [#allocation6], 64
        %v847 = vld [vmem:[%s846] sm:$0xff]
        %v848 = vld [vmem:[%s846 + $0x8] sm:$0xff]
        %v849 = vld [vmem:[%s846 + $0x10] sm:$0xff]
        %v850 = vld [vmem:[%s846 + $0x18] sm:$0xff]
        %851 = vst [vmem:[#allocation2] sm:$0xff] %v847
        %852 = vst [vmem:[#allocation2 + $0x8] sm:$0xff] %v848
        %853 = vst [vmem:[#allocation2 + $0x10] sm:$0xff] %v849
        %854 = vst [vmem:[#allocation2 + $0x18] sm:$0xff] %v850
        %v855 = vld [vmem:[#allocation2] sm:$0xff]
        %v856 = vld [vmem:[#allocation2 + $0x8] sm:$0xff]
        %v857 = vld [vmem:[#allocation2 + $0x10] sm:$0xff]
        %v858 = vld [vmem:[#allocation2 + $0x18] sm:$0xff]
        %v859 = vld [vmem:[#allocation2 + $0x20] sm:$0xff]
        %v860 = vld [vmem:[#allocation2 + $0x28] sm:$0xff]
        %v861 = vld [vmem:[#allocation2 + $0x30] sm:$0xff]
        %v862 = vld [vmem:[#allocation2 + $0x38] sm:$0xff]
        %v863 = vld [vmem:[#allocation2 + $0x40] sm:$0xff]
        %v864 = vld [vmem:[#allocation2 + $0x48] sm:$0xff]
        %v865 = vld [vmem:[#allocation2 + $0x50] sm:$0xff]
        %v866 = vld [vmem:[#allocation2 + $0x58] sm:$0xff]
        %v867 = vld [vmem:[#allocation2 + $0x60] sm:$0xff]
        %v868 = vld [vmem:[#allocation2 + $0x68] sm:$0xff]
        %v869 = vld [vmem:[#allocation2 + $0x70] sm:$0xff]
        %v870 = vld [vmem:[#allocation2 + $0x78] sm:$0xff]
        %s871 = scalar_lea.vmem [#allocation8], 2
        %v872 = vld [vmem:[%s871] sm:$0x1]
        %v874 = vlaneseq
        %v875 = vshrl.u32 %v874, 7
        %v876 = vsub.s32 0, %v875
        %v877 = vrot.slane %v872, %v876
        %879 = vmatprep.subr.mxu0 0.0
        %880 = vmatpush1.msra.mxu0 %v855
        %881 = vmatprep.subr.mxu0 0.0
        %882 = vmatpush1.msra.mxu0 %v856
        %883 = vmatprep.subr.mxu0 0.0
        %884 = vmatpush1.msra.mxu0 %v857
        %885 = vmatprep.subr.mxu0 0.0
        %886 = vmatpush1.msra.mxu0 %v858
        %887 = vmatprep.subr.mxu0 0.0
        %888 = vmatpush1.msra.mxu0 %v859
        %889 = vmatprep.subr.mxu0 0.0
        %890 = vmatpush1.msra.mxu0 %v860
        %891 = vmatprep.subr.mxu0 0.0
        %892 = vmatpush1.msra.mxu0 %v861
        %893 = vmatprep.subr.mxu0 0.0
        %894 = vmatpush1.msra.mxu0 %v862
        %895 = vmatprep.subr.mxu0 0.0
        %896 = vmatpush1.msra.mxu0 %v863
        %897 = vmatprep.subr.mxu0 0.0
        %898 = vmatpush1.msra.mxu0 %v864
        %899 = vmatprep.subr.mxu0 0.0
        %900 = vmatpush1.msra.mxu0 %v865
        %901 = vmatprep.subr.mxu0 0.0
        %902 = vmatpush1.msra.mxu0 %v866
        %903 = vmatprep.subr.mxu0 0.0
        %904 = vmatpush1.msra.mxu0 %v867
        %905 = vmatprep.subr.mxu0 0.0
        %906 = vmatpush1.msra.mxu0 %v868
        %907 = vmatprep.subr.mxu0 0.0
        %908 = vmatpush1.msra.mxu0 %v869
        %909 = vmatprep.subr.mxu0 0.0
        %910 = vmatpush1.msra.mxu0 %v870
        %911 = vmatprep.subr.mxu0 0.0
        %912 = vmatpush1.msra.mxu0 0.0
        %913 = vmatprep.subr.mxu0 0.0
        %914 = vmatpush1.msra.mxu0 0.0
        %915 = vmatprep.subr.mxu0 0.0
        %916 = vmatpush1.msra.mxu0 0.0
        %917 = vmatprep.subr.mxu0 0.0
        %918 = vmatpush1.msra.mxu0 0.0
        %919 = vmatprep.subr.mxu0 0.0
        %920 = vmatpush1.msra.mxu0 0.0
        %921 = vmatprep.subr.mxu0 0.0
        %922 = vmatpush1.msra.mxu0 0.0
        %923 = vmatprep.subr.mxu0 0.0
        %924 = vmatpush1.msra.mxu0 0.0
        %925 = vmatprep.subr.mxu0 0.0
        %926 = vmatpush1.msra.mxu0 0.0
        %927 = vmatprep.subr.mxu0 0.0
        %928 = vmatpush1.msra.mxu0 0.0
        %929 = vmatprep.subr.mxu0 0.0
        %930 = vmatpush1.msra.mxu0 0.0
        %931 = vmatprep.subr.mxu0 0.0
        %932 = vmatpush1.msra.mxu0 0.0
        %933 = vmatprep.subr.mxu0 0.0
        %934 = vmatpush1.msra.mxu0 0.0
        %935 = vmatprep.subr.mxu0 0.0
        %936 = vmatpush1.msra.mxu0 0.0
        %937 = vmatprep.subr.mxu0 0.0
        %938 = vmatpush1.msra.mxu0 0.0
        %939 = vmatprep.subr.mxu0 0.0
        %940 = vmatpush1.msra.mxu0 0.0
        %941 = vmatprep.subr.mxu0 0.0
        %942 = vmatpush1.msra.mxu0 0.0
        %943 = vmatprep.mubr.f32.mxu0 0.0
        %944 = vmatmul.mubr.f32.gmra.mrb[0].mxu0 %v814
        %v945 = vpop.f32.mrb[0].mxu0
        %v946 = vadd.f32 %v877, %v945
        %v947 = vpop.f32.mrb[0].mxu0
        %948 = vmatprep.mubr.f32.mxu0 0.0
        %949 = vmatmul.mubr.f32.gmra.mrb[0].mxu0 %v815
        %v950 = vpop.f32.mrb[0].mxu0
        %v951 = vadd.f32 %v877, %v950
        %v952 = vpop.f32.mrb[0].mxu0
        %953 = vmatprep.mubr.f32.mxu0 0.0
        %954 = vmatmul.mubr.f32.gmra.mrb[0].mxu0 %v816
        %v955 = vpop.f32.mrb[0].mxu0
        %v956 = vadd.f32 %v877, %v955
        %v957 = vpop.f32.mrb[0].mxu0
        %958 = vmatprep.mubr.f32.mxu0 0.0
        %959 = vmatmul.mubr.f32.gmra.mrb[0].mxu0 %v817
        %v960 = vpop.f32.mrb[0].mxu0
        %v961 = vadd.f32 %v877, %v960
        %v962 = vpop.f32.mrb[0].mxu0
        %963 = vmatprep.mubr.f32.mxu0 0.0
        %964 = vmatmul.mubr.f32.gmra.mrb[0].mxu0 %v818
        %v965 = vpop.f32.mrb[0].mxu0
        %v966 = vadd.f32 %v877, %v965
        %v967 = vpop.f32.mrb[0].mxu0
        %968 = vmatprep.mubr.f32.mxu0 0.0
        %969 = vmatmul.mubr.f32.gmra.mrb[0].mxu0 %v819
        %v970 = vpop.f32.mrb[0].mxu0
        %v971 = vadd.f32 %v877, %v970
        %v972 = vpop.f32.mrb[0].mxu0
        %973 = vmatprep.mubr.f32.mxu0 0.0
        %974 = vmatmul.mubr.f32.gmra.mrb[0].mxu0 %v820
        %v975 = vpop.f32.mrb[0].mxu0
        %v976 = vadd.f32 %v877, %v975
        %v977 = vpop.f32.mrb[0].mxu0
        %978 = vmatprep.mubr.f32.mxu0 0.0
        %979 = vmatmul.mubr.f32.gmra.mrb[0].mxu0 %v821
        %v980 = vpop.f32.mrb[0].mxu0
        %v981 = vadd.f32 %v877, %v980
        %v982 = vpop.f32.mrb[0].mxu0
        %983 = vmatprep.mubr.f32.mxu0 0.0
        %984 = vmatmul.mubr.f32.gmra.mrb[0].mxu0 %v822
        %v985 = vpop.f32.mrb[0].mxu0
        %v986 = vadd.f32 %v877, %v985
        %v987 = vpop.f32.mrb[0].mxu0
        %988 = vmatprep.mubr.f32.mxu0 0.0
        %989 = vmatmul.mubr.f32.gmra.mrb[0].mxu0 %v823
        %v990 = vpop.f32.mrb[0].mxu0
        %v991 = vadd.f32 %v877, %v990
        %v992 = vpop.f32.mrb[0].mxu0
        %993 = vmatprep.mubr.f32.mxu0 0.0
        %994 = vmatmul.mubr.f32.gmra.mrb[0].mxu0 %v824
        %v995 = vpop.f32.mrb[0].mxu0
        %v996 = vadd.f32 %v877, %v995
        %v997 = vpop.f32.mrb[0].mxu0
        %998 = vmatprep.mubr.f32.mxu0 0.0
        %999 = vmatmul.mubr.f32.gmra.mrb[0].mxu0 %v825
        %v1000 = vpop.f32.mrb[0].mxu0
        %v1001 = vadd.f32 %v877, %v1000
        %v1002 = vpop.f32.mrb[0].mxu0
        %1003 = vmatprep.mubr.f32.mxu0 0.0
        %1004 = vmatmul.mubr.f32.gmra.mrb[0].mxu0 %v826
        %v1005 = vpop.f32.mrb[0].mxu0
        %v1006 = vadd.f32 %v877, %v1005
        %v1007 = vpop.f32.mrb[0].mxu0
        %1008 = vmatprep.mubr.f32.mxu0 0.0
        %1009 = vmatmul.mubr.f32.gmra.mrb[0].mxu0 %v827
        %v1010 = vpop.f32.mrb[0].mxu0
        %v1011 = vadd.f32 %v877, %v1010
        %v1012 = vpop.f32.mrb[0].mxu0
        %1013 = vmatprep.mubr.f32.mxu0 0.0
        %1014 = vmatmul.mubr.f32.gmra.mrb[0].mxu0 %v828
        %v1015 = vpop.f32.mrb[0].mxu0
        %v1016 = vadd.f32 %v877, %v1015
        %v1017 = vpop.f32.mrb[0].mxu0
        %1018 = vmatprep.mubr.f32.mxu0 0.0
        %1019 = vmatmul.mubr.f32.gmra.mrb[0].mxu0 %v829
        %v1020 = vpop.f32.mrb[0].mxu0
        %v1021 = vadd.f32 %v877, %v1020
        %v1022 = vpop.f32.mrb[0].mxu0
        %1023 = vmatprep.mubr.f32.mxu0 0.0
        %1024 = vmatmul.mubr.f32.gmra.mrb[0].mxu0 %v830
        %v1025 = vpop.f32.mrb[0].mxu0
        %v1026 = vadd.f32 %v877, %v1025
        %v1027 = vpop.f32.mrb[0].mxu0
        %1028 = vmatprep.mubr.f32.mxu0 0.0
        %1029 = vmatmul.mubr.f32.gmra.mrb[0].mxu0 %v831
        %v1030 = vpop.f32.mrb[0].mxu0
        %v1031 = vadd.f32 %v877, %v1030
        %v1032 = vpop.f32.mrb[0].mxu0
        %1033 = vmatprep.mubr.f32.mxu0 0.0
        %1034 = vmatmul.mubr.f32.gmra.mrb[0].mxu0 %v832
        %v1035 = vpop.f32.mrb[0].mxu0
        %v1036 = vadd.f32 %v877, %v1035
        %v1037 = vpop.f32.mrb[0].mxu0
        %1038 = vmatprep.mubr.f32.mxu0 0.0
        %1039 = vmatmul.mubr.f32.gmra.mrb[0].mxu0 %v833
        %v1040 = vpop.f32.mrb[0].mxu0
        %v1041 = vadd.f32 %v877, %v1040
        %v1042 = vpop.f32.mrb[0].mxu0
        %1043 = vmatprep.mubr.f32.mxu0 0.0
        %1044 = vmatmul.mubr.f32.gmra.mrb[0].mxu0 %v834
        %v1045 = vpop.f32.mrb[0].mxu0
        %v1046 = vadd.f32 %v877, %v1045
        %v1047 = vpop.f32.mrb[0].mxu0
        %1048 = vmatprep.mubr.f32.mxu0 0.0
        %1049 = vmatmul.mubr.f32.gmra.mrb[0].mxu0 %v835
        %v1050 = vpop.f32.mrb[0].mxu0
        %v1051 = vadd.f32 %v877, %v1050
        %v1052 = vpop.f32.mrb[0].mxu0
        %1053 = vmatprep.mubr.f32.mxu0 0.0
        %1054 = vmatmul.mubr.f32.gmra.mrb[0].mxu0 %v836
        %v1055 = vpop.f32.mrb[0].mxu0
        %v1056 = vadd.f32 %v877, %v1055
        %v1057 = vpop.f32.mrb[0].mxu0
        %1058 = vmatprep.mubr.f32.mxu0 0.0
        %1059 = vmatmul.mubr.f32.gmra.mrb[0].mxu0 %v837
        %v1060 = vpop.f32.mrb[0].mxu0
        %v1061 = vadd.f32 %v877, %v1060
        %v1062 = vpop.f32.mrb[0].mxu0
        %1063 = vmatprep.mubr.f32.mxu0 0.0
        %1064 = vmatmul.mubr.f32.gmra.mrb[0].mxu0 %v838
        %v1065 = vpop.f32.mrb[0].mxu0
        %v1066 = vadd.f32 %v877, %v1065
        %v1067 = vpop.f32.mrb[0].mxu0
        %1068 = vmatprep.mubr.f32.mxu0 0.0
        %1069 = vmatmul.mubr.f32.gmra.mrb[0].mxu0 %v839
        %v1070 = vpop.f32.mrb[0].mxu0
        %v1071 = vadd.f32 %v877, %v1070
        %v1072 = vpop.f32.mrb[0].mxu0
        %1073 = vmatprep.mubr.f32.mxu0 0.0
        %1074 = vmatmul.mubr.f32.gmra.mrb[0].mxu0 %v840
        %v1075 = vpop.f32.mrb[0].mxu0
        %v1076 = vadd.f32 %v877, %v1075
        %v1077 = vpop.f32.mrb[0].mxu0
        %1078 = vmatprep.mubr.f32.mxu0 0.0
        %1079 = vmatmul.mubr.f32.gmra.mrb[0].mxu0 %v841
        %v1080 = vpop.f32.mrb[0].mxu0
        %v1081 = vadd.f32 %v877, %v1080
        %v1082 = vpop.f32.mrb[0].mxu0
        %1083 = vmatprep.mubr.f32.mxu0 0.0
        %1084 = vmatmul.mubr.f32.gmra.mrb[0].mxu0 %v842
        %v1085 = vpop.f32.mrb[0].mxu0
        %v1086 = vadd.f32 %v877, %v1085
        %v1087 = vpop.f32.mrb[0].mxu0
        %1088 = vmatprep.mubr.f32.mxu0 0.0
        %1089 = vmatmul.mubr.f32.gmra.mrb[0].mxu0 %v843
        %v1090 = vpop.f32.mrb[0].mxu0
        %v1091 = vadd.f32 %v877, %v1090
        %v1092 = vpop.f32.mrb[0].mxu0
        %1093 = vmatprep.mubr.f32.mxu0 0.0
        %1094 = vmatmul.mubr.f32.gmra.mrb[0].mxu0 %v844
        %v1095 = vpop.f32.mrb[0].mxu0
        %v1096 = vadd.f32 %v877, %v1095
        %v1097 = vpop.f32.mrb[0].mxu0
        %1098 = vmatprep.mubr.f32.mxu0 0.0
        %1099 = vmatmul.mubr.f32.gmra.mrb[0].mxu0 %v845
        %v1100 = vpop.f32.mrb[0].mxu0
        %v1101 = vadd.f32 %v877, %v1100
        %v1102 = vpop.f32.mrb[0].mxu0
        %1103 = vdwg.mxu0
        %v1104 = vmax.f32 %v946, 0.0
        %v1105 = vmax.f32 %v951, 0.0
        %v1106 = vmax.f32 %v956, 0.0
        %v1107 = vmax.f32 %v961, 0.0
        %v1108 = vmax.f32 %v966, 0.0
        %v1109 = vmax.f32 %v971, 0.0
        %v1110 = vmax.f32 %v976, 0.0
        %v1111 = vmax.f32 %v981, 0.0
        %v1112 = vmax.f32 %v986, 0.0
        %v1113 = vmax.f32 %v991, 0.0
        %v1114 = vmax.f32 %v996, 0.0
        %v1115 = vmax.f32 %v1001, 0.0
        %v1116 = vmax.f32 %v1006, 0.0
        %v1117 = vmax.f32 %v1011, 0.0
        %v1118 = vmax.f32 %v1016, 0.0
        %v1119 = vmax.f32 %v1021, 0.0
        %v1120 = vmax.f32 %v1026, 0.0
        %v1121 = vmax.f32 %v1031, 0.0
        %v1122 = vmax.f32 %v1036, 0.0
        %v1123 = vmax.f32 %v1041, 0.0
        %v1124 = vmax.f32 %v1046, 0.0
        %v1125 = vmax.f32 %v1051, 0.0
        %v1126 = vmax.f32 %v1056, 0.0
        %v1127 = vmax.f32 %v1061, 0.0
        %v1128 = vmax.f32 %v1066, 0.0
        %v1129 = vmax.f32 %v1071, 0.0
        %v1130 = vmax.f32 %v1076, 0.0
        %v1131 = vmax.f32 %v1081, 0.0
        %v1132 = vmax.f32 %v1086, 0.0
        %v1133 = vmax.f32 %v1091, 0.0
        %v1134 = vmax.f32 %v1096, 0.0
        %v1135 = vmax.f32 %v1101, 0.0
        %s1136 = scalar_lea.vmem [#allocation6], 96
        %v1137 = vld [vmem:[%s1136] sm:$0xff]
        %v1138 = vld [vmem:[%s1136 + $0x8] sm:$0xff]
        %v1139 = vld [vmem:[%s1136 + $0x10] sm:$0xff]
        %v1140 = vld [vmem:[%s1136 + $0x18] sm:$0xff]
        %1141 = vst [vmem:[#allocation2] sm:$0xff] %v1137
        %1142 = vst [vmem:[#allocation2 + $0x8] sm:$0xff] %v1138
        %1143 = vst [vmem:[#allocation2 + $0x10] sm:$0xff] %v1139
        %1144 = vst [vmem:[#allocation2 + $0x18] sm:$0xff] %v1140
        %v1145 = vld [vmem:[#allocation2] sm:$0xff]
        %v1146 = vld [vmem:[#allocation2 + $0x8] sm:$0xff]
        %v1147 = vld [vmem:[#allocation2 + $0x10] sm:$0xff]
        %v1148 = vld [vmem:[#allocation2 + $0x18] sm:$0xff]
        %v1149 = vld [vmem:[#allocation2 + $0x20] sm:$0xff]
        %v1150 = vld [vmem:[#allocation2 + $0x28] sm:$0xff]
        %v1151 = vld [vmem:[#allocation2 + $0x30] sm:$0xff]
        %v1152 = vld [vmem:[#allocation2 + $0x38] sm:$0xff]
        %v1153 = vld [vmem:[#allocation2 + $0x40] sm:$0xff]
        %v1154 = vld [vmem:[#allocation2 + $0x48] sm:$0xff]
        %v1155 = vld [vmem:[#allocation2 + $0x50] sm:$0xff]
        %v1156 = vld [vmem:[#allocation2 + $0x58] sm:$0xff]
        %v1157 = vld [vmem:[#allocation2 + $0x60] sm:$0xff]
        %v1158 = vld [vmem:[#allocation2 + $0x68] sm:$0xff]
        %v1159 = vld [vmem:[#allocation2 + $0x70] sm:$0xff]
        %v1160 = vld [vmem:[#allocation2 + $0x78] sm:$0xff]
        %s1161 = scalar_lea.vmem [#allocation8], 3
        %v1162 = vld [vmem:[%s1161] sm:$0x1]
        %v1164 = vlaneseq
        %v1165 = vshrl.u32 %v1164, 7
        %v1166 = vsub.s32 0, %v1165
        %v1167 = vrot.slane %v1162, %v1166
        %1169 = vmatprep.subr.mxu0 0.0
        %1170 = vmatpush1.msra.mxu0 %v1145
        %1171 = vmatprep.subr.mxu0 0.0
        %1172 = vmatpush1.msra.mxu0 %v1146
        %1173 = vmatprep.subr.mxu0 0.0
        %1174 = vmatpush1.msra.mxu0 %v1147
        %1175 = vmatprep.subr.mxu0 0.0
        %1176 = vmatpush1.msra.mxu0 %v1148
        %1177 = vmatprep.subr.mxu0 0.0
        %1178 = vmatpush1.msra.mxu0 %v1149
        %1179 = vmatprep.subr.mxu0 0.0
        %1180 = vmatpush1.msra.mxu0 %v1150
        %1181 = vmatprep.subr.mxu0 0.0
        %1182 = vmatpush1.msra.mxu0 %v1151
        %1183 = vmatprep.subr.mxu0 0.0
        %1184 = vmatpush1.msra.mxu0 %v1152
        %1185 = vmatprep.subr.mxu0 0.0
        %1186 = vmatpush1.msra.mxu0 %v1153
        %1187 = vmatprep.subr.mxu0 0.0
        %1188 = vmatpush1.msra.mxu0 %v1154
        %1189 = vmatprep.subr.mxu0 0.0
        %1190 = vmatpush1.msra.mxu0 %v1155
        %1191 = vmatprep.subr.mxu0 0.0
        %1192 = vmatpush1.msra.mxu0 %v1156
        %1193 = vmatprep.subr.mxu0 0.0
        %1194 = vmatpush1.msra.mxu0 %v1157
        %1195 = vmatprep.subr.mxu0 0.0
        %1196 = vmatpush1.msra.mxu0 %v1158
        %1197 = vmatprep.subr.mxu0 0.0
        %1198 = vmatpush1.msra.mxu0 %v1159
        %1199 = vmatprep.subr.mxu0 0.0
        %1200 = vmatpush1.msra.mxu0 %v1160
        %1201 = vmatprep.subr.mxu0 0.0
        %1202 = vmatpush1.msra.mxu0 0.0
        %1203 = vmatprep.subr.mxu0 0.0
        %1204 = vmatpush1.msra.mxu0 0.0
        %1205 = vmatprep.subr.mxu0 0.0
        %1206 = vmatpush1.msra.mxu0 0.0
        %1207 = vmatprep.subr.mxu0 0.0
        %1208 = vmatpush1.msra.mxu0 0.0
        %1209 = vmatprep.subr.mxu0 0.0
        %1210 = vmatpush1.msra.mxu0 0.0
        %1211 = vmatprep.subr.mxu0 0.0
        %1212 = vmatpush1.msra.mxu0 0.0
        %1213 = vmatprep.subr.mxu0 0.0
        %1214 = vmatpush1.msra.mxu0 0.0
        %1215 = vmatprep.subr.mxu0 0.0
        %1216 = vmatpush1.msra.mxu0 0.0
        %1217 = vmatprep.subr.mxu0 0.0
        %1218 = vmatpush1.msra.mxu0 0.0
        %1219 = vmatprep.subr.mxu0 0.0
        %1220 = vmatpush1.msra.mxu0 0.0
        %1221 = vmatprep.subr.mxu0 0.0
        %1222 = vmatpush1.msra.mxu0 0.0
        %1223 = vmatprep.subr.mxu0 0.0
        %1224 = vmatpush1.msra.mxu0 0.0
        %1225 = vmatprep.subr.mxu0 0.0
        %1226 = vmatpush1.msra.mxu0 0.0
        %1227 = vmatprep.subr.mxu0 0.0
        %1228 = vmatpush1.msra.mxu0 0.0
        %1229 = vmatprep.subr.mxu0 0.0
        %1230 = vmatpush1.msra.mxu0 0.0
        %1231 = vmatprep.subr.mxu0 0.0
        %1232 = vmatpush1.msra.mxu0 0.0
        %1233 = vmatprep.mubr.f32.mxu0 0.0
        %1234 = vmatmul.mubr.f32.gmra.mrb[0].mxu0 %v1104
        %v1235 = vpop.f32.mrb[0].mxu0
        %v1236 = vadd.f32 %v1167, %v1235
        %v1237 = vpop.f32.mrb[0].mxu0
        %1238 = vmatprep.mubr.f32.mxu0 0.0
        %1239 = vmatmul.mubr.f32.gmra.mrb[0].mxu0 %v1105
        %v1240 = vpop.f32.mrb[0].mxu0
        %v1241 = vadd.f32 %v1167, %v1240
        %v1242 = vpop.f32.mrb[0].mxu0
        %1243 = vmatprep.mubr.f32.mxu0 0.0
        %1244 = vmatmul.mubr.f32.gmra.mrb[0].mxu0 %v1106
        %v1245 = vpop.f32.mrb[0].mxu0
        %v1246 = vadd.f32 %v1167, %v1245
        %v1247 = vpop.f32.mrb[0].mxu0
        %1248 = vmatprep.mubr.f32.mxu0 0.0
        %1249 = vmatmul.mubr.f32.gmra.mrb[0].mxu0 %v1107
        %v1250 = vpop.f32.mrb[0].mxu0
        %v1251 = vadd.f32 %v1167, %v1250
        %v1252 = vpop.f32.mrb[0].mxu0
        %1253 = vmatprep.mubr.f32.mxu0 0.0
        %1254 = vmatmul.mubr.f32.gmra.mrb[0].mxu0 %v1108
        %v1255 = vpop.f32.mrb[0].mxu0
        %v1256 = vadd.f32 %v1167, %v1255
        %v1257 = vpop.f32.mrb[0].mxu0
        %1258 = vmatprep.mubr.f32.mxu0 0.0
        %1259 = vmatmul.mubr.f32.gmra.mrb[0].mxu0 %v1109
        %v1260 = vpop.f32.mrb[0].mxu0
        %v1261 = vadd.f32 %v1167, %v1260
        %v1262 = vpop.f32.mrb[0].mxu0
        %1263 = vmatprep.mubr.f32.mxu0 0.0
        %1264 = vmatmul.mubr.f32.gmra.mrb[0].mxu0 %v1110
        %v1265 = vpop.f32.mrb[0].mxu0
        %v1266 = vadd.f32 %v1167, %v1265
        %v1267 = vpop.f32.mrb[0].mxu0
        %1268 = vmatprep.mubr.f32.mxu0 0.0
        %1269 = vmatmul.mubr.f32.gmra.mrb[0].mxu0 %v1111
        %v1270 = vpop.f32.mrb[0].mxu0
        %v1271 = vadd.f32 %v1167, %v1270
        %v1272 = vpop.f32.mrb[0].mxu0
        %1273 = vmatprep.mubr.f32.mxu0 0.0
        %1274 = vmatmul.mubr.f32.gmra.mrb[0].mxu0 %v1112
        %v1275 = vpop.f32.mrb[0].mxu0
        %v1276 = vadd.f32 %v1167, %v1275
        %v1277 = vpop.f32.mrb[0].mxu0
        %1278 = vmatprep.mubr.f32.mxu0 0.0
        %1279 = vmatmul.mubr.f32.gmra.mrb[0].mxu0 %v1113
        %v1280 = vpop.f32.mrb[0].mxu0
        %v1281 = vadd.f32 %v1167, %v1280
        %v1282 = vpop.f32.mrb[0].mxu0
        %1283 = vmatprep.mubr.f32.mxu0 0.0
        %1284 = vmatmul.mubr.f32.gmra.mrb[0].mxu0 %v1114
        %v1285 = vpop.f32.mrb[0].mxu0
        %v1286 = vadd.f32 %v1167, %v1285
        %v1287 = vpop.f32.mrb[0].mxu0
        %1288 = vmatprep.mubr.f32.mxu0 0.0
        %1289 = vmatmul.mubr.f32.gmra.mrb[0].mxu0 %v1115
        %v1290 = vpop.f32.mrb[0].mxu0
        %v1291 = vadd.f32 %v1167, %v1290
        %v1292 = vpop.f32.mrb[0].mxu0
        %1293 = vmatprep.mubr.f32.mxu0 0.0
        %1294 = vmatmul.mubr.f32.gmra.mrb[0].mxu0 %v1116
        %v1295 = vpop.f32.mrb[0].mxu0
        %v1296 = vadd.f32 %v1167, %v1295
        %v1297 = vpop.f32.mrb[0].mxu0
        %1298 = vmatprep.mubr.f32.mxu0 0.0
        %1299 = vmatmul.mubr.f32.gmra.mrb[0].mxu0 %v1117
        %v1300 = vpop.f32.mrb[0].mxu0
        %v1301 = vadd.f32 %v1167, %v1300
        %v1302 = vpop.f32.mrb[0].mxu0
        %1303 = vmatprep.mubr.f32.mxu0 0.0
        %1304 = vmatmul.mubr.f32.gmra.mrb[0].mxu0 %v1118
        %v1305 = vpop.f32.mrb[0].mxu0
        %v1306 = vadd.f32 %v1167, %v1305
        %v1307 = vpop.f32.mrb[0].mxu0
        %1308 = vmatprep.mubr.f32.mxu0 0.0
        %1309 = vmatmul.mubr.f32.gmra.mrb[0].mxu0 %v1119
        %v1310 = vpop.f32.mrb[0].mxu0
        %v1311 = vadd.f32 %v1167, %v1310
        %v1312 = vpop.f32.mrb[0].mxu0
        %1313 = vmatprep.mubr.f32.mxu0 0.0
        %1314 = vmatmul.mubr.f32.gmra.mrb[0].mxu0 %v1120
        %v1315 = vpop.f32.mrb[0].mxu0
        %v1316 = vadd.f32 %v1167, %v1315
        %v1317 = vpop.f32.mrb[0].mxu0
        %1318 = vmatprep.mubr.f32.mxu0 0.0
        %1319 = vmatmul.mubr.f32.gmra.mrb[0].mxu0 %v1121
        %v1320 = vpop.f32.mrb[0].mxu0
        %v1321 = vadd.f32 %v1167, %v1320
        %v1322 = vpop.f32.mrb[0].mxu0
        %1323 = vmatprep.mubr.f32.mxu0 0.0
        %1324 = vmatmul.mubr.f32.gmra.mrb[0].mxu0 %v1122
        %v1325 = vpop.f32.mrb[0].mxu0
        %v1326 = vadd.f32 %v1167, %v1325
        %v1327 = vpop.f32.mrb[0].mxu0
        %1328 = vmatprep.mubr.f32.mxu0 0.0
        %1329 = vmatmul.mubr.f32.gmra.mrb[0].mxu0 %v1123
        %v1330 = vpop.f32.mrb[0].mxu0
        %v1331 = vadd.f32 %v1167, %v1330
        %v1332 = vpop.f32.mrb[0].mxu0
        %1333 = vmatprep.mubr.f32.mxu0 0.0
        %1334 = vmatmul.mubr.f32.gmra.mrb[0].mxu0 %v1124
        %v1335 = vpop.f32.mrb[0].mxu0
        %v1336 = vadd.f32 %v1167, %v1335
        %v1337 = vpop.f32.mrb[0].mxu0
        %1338 = vmatprep.mubr.f32.mxu0 0.0
        %1339 = vmatmul.mubr.f32.gmra.mrb[0].mxu0 %v1125
        %v1340 = vpop.f32.mrb[0].mxu0
        %v1341 = vadd.f32 %v1167, %v1340
        %v1342 = vpop.f32.mrb[0].mxu0
        %1343 = vmatprep.mubr.f32.mxu0 0.0
        %1344 = vmatmul.mubr.f32.gmra.mrb[0].mxu0 %v1126
        %v1345 = vpop.f32.mrb[0].mxu0
        %v1346 = vadd.f32 %v1167, %v1345
        %v1347 = vpop.f32.mrb[0].mxu0
        %1348 = vmatprep.mubr.f32.mxu0 0.0
        %1349 = vmatmul.mubr.f32.gmra.mrb[0].mxu0 %v1127
        %v1350 = vpop.f32.mrb[0].mxu0
        %v1351 = vadd.f32 %v1167, %v1350
        %v1352 = vpop.f32.mrb[0].mxu0
        %1353 = vmatprep.mubr.f32.mxu0 0.0
        %1354 = vmatmul.mubr.f32.gmra.mrb[0].mxu0 %v1128
        %v1355 = vpop.f32.mrb[0].mxu0
        %v1356 = vadd.f32 %v1167, %v1355
        %v1357 = vpop.f32.mrb[0].mxu0
        %1358 = vmatprep.mubr.f32.mxu0 0.0
        %1359 = vmatmul.mubr.f32.gmra.mrb[0].mxu0 %v1129
        %v1360 = vpop.f32.mrb[0].mxu0
        %v1361 = vadd.f32 %v1167, %v1360
        %v1362 = vpop.f32.mrb[0].mxu0
        %1363 = vmatprep.mubr.f32.mxu0 0.0
        %1364 = vmatmul.mubr.f32.gmra.mrb[0].mxu0 %v1130
        %v1365 = vpop.f32.mrb[0].mxu0
        %v1366 = vadd.f32 %v1167, %v1365
        %v1367 = vpop.f32.mrb[0].mxu0
        %1368 = vmatprep.mubr.f32.mxu0 0.0
        %1369 = vmatmul.mubr.f32.gmra.mrb[0].mxu0 %v1131
        %v1370 = vpop.f32.mrb[0].mxu0
        %v1371 = vadd.f32 %v1167, %v1370
        %v1372 = vpop.f32.mrb[0].mxu0
        %1373 = vmatprep.mubr.f32.mxu0 0.0
        %1374 = vmatmul.mubr.f32.gmra.mrb[0].mxu0 %v1132
        %v1375 = vpop.f32.mrb[0].mxu0
        %v1376 = vadd.f32 %v1167, %v1375
        %v1377 = vpop.f32.mrb[0].mxu0
        %1378 = vmatprep.mubr.f32.mxu0 0.0
        %1379 = vmatmul.mubr.f32.gmra.mrb[0].mxu0 %v1133
        %v1380 = vpop.f32.mrb[0].mxu0
        %v1381 = vadd.f32 %v1167, %v1380
        %v1382 = vpop.f32.mrb[0].mxu0
        %1383 = vmatprep.mubr.f32.mxu0 0.0
        %1384 = vmatmul.mubr.f32.gmra.mrb[0].mxu0 %v1134
        %v1385 = vpop.f32.mrb[0].mxu0
        %v1386 = vadd.f32 %v1167, %v1385
        %v1387 = vpop.f32.mrb[0].mxu0
        %1388 = vmatprep.mubr.f32.mxu0 0.0
        %1389 = vmatmul.mubr.f32.gmra.mrb[0].mxu0 %v1135
        %v1390 = vpop.f32.mrb[0].mxu0
        %v1391 = vadd.f32 %v1167, %v1390
        %v1392 = vpop.f32.mrb[0].mxu0
        %1393 = vdwg.mxu0
        %v1394 = vmax.f32 %v1236, 0.0
        %v1395 = vmax.f32 %v1241, 0.0
        %v1396 = vmax.f32 %v1246, 0.0
        %v1397 = vmax.f32 %v1251, 0.0
        %v1398 = vmax.f32 %v1256, 0.0
        %v1399 = vmax.f32 %v1261, 0.0
        %v1400 = vmax.f32 %v1266, 0.0
        %v1401 = vmax.f32 %v1271, 0.0
        %v1402 = vmax.f32 %v1276, 0.0
        %v1403 = vmax.f32 %v1281, 0.0
        %v1404 = vmax.f32 %v1286, 0.0
        %v1405 = vmax.f32 %v1291, 0.0
        %v1406 = vmax.f32 %v1296, 0.0
        %v1407 = vmax.f32 %v1301, 0.0
        %v1408 = vmax.f32 %v1306, 0.0
        %v1409 = vmax.f32 %v1311, 0.0
        %v1410 = vmax.f32 %v1316, 0.0
        %v1411 = vmax.f32 %v1321, 0.0
        %v1412 = vmax.f32 %v1326, 0.0
        %v1413 = vmax.f32 %v1331, 0.0
        %v1414 = vmax.f32 %v1336, 0.0
        %v1415 = vmax.f32 %v1341, 0.0
        %v1416 = vmax.f32 %v1346, 0.0
        %v1417 = vmax.f32 %v1351, 0.0
        %v1418 = vmax.f32 %v1356, 0.0
        %v1419 = vmax.f32 %v1361, 0.0
        %v1420 = vmax.f32 %v1366, 0.0
        %v1421 = vmax.f32 %v1371, 0.0
        %v1422 = vmax.f32 %v1376, 0.0
        %v1423 = vmax.f32 %v1381, 0.0
        %v1424 = vmax.f32 %v1386, 0.0
        %v1425 = vmax.f32 %v1391, 0.0
        %s1426 = scalar_lea.vmem [#allocation6], 128
        %v1427 = vld [vmem:[%s1426] sm:$0xff]
        %v1428 = vld [vmem:[%s1426 + $0x8] sm:$0xff]
        %v1429 = vld [vmem:[%s1426 + $0x10] sm:$0xff]
        %v1430 = vld [vmem:[%s1426 + $0x18] sm:$0xff]
        %1431 = vst [vmem:[#allocation2] sm:$0xff] %v1427
        %1432 = vst [vmem:[#allocation2 + $0x8] sm:$0xff] %v1428
        %1433 = vst [vmem:[#allocation2 + $0x10] sm:$0xff] %v1429
        %1434 = vst [vmem:[#allocation2 + $0x18] sm:$0xff] %v1430
        %v1435 = vld [vmem:[#allocation2] sm:$0xff]
        %v1436 = vld [vmem:[#allocation2 + $0x8] sm:$0xff]
        %v1437 = vld [vmem:[#allocation2 + $0x10] sm:$0xff]
        %v1438 = vld [vmem:[#allocation2 + $0x18] sm:$0xff]
        %v1439 = vld [vmem:[#allocation2 + $0x20] sm:$0xff]
        %v1440 = vld [vmem:[#allocation2 + $0x28] sm:$0xff]
        %v1441 = vld [vmem:[#allocation2 + $0x30] sm:$0xff]
        %v1442 = vld [vmem:[#allocation2 + $0x38] sm:$0xff]
        %v1443 = vld [vmem:[#allocation2 + $0x40] sm:$0xff]
        %v1444 = vld [vmem:[#allocation2 + $0x48] sm:$0xff]
        %v1445 = vld [vmem:[#allocation2 + $0x50] sm:$0xff]
        %v1446 = vld [vmem:[#allocation2 + $0x58] sm:$0xff]
        %v1447 = vld [vmem:[#allocation2 + $0x60] sm:$0xff]
        %v1448 = vld [vmem:[#allocation2 + $0x68] sm:$0xff]
        %v1449 = vld [vmem:[#allocation2 + $0x70] sm:$0xff]
        %v1450 = vld [vmem:[#allocation2 + $0x78] sm:$0xff]
        %s1451 = scalar_lea.vmem [#allocation8], 4
        %v1452 = vld [vmem:[%s1451] sm:$0x1]
        %v1454 = vlaneseq
        %v1455 = vshrl.u32 %v1454, 7
        %v1456 = vsub.s32 0, %v1455
        %v1457 = vrot.slane %v1452, %v1456
        %1459 = vmatprep.subr.mxu0 0.0
        %1460 = vmatpush1.msra.mxu0 %v1435
        %1461 = vmatprep.subr.mxu0 0.0
        %1462 = vmatpush1.msra.mxu0 %v1436
        %1463 = vmatprep.subr.mxu0 0.0
        %1464 = vmatpush1.msra.mxu0 %v1437
        %1465 = vmatprep.subr.mxu0 0.0
        %1466 = vmatpush1.msra.mxu0 %v1438
        %1467 = vmatprep.subr.mxu0 0.0
        %1468 = vmatpush1.msra.mxu0 %v1439
        %1469 = vmatprep.subr.mxu0 0.0
        %1470 = vmatpush1.msra.mxu0 %v1440
        %1471 = vmatprep.subr.mxu0 0.0
        %1472 = vmatpush1.msra.mxu0 %v1441
        %1473 = vmatprep.subr.mxu0 0.0
        %1474 = vmatpush1.msra.mxu0 %v1442
        %1475 = vmatprep.subr.mxu0 0.0
        %1476 = vmatpush1.msra.mxu0 %v1443
        %1477 = vmatprep.subr.mxu0 0.0
        %1478 = vmatpush1.msra.mxu0 %v1444
        %1479 = vmatprep.subr.mxu0 0.0
        %1480 = vmatpush1.msra.mxu0 %v1445
        %1481 = vmatprep.subr.mxu0 0.0
        %1482 = vmatpush1.msra.mxu0 %v1446
        %1483 = vmatprep.subr.mxu0 0.0
        %1484 = vmatpush1.msra.mxu0 %v1447
        %1485 = vmatprep.subr.mxu0 0.0
        %1486 = vmatpush1.msra.mxu0 %v1448
        %1487 = vmatprep.subr.mxu0 0.0
        %1488 = vmatpush1.msra.mxu0 %v1449
        %1489 = vmatprep.subr.mxu0 0.0
        %1490 = vmatpush1.msra.mxu0 %v1450
        %1491 = vmatprep.subr.mxu0 0.0
        %1492 = vmatpush1.msra.mxu0 0.0
        %1493 = vmatprep.subr.mxu0 0.0
        %1494 = vmatpush1.msra.mxu0 0.0
        %1495 = vmatprep.subr.mxu0 0.0
        %1496 = vmatpush1.msra.mxu0 0.0
        %1497 = vmatprep.subr.mxu0 0.0
        %1498 = vmatpush1.msra.mxu0 0.0
        %1499 = vmatprep.subr.mxu0 0.0
        %1500 = vmatpush1.msra.mxu0 0.0
        %1501 = vmatprep.subr.mxu0 0.0
        %1502 = vmatpush1.msra.mxu0 0.0
        %1503 = vmatprep.subr.mxu0 0.0
        %1504 = vmatpush1.msra.mxu0 0.0
        %1505 = vmatprep.subr.mxu0 0.0
        %1506 = vmatpush1.msra.mxu0 0.0
        %1507 = vmatprep.subr.mxu0 0.0
        %1508 = vmatpush1.msra.mxu0 0.0
        %1509 = vmatprep.subr.mxu0 0.0
        %1510 = vmatpush1.msra.mxu0 0.0
        %1511 = vmatprep.subr.mxu0 0.0
        %1512 = vmatpush1.msra.mxu0 0.0
        %1513 = vmatprep.subr.mxu0 0.0
        %1514 = vmatpush1.msra.mxu0 0.0
        %1515 = vmatprep.subr.mxu0 0.0
        %1516 = vmatpush1.msra.mxu0 0.0
        %1517 = vmatprep.subr.mxu0 0.0
        %1518 = vmatpush1.msra.mxu0 0.0
        %1519 = vmatprep.subr.mxu0 0.0
        %1520 = vmatpush1.msra.mxu0 0.0
        %1521 = vmatprep.subr.mxu0 0.0
        %1522 = vmatpush1.msra.mxu0 0.0
        %1523 = vmatprep.mubr.f32.mxu0 0.0
        %1524 = vmatmul.mubr.f32.gmra.mrb[0].mxu0 %v1394
        %v1525 = vpop.f32.mrb[0].mxu0
        %v1526 = vadd.f32 %v1457, %v1525
        %v1527 = vpop.f32.mrb[0].mxu0
        %1528 = vmatprep.mubr.f32.mxu0 0.0
        %1529 = vmatmul.mubr.f32.gmra.mrb[0].mxu0 %v1395
        %v1530 = vpop.f32.mrb[0].mxu0
        %v1531 = vadd.f32 %v1457, %v1530
        %v1532 = vpop.f32.mrb[0].mxu0
        %1533 = vmatprep.mubr.f32.mxu0 0.0
        %1534 = vmatmul.mubr.f32.gmra.mrb[0].mxu0 %v1396
        %v1535 = vpop.f32.mrb[0].mxu0
        %v1536 = vadd.f32 %v1457, %v1535
        %v1537 = vpop.f32.mrb[0].mxu0
        %1538 = vmatprep.mubr.f32.mxu0 0.0
        %1539 = vmatmul.mubr.f32.gmra.mrb[0].mxu0 %v1397
        %v1540 = vpop.f32.mrb[0].mxu0
        %v1541 = vadd.f32 %v1457, %v1540
        %v1542 = vpop.f32.mrb[0].mxu0
        %1543 = vmatprep.mubr.f32.mxu0 0.0
        %1544 = vmatmul.mubr.f32.gmra.mrb[0].mxu0 %v1398
        %v1545 = vpop.f32.mrb[0].mxu0
        %v1546 = vadd.f32 %v1457, %v1545
        %v1547 = vpop.f32.mrb[0].mxu0
        %1548 = vmatprep.mubr.f32.mxu0 0.0
        %1549 = vmatmul.mubr.f32.gmra.mrb[0].mxu0 %v1399
        %v1550 = vpop.f32.mrb[0].mxu0
        %v1551 = vadd.f32 %v1457, %v1550
        %v1552 = vpop.f32.mrb[0].mxu0
        %1553 = vmatprep.mubr.f32.mxu0 0.0
        %1554 = vmatmul.mubr.f32.gmra.mrb[0].mxu0 %v1400
        %v1555 = vpop.f32.mrb[0].mxu0
        %v1556 = vadd.f32 %v1457, %v1555
        %v1557 = vpop.f32.mrb[0].mxu0
        %1558 = vmatprep.mubr.f32.mxu0 0.0
        %1559 = vmatmul.mubr.f32.gmra.mrb[0].mxu0 %v1401
        %v1560 = vpop.f32.mrb[0].mxu0
        %v1561 = vadd.f32 %v1457, %v1560
        %v1562 = vpop.f32.mrb[0].mxu0
        %1563 = vmatprep.mubr.f32.mxu0 0.0
        %1564 = vmatmul.mubr.f32.gmra.mrb[0].mxu0 %v1402
        %v1565 = vpop.f32.mrb[0].mxu0
        %v1566 = vadd.f32 %v1457, %v1565
        %v1567 = vpop.f32.mrb[0].mxu0
        %1568 = vmatprep.mubr.f32.mxu0 0.0
        %1569 = vmatmul.mubr.f32.gmra.mrb[0].mxu0 %v1403
        %v1570 = vpop.f32.mrb[0].mxu0
        %v1571 = vadd.f32 %v1457, %v1570
        %v1572 = vpop.f32.mrb[0].mxu0
        %1573 = vmatprep.mubr.f32.mxu0 0.0
        %1574 = vmatmul.mubr.f32.gmra.mrb[0].mxu0 %v1404
        %v1575 = vpop.f32.mrb[0].mxu0
        %v1576 = vadd.f32 %v1457, %v1575
        %v1577 = vpop.f32.mrb[0].mxu0
        %1578 = vmatprep.mubr.f32.mxu0 0.0
        %1579 = vmatmul.mubr.f32.gmra.mrb[0].mxu0 %v1405
        %v1580 = vpop.f32.mrb[0].mxu0
        %v1581 = vadd.f32 %v1457, %v1580
        %v1582 = vpop.f32.mrb[0].mxu0
        %1583 = vmatprep.mubr.f32.mxu0 0.0
        %1584 = vmatmul.mubr.f32.gmra.mrb[0].mxu0 %v1406
        %v1585 = vpop.f32.mrb[0].mxu0
        %v1586 = vadd.f32 %v1457, %v1585
        %v1587 = vpop.f32.mrb[0].mxu0
        %1588 = vmatprep.mubr.f32.mxu0 0.0
        %1589 = vmatmul.mubr.f32.gmra.mrb[0].mxu0 %v1407
        %v1590 = vpop.f32.mrb[0].mxu0
        %v1591 = vadd.f32 %v1457, %v1590
        %v1592 = vpop.f32.mrb[0].mxu0
        %1593 = vmatprep.mubr.f32.mxu0 0.0
        %1594 = vmatmul.mubr.f32.gmra.mrb[0].mxu0 %v1408
        %v1595 = vpop.f32.mrb[0].mxu0
        %v1596 = vadd.f32 %v1457, %v1595
        %v1597 = vpop.f32.mrb[0].mxu0
        %1598 = vmatprep.mubr.f32.mxu0 0.0
        %1599 = vmatmul.mubr.f32.gmra.mrb[0].mxu0 %v1409
        %v1600 = vpop.f32.mrb[0].mxu0
        %v1601 = vadd.f32 %v1457, %v1600
        %v1602 = vpop.f32.mrb[0].mxu0
        %1603 = vmatprep.mubr.f32.mxu0 0.0
        %1604 = vmatmul.mubr.f32.gmra.mrb[0].mxu0 %v1410
        %v1605 = vpop.f32.mrb[0].mxu0
        %v1606 = vadd.f32 %v1457, %v1605
        %v1607 = vpop.f32.mrb[0].mxu0
        %1608 = vmatprep.mubr.f32.mxu0 0.0
        %1609 = vmatmul.mubr.f32.gmra.mrb[0].mxu0 %v1411
        %v1610 = vpop.f32.mrb[0].mxu0
        %v1611 = vadd.f32 %v1457, %v1610
        %v1612 = vpop.f32.mrb[0].mxu0
        %1613 = vmatprep.mubr.f32.mxu0 0.0
        %1614 = vmatmul.mubr.f32.gmra.mrb[0].mxu0 %v1412
        %v1615 = vpop.f32.mrb[0].mxu0
        %v1616 = vadd.f32 %v1457, %v1615
        %v1617 = vpop.f32.mrb[0].mxu0
        %1618 = vmatprep.mubr.f32.mxu0 0.0
        %1619 = vmatmul.mubr.f32.gmra.mrb[0].mxu0 %v1413
        %v1620 = vpop.f32.mrb[0].mxu0
        %v1621 = vadd.f32 %v1457, %v1620
        %v1622 = vpop.f32.mrb[0].mxu0
        %1623 = vmatprep.mubr.f32.mxu0 0.0
        %1624 = vmatmul.mubr.f32.gmra.mrb[0].mxu0 %v1414
        %v1625 = vpop.f32.mrb[0].mxu0
        %v1626 = vadd.f32 %v1457, %v1625
        %v1627 = vpop.f32.mrb[0].mxu0
        %1628 = vmatprep.mubr.f32.mxu0 0.0
        %1629 = vmatmul.mubr.f32.gmra.mrb[0].mxu0 %v1415
        %v1630 = vpop.f32.mrb[0].mxu0
        %v1631 = vadd.f32 %v1457, %v1630
        %v1632 = vpop.f32.mrb[0].mxu0
        %1633 = vmatprep.mubr.f32.mxu0 0.0
        %1634 = vmatmul.mubr.f32.gmra.mrb[0].mxu0 %v1416
        %v1635 = vpop.f32.mrb[0].mxu0
        %v1636 = vadd.f32 %v1457, %v1635
        %v1637 = vpop.f32.mrb[0].mxu0
        %1638 = vmatprep.mubr.f32.mxu0 0.0
        %1639 = vmatmul.mubr.f32.gmra.mrb[0].mxu0 %v1417
        %v1640 = vpop.f32.mrb[0].mxu0
        %v1641 = vadd.f32 %v1457, %v1640
        %v1642 = vpop.f32.mrb[0].mxu0
        %1643 = vmatprep.mubr.f32.mxu0 0.0
        %1644 = vmatmul.mubr.f32.gmra.mrb[0].mxu0 %v1418
        %v1645 = vpop.f32.mrb[0].mxu0
        %v1646 = vadd.f32 %v1457, %v1645
        %v1647 = vpop.f32.mrb[0].mxu0
        %1648 = vmatprep.mubr.f32.mxu0 0.0
        %1649 = vmatmul.mubr.f32.gmra.mrb[0].mxu0 %v1419
        %v1650 = vpop.f32.mrb[0].mxu0
        %v1651 = vadd.f32 %v1457, %v1650
        %v1652 = vpop.f32.mrb[0].mxu0
        %1653 = vmatprep.mubr.f32.mxu0 0.0
        %1654 = vmatmul.mubr.f32.gmra.mrb[0].mxu0 %v1420
        %v1655 = vpop.f32.mrb[0].mxu0
        %v1656 = vadd.f32 %v1457, %v1655
        %v1657 = vpop.f32.mrb[0].mxu0
        %1658 = vmatprep.mubr.f32.mxu0 0.0
        %1659 = vmatmul.mubr.f32.gmra.mrb[0].mxu0 %v1421
        %v1660 = vpop.f32.mrb[0].mxu0
        %v1661 = vadd.f32 %v1457, %v1660
        %v1662 = vpop.f32.mrb[0].mxu0
        %1663 = vmatprep.mubr.f32.mxu0 0.0
        %1664 = vmatmul.mubr.f32.gmra.mrb[0].mxu0 %v1422
        %v1665 = vpop.f32.mrb[0].mxu0
        %v1666 = vadd.f32 %v1457, %v1665
        %v1667 = vpop.f32.mrb[0].mxu0
        %1668 = vmatprep.mubr.f32.mxu0 0.0
        %1669 = vmatmul.mubr.f32.gmra.mrb[0].mxu0 %v1423
        %v1670 = vpop.f32.mrb[0].mxu0
        %v1671 = vadd.f32 %v1457, %v1670
        %v1672 = vpop.f32.mrb[0].mxu0
        %1673 = vmatprep.mubr.f32.mxu0 0.0
        %1674 = vmatmul.mubr.f32.gmra.mrb[0].mxu0 %v1424
        %v1675 = vpop.f32.mrb[0].mxu0
        %v1676 = vadd.f32 %v1457, %v1675
        %v1677 = vpop.f32.mrb[0].mxu0
        %1678 = vmatprep.mubr.f32.mxu0 0.0
        %1679 = vmatmul.mubr.f32.gmra.mrb[0].mxu0 %v1425
        %v1680 = vpop.f32.mrb[0].mxu0
        %v1681 = vadd.f32 %v1457, %v1680
        %v1682 = vpop.f32.mrb[0].mxu0
        %1683 = vdwg.mxu0
        %v1684 = vmax.f32 %v1526, 0.0
        %v1685 = vmax.f32 %v1531, 0.0
        %v1686 = vmax.f32 %v1536, 0.0
        %v1687 = vmax.f32 %v1541, 0.0
        %v1688 = vmax.f32 %v1546, 0.0
        %v1689 = vmax.f32 %v1551, 0.0
        %v1690 = vmax.f32 %v1556, 0.0
        %v1691 = vmax.f32 %v1561, 0.0
        %v1692 = vmax.f32 %v1566, 0.0
        %v1693 = vmax.f32 %v1571, 0.0
        %v1694 = vmax.f32 %v1576, 0.0
        %v1695 = vmax.f32 %v1581, 0.0
        %v1696 = vmax.f32 %v1586, 0.0
        %v1697 = vmax.f32 %v1591, 0.0
        %v1698 = vmax.f32 %v1596, 0.0
        %v1699 = vmax.f32 %v1601, 0.0
        %v1700 = vmax.f32 %v1606, 0.0
        %v1701 = vmax.f32 %v1611, 0.0
        %v1702 = vmax.f32 %v1616, 0.0
        %v1703 = vmax.f32 %v1621, 0.0
        %v1704 = vmax.f32 %v1626, 0.0
        %v1705 = vmax.f32 %v1631, 0.0
        %v1706 = vmax.f32 %v1636, 0.0
        %v1707 = vmax.f32 %v1641, 0.0
        %v1708 = vmax.f32 %v1646, 0.0
        %v1709 = vmax.f32 %v1651, 0.0
        %v1710 = vmax.f32 %v1656, 0.0
        %v1711 = vmax.f32 %v1661, 0.0
        %v1712 = vmax.f32 %v1666, 0.0
        %v1713 = vmax.f32 %v1671, 0.0
        %v1714 = vmax.f32 %v1676, 0.0
        %v1715 = vmax.f32 %v1681, 0.0
        %s1716 = scalar_lea.vmem [#allocation6], 160
        %v1717 = vld [vmem:[%s1716] sm:$0xff]
        %v1718 = vld [vmem:[%s1716 + $0x8] sm:$0xff]
        %v1719 = vld [vmem:[%s1716 + $0x10] sm:$0xff]
        %v1720 = vld [vmem:[%s1716 + $0x18] sm:$0xff]
        %1721 = vst [vmem:[#allocation2] sm:$0xff] %v1717
        %1722 = vst [vmem:[#allocation2 + $0x8] sm:$0xff] %v1718
        %1723 = vst [vmem:[#allocation2 + $0x10] sm:$0xff] %v1719
        %1724 = vst [vmem:[#allocation2 + $0x18] sm:$0xff] %v1720
        %v1725 = vld [vmem:[#allocation2] sm:$0xff]
        %v1726 = vld [vmem:[#allocation2 + $0x8] sm:$0xff]
        %v1727 = vld [vmem:[#allocation2 + $0x10] sm:$0xff]
        %v1728 = vld [vmem:[#allocation2 + $0x18] sm:$0xff]
        %v1729 = vld [vmem:[#allocation2 + $0x20] sm:$0xff]
        %v1730 = vld [vmem:[#allocation2 + $0x28] sm:$0xff]
        %v1731 = vld [vmem:[#allocation2 + $0x30] sm:$0xff]
        %v1732 = vld [vmem:[#allocation2 + $0x38] sm:$0xff]
        %v1733 = vld [vmem:[#allocation2 + $0x40] sm:$0xff]
        %v1734 = vld [vmem:[#allocation2 + $0x48] sm:$0xff]
        %v1735 = vld [vmem:[#allocation2 + $0x50] sm:$0xff]
        %v1736 = vld [vmem:[#allocation2 + $0x58] sm:$0xff]
        %v1737 = vld [vmem:[#allocation2 + $0x60] sm:$0xff]
        %v1738 = vld [vmem:[#allocation2 + $0x68] sm:$0xff]
        %v1739 = vld [vmem:[#allocation2 + $0x70] sm:$0xff]
        %v1740 = vld [vmem:[#allocation2 + $0x78] sm:$0xff]
        %s1741 = scalar_lea.vmem [#allocation8], 5
        %v1742 = vld [vmem:[%s1741] sm:$0x1]
        %v1744 = vlaneseq
        %v1745 = vshrl.u32 %v1744, 7
        %v1746 = vsub.s32 0, %v1745
        %v1747 = vrot.slane %v1742, %v1746
        %1749 = vmatprep.subr.mxu0 0.0
        %1750 = vmatpush1.msra.mxu0 %v1725
        %1751 = vmatprep.subr.mxu0 0.0
        %1752 = vmatpush1.msra.mxu0 %v1726
        %1753 = vmatprep.subr.mxu0 0.0
        %1754 = vmatpush1.msra.mxu0 %v1727
        %1755 = vmatprep.subr.mxu0 0.0
        %1756 = vmatpush1.msra.mxu0 %v1728
        %1757 = vmatprep.subr.mxu0 0.0
        %1758 = vmatpush1.msra.mxu0 %v1729
        %1759 = vmatprep.subr.mxu0 0.0
        %1760 = vmatpush1.msra.mxu0 %v1730
        %1761 = vmatprep.subr.mxu0 0.0
        %1762 = vmatpush1.msra.mxu0 %v1731
        %1763 = vmatprep.subr.mxu0 0.0
        %1764 = vmatpush1.msra.mxu0 %v1732
        %1765 = vmatprep.subr.mxu0 0.0
        %1766 = vmatpush1.msra.mxu0 %v1733
        %1767 = vmatprep.subr.mxu0 0.0
        %1768 = vmatpush1.msra.mxu0 %v1734
        %1769 = vmatprep.subr.mxu0 0.0
        %1770 = vmatpush1.msra.mxu0 %v1735
        %1771 = vmatprep.subr.mxu0 0.0
        %1772 = vmatpush1.msra.mxu0 %v1736
        %1773 = vmatprep.subr.mxu0 0.0
        %1774 = vmatpush1.msra.mxu0 %v1737
        %1775 = vmatprep.subr.mxu0 0.0
        %1776 = vmatpush1.msra.mxu0 %v1738
        %1777 = vmatprep.subr.mxu0 0.0
        %1778 = vmatpush1.msra.mxu0 %v1739
        %1779 = vmatprep.subr.mxu0 0.0
        %1780 = vmatpush1.msra.mxu0 %v1740
        %1781 = vmatprep.subr.mxu0 0.0
        %1782 = vmatpush1.msra.mxu0 0.0
        %1783 = vmatprep.subr.mxu0 0.0
        %1784 = vmatpush1.msra.mxu0 0.0
        %1785 = vmatprep.subr.mxu0 0.0
        %1786 = vmatpush1.msra.mxu0 0.0
        %1787 = vmatprep.subr.mxu0 0.0
        %1788 = vmatpush1.msra.mxu0 0.0
        %1789 = vmatprep.subr.mxu0 0.0
        %1790 = vmatpush1.msra.mxu0 0.0
        %1791 = vmatprep.subr.mxu0 0.0
        %1792 = vmatpush1.msra.mxu0 0.0
        %1793 = vmatprep.subr.mxu0 0.0
        %1794 = vmatpush1.msra.mxu0 0.0
        %1795 = vmatprep.subr.mxu0 0.0
        %1796 = vmatpush1.msra.mxu0 0.0
        %1797 = vmatprep.subr.mxu0 0.0
        %1798 = vmatpush1.msra.mxu0 0.0
        %1799 = vmatprep.subr.mxu0 0.0
        %1800 = vmatpush1.msra.mxu0 0.0
        %1801 = vmatprep.subr.mxu0 0.0
        %1802 = vmatpush1.msra.mxu0 0.0
        %1803 = vmatprep.subr.mxu0 0.0
        %1804 = vmatpush1.msra.mxu0 0.0
        %1805 = vmatprep.subr.mxu0 0.0
        %1806 = vmatpush1.msra.mxu0 0.0
        %1807 = vmatprep.subr.mxu0 0.0
        %1808 = vmatpush1.msra.mxu0 0.0
        %1809 = vmatprep.subr.mxu0 0.0
        %1810 = vmatpush1.msra.mxu0 0.0
        %1811 = vmatprep.subr.mxu0 0.0
        %1812 = vmatpush1.msra.mxu0 0.0
        %1813 = vmatprep.mubr.f32.mxu0 0.0
        %1814 = vmatmul.mubr.f32.gmra.mrb[0].mxu0 %v1684
        %v1815 = vpop.f32.mrb[0].mxu0
        %v1816 = vadd.f32 %v1747, %v1815
        %v1817 = vpop.f32.mrb[0].mxu0
        %1818 = vmatprep.mubr.f32.mxu0 0.0
        %1819 = vmatmul.mubr.f32.gmra.mrb[0].mxu0 %v1685
        %v1820 = vpop.f32.mrb[0].mxu0
        %v1821 = vadd.f32 %v1747, %v1820
        %v1822 = vpop.f32.mrb[0].mxu0
        %1823 = vmatprep.mubr.f32.mxu0 0.0
        %1824 = vmatmul.mubr.f32.gmra.mrb[0].mxu0 %v1686
        %v1825 = vpop.f32.mrb[0].mxu0
        %v1826 = vadd.f32 %v1747, %v1825
        %v1827 = vpop.f32.mrb[0].mxu0
        %1828 = vmatprep.mubr.f32.mxu0 0.0
        %1829 = vmatmul.mubr.f32.gmra.mrb[0].mxu0 %v1687
        %v1830 = vpop.f32.mrb[0].mxu0
        %v1831 = vadd.f32 %v1747, %v1830
        %v1832 = vpop.f32.mrb[0].mxu0
        %1833 = vmatprep.mubr.f32.mxu0 0.0
        %1834 = vmatmul.mubr.f32.gmra.mrb[0].mxu0 %v1688
        %v1835 = vpop.f32.mrb[0].mxu0
        %v1836 = vadd.f32 %v1747, %v1835
        %v1837 = vpop.f32.mrb[0].mxu0
        %1838 = vmatprep.mubr.f32.mxu0 0.0
        %1839 = vmatmul.mubr.f32.gmra.mrb[0].mxu0 %v1689
        %v1840 = vpop.f32.mrb[0].mxu0
        %v1841 = vadd.f32 %v1747, %v1840
        %v1842 = vpop.f32.mrb[0].mxu0
        %1843 = vmatprep.mubr.f32.mxu0 0.0
        %1844 = vmatmul.mubr.f32.gmra.mrb[0].mxu0 %v1690
        %v1845 = vpop.f32.mrb[0].mxu0
        %v1846 = vadd.f32 %v1747, %v1845
        %v1847 = vpop.f32.mrb[0].mxu0
        %1848 = vmatprep.mubr.f32.mxu0 0.0
        %1849 = vmatmul.mubr.f32.gmra.mrb[0].mxu0 %v1691
        %v1850 = vpop.f32.mrb[0].mxu0
        %v1851 = vadd.f32 %v1747, %v1850
        %v1852 = vpop.f32.mrb[0].mxu0
        %1853 = vmatprep.mubr.f32.mxu0 0.0
        %1854 = vmatmul.mubr.f32.gmra.mrb[0].mxu0 %v1692
        %v1855 = vpop.f32.mrb[0].mxu0
        %v1856 = vadd.f32 %v1747, %v1855
        %v1857 = vpop.f32.mrb[0].mxu0
        %1858 = vmatprep.mubr.f32.mxu0 0.0
        %1859 = vmatmul.mubr.f32.gmra.mrb[0].mxu0 %v1693
        %v1860 = vpop.f32.mrb[0].mxu0
        %v1861 = vadd.f32 %v1747, %v1860
        %v1862 = vpop.f32.mrb[0].mxu0
        %1863 = vmatprep.mubr.f32.mxu0 0.0
        %1864 = vmatmul.mubr.f32.gmra.mrb[0].mxu0 %v1694
        %v1865 = vpop.f32.mrb[0].mxu0
        %v1866 = vadd.f32 %v1747, %v1865
        %v1867 = vpop.f32.mrb[0].mxu0
        %1868 = vmatprep.mubr.f32.mxu0 0.0
        %1869 = vmatmul.mubr.f32.gmra.mrb[0].mxu0 %v1695
        %v1870 = vpop.f32.mrb[0].mxu0
        %v1871 = vadd.f32 %v1747, %v1870
        %v1872 = vpop.f32.mrb[0].mxu0
        %1873 = vmatprep.mubr.f32.mxu0 0.0
        %1874 = vmatmul.mubr.f32.gmra.mrb[0].mxu0 %v1696
        %v1875 = vpop.f32.mrb[0].mxu0
        %v1876 = vadd.f32 %v1747, %v1875
        %v1877 = vpop.f32.mrb[0].mxu0
        %1878 = vmatprep.mubr.f32.mxu0 0.0
        %1879 = vmatmul.mubr.f32.gmra.mrb[0].mxu0 %v1697
        %v1880 = vpop.f32.mrb[0].mxu0
        %v1881 = vadd.f32 %v1747, %v1880
        %v1882 = vpop.f32.mrb[0].mxu0
        %1883 = vmatprep.mubr.f32.mxu0 0.0
        %1884 = vmatmul.mubr.f32.gmra.mrb[0].mxu0 %v1698
        %v1885 = vpop.f32.mrb[0].mxu0
        %v1886 = vadd.f32 %v1747, %v1885
        %v1887 = vpop.f32.mrb[0].mxu0
        %1888 = vmatprep.mubr.f32.mxu0 0.0
        %1889 = vmatmul.mubr.f32.gmra.mrb[0].mxu0 %v1699
        %v1890 = vpop.f32.mrb[0].mxu0
        %v1891 = vadd.f32 %v1747, %v1890
        %v1892 = vpop.f32.mrb[0].mxu0
        %1893 = vmatprep.mubr.f32.mxu0 0.0
        %1894 = vmatmul.mubr.f32.gmra.mrb[0].mxu0 %v1700
        %v1895 = vpop.f32.mrb[0].mxu0
        %v1896 = vadd.f32 %v1747, %v1895
        %v1897 = vpop.f32.mrb[0].mxu0
        %1898 = vmatprep.mubr.f32.mxu0 0.0
        %1899 = vmatmul.mubr.f32.gmra.mrb[0].mxu0 %v1701
        %v1900 = vpop.f32.mrb[0].mxu0
        %v1901 = vadd.f32 %v1747, %v1900
        %v1902 = vpop.f32.mrb[0].mxu0
        %1903 = vmatprep.mubr.f32.mxu0 0.0
        %1904 = vmatmul.mubr.f32.gmra.mrb[0].mxu0 %v1702
        %v1905 = vpop.f32.mrb[0].mxu0
        %v1906 = vadd.f32 %v1747, %v1905
        %v1907 = vpop.f32.mrb[0].mxu0
        %1908 = vmatprep.mubr.f32.mxu0 0.0
        %1909 = vmatmul.mubr.f32.gmra.mrb[0].mxu0 %v1703
        %v1910 = vpop.f32.mrb[0].mxu0
        %v1911 = vadd.f32 %v1747, %v1910
        %v1912 = vpop.f32.mrb[0].mxu0
        %1913 = vmatprep.mubr.f32.mxu0 0.0
        %1914 = vmatmul.mubr.f32.gmra.mrb[0].mxu0 %v1704
        %v1915 = vpop.f32.mrb[0].mxu0
        %v1916 = vadd.f32 %v1747, %v1915
        %v1917 = vpop.f32.mrb[0].mxu0
        %1918 = vmatprep.mubr.f32.mxu0 0.0
        %1919 = vmatmul.mubr.f32.gmra.mrb[0].mxu0 %v1705
        %v1920 = vpop.f32.mrb[0].mxu0
        %v1921 = vadd.f32 %v1747, %v1920
        %v1922 = vpop.f32.mrb[0].mxu0
        %1923 = vmatprep.mubr.f32.mxu0 0.0
        %1924 = vmatmul.mubr.f32.gmra.mrb[0].mxu0 %v1706
        %v1925 = vpop.f32.mrb[0].mxu0
        %v1926 = vadd.f32 %v1747, %v1925
        %v1927 = vpop.f32.mrb[0].mxu0
        %1928 = vmatprep.mubr.f32.mxu0 0.0
        %1929 = vmatmul.mubr.f32.gmra.mrb[0].mxu0 %v1707
        %v1930 = vpop.f32.mrb[0].mxu0
        %v1931 = vadd.f32 %v1747, %v1930
        %v1932 = vpop.f32.mrb[0].mxu0
        %1933 = vmatprep.mubr.f32.mxu0 0.0
        %1934 = vmatmul.mubr.f32.gmra.mrb[0].mxu0 %v1708
        %v1935 = vpop.f32.mrb[0].mxu0
        %v1936 = vadd.f32 %v1747, %v1935
        %v1937 = vpop.f32.mrb[0].mxu0
        %1938 = vmatprep.mubr.f32.mxu0 0.0
        %1939 = vmatmul.mubr.f32.gmra.mrb[0].mxu0 %v1709
        %v1940 = vpop.f32.mrb[0].mxu0
        %v1941 = vadd.f32 %v1747, %v1940
        %v1942 = vpop.f32.mrb[0].mxu0
        %1943 = vmatprep.mubr.f32.mxu0 0.0
        %1944 = vmatmul.mubr.f32.gmra.mrb[0].mxu0 %v1710
        %v1945 = vpop.f32.mrb[0].mxu0
        %v1946 = vadd.f32 %v1747, %v1945
        %v1947 = vpop.f32.mrb[0].mxu0
        %1948 = vmatprep.mubr.f32.mxu0 0.0
        %1949 = vmatmul.mubr.f32.gmra.mrb[0].mxu0 %v1711
        %v1950 = vpop.f32.mrb[0].mxu0
        %v1951 = vadd.f32 %v1747, %v1950
        %v1952 = vpop.f32.mrb[0].mxu0
        %1953 = vmatprep.mubr.f32.mxu0 0.0
        %1954 = vmatmul.mubr.f32.gmra.mrb[0].mxu0 %v1712
        %v1955 = vpop.f32.mrb[0].mxu0
        %v1956 = vadd.f32 %v1747, %v1955
        %v1957 = vpop.f32.mrb[0].mxu0
        %1958 = vmatprep.mubr.f32.mxu0 0.0
        %1959 = vmatmul.mubr.f32.gmra.mrb[0].mxu0 %v1713
        %v1960 = vpop.f32.mrb[0].mxu0
        %v1961 = vadd.f32 %v1747, %v1960
        %v1962 = vpop.f32.mrb[0].mxu0
        %1963 = vmatprep.mubr.f32.mxu0 0.0
        %1964 = vmatmul.mubr.f32.gmra.mrb[0].mxu0 %v1714
        %v1965 = vpop.f32.mrb[0].mxu0
        %v1966 = vadd.f32 %v1747, %v1965
        %v1967 = vpop.f32.mrb[0].mxu0
        %1968 = vmatprep.mubr.f32.mxu0 0.0
        %1969 = vmatmul.mubr.f32.gmra.mrb[0].mxu0 %v1715
        %v1970 = vpop.f32.mrb[0].mxu0
        %v1971 = vadd.f32 %v1747, %v1970
        %v1972 = vpop.f32.mrb[0].mxu0
        %1973 = vdwg.mxu0
        %v1974 = vmax.f32 %v1816, 0.0
        %v1975 = vmax.f32 %v1821, 0.0
        %v1976 = vmax.f32 %v1826, 0.0
        %v1977 = vmax.f32 %v1831, 0.0
        %v1978 = vmax.f32 %v1836, 0.0
        %v1979 = vmax.f32 %v1841, 0.0
        %v1980 = vmax.f32 %v1846, 0.0
        %v1981 = vmax.f32 %v1851, 0.0
        %v1982 = vmax.f32 %v1856, 0.0
        %v1983 = vmax.f32 %v1861, 0.0
        %v1984 = vmax.f32 %v1866, 0.0
        %v1985 = vmax.f32 %v1871, 0.0
        %v1986 = vmax.f32 %v1876, 0.0
        %v1987 = vmax.f32 %v1881, 0.0
        %v1988 = vmax.f32 %v1886, 0.0
        %v1989 = vmax.f32 %v1891, 0.0
        %v1990 = vmax.f32 %v1896, 0.0
        %v1991 = vmax.f32 %v1901, 0.0
        %v1992 = vmax.f32 %v1906, 0.0
        %v1993 = vmax.f32 %v1911, 0.0
        %v1994 = vmax.f32 %v1916, 0.0
        %v1995 = vmax.f32 %v1921, 0.0
        %v1996 = vmax.f32 %v1926, 0.0
        %v1997 = vmax.f32 %v1931, 0.0
        %v1998 = vmax.f32 %v1936, 0.0
        %v1999 = vmax.f32 %v1941, 0.0
        %v2000 = vmax.f32 %v1946, 0.0
        %v2001 = vmax.f32 %v1951, 0.0
        %v2002 = vmax.f32 %v1956, 0.0
        %v2003 = vmax.f32 %v1961, 0.0
        %v2004 = vmax.f32 %v1966, 0.0
        %v2005 = vmax.f32 %v1971, 0.0
        %s2006 = scalar_lea.vmem [#allocation6], 192
        %v2007 = vld [vmem:[%s2006] sm:$0xff]
        %v2008 = vld [vmem:[%s2006 + $0x8] sm:$0xff]
        %v2009 = vld [vmem:[%s2006 + $0x10] sm:$0xff]
        %v2010 = vld [vmem:[%s2006 + $0x18] sm:$0xff]
        %2011 = vst [vmem:[#allocation2] sm:$0xff] %v2007
        %2012 = vst [vmem:[#allocation2 + $0x8] sm:$0xff] %v2008
        %2013 = vst [vmem:[#allocation2 + $0x10] sm:$0xff] %v2009
        %2014 = vst [vmem:[#allocation2 + $0x18] sm:$0xff] %v2010
        %v2015 = vld [vmem:[#allocation2] sm:$0xff]
        %v2016 = vld [vmem:[#allocation2 + $0x8] sm:$0xff]
        %v2017 = vld [vmem:[#allocation2 + $0x10] sm:$0xff]
        %v2018 = vld [vmem:[#allocation2 + $0x18] sm:$0xff]
        %v2019 = vld [vmem:[#allocation2 + $0x20] sm:$0xff]
        %v2020 = vld [vmem:[#allocation2 + $0x28] sm:$0xff]
        %v2021 = vld [vmem:[#allocation2 + $0x30] sm:$0xff]
        %v2022 = vld [vmem:[#allocation2 + $0x38] sm:$0xff]
        %v2023 = vld [vmem:[#allocation2 + $0x40] sm:$0xff]
        %v2024 = vld [vmem:[#allocation2 + $0x48] sm:$0xff]
        %v2025 = vld [vmem:[#allocation2 + $0x50] sm:$0xff]
        %v2026 = vld [vmem:[#allocation2 + $0x58] sm:$0xff]
        %v2027 = vld [vmem:[#allocation2 + $0x60] sm:$0xff]
        %v2028 = vld [vmem:[#allocation2 + $0x68] sm:$0xff]
        %v2029 = vld [vmem:[#allocation2 + $0x70] sm:$0xff]
        %v2030 = vld [vmem:[#allocation2 + $0x78] sm:$0xff]
        %s2031 = scalar_lea.vmem [#allocation8], 6
        %v2032 = vld [vmem:[%s2031] sm:$0x1]
        %v2034 = vlaneseq
        %v2035 = vshrl.u32 %v2034, 7
        %v2036 = vsub.s32 0, %v2035
        %v2037 = vrot.slane %v2032, %v2036
        %2039 = vmatprep.subr.mxu0 0.0
        %2040 = vmatpush1.msra.mxu0 %v2015
        %2041 = vmatprep.subr.mxu0 0.0
        %2042 = vmatpush1.msra.mxu0 %v2016
        %2043 = vmatprep.subr.mxu0 0.0
        %2044 = vmatpush1.msra.mxu0 %v2017
        %2045 = vmatprep.subr.mxu0 0.0
        %2046 = vmatpush1.msra.mxu0 %v2018
        %2047 = vmatprep.subr.mxu0 0.0
        %2048 = vmatpush1.msra.mxu0 %v2019
        %2049 = vmatprep.subr.mxu0 0.0
        %2050 = vmatpush1.msra.mxu0 %v2020
        %2051 = vmatprep.subr.mxu0 0.0
        %2052 = vmatpush1.msra.mxu0 %v2021
        %2053 = vmatprep.subr.mxu0 0.0
        %2054 = vmatpush1.msra.mxu0 %v2022
        %2055 = vmatprep.subr.mxu0 0.0
        %2056 = vmatpush1.msra.mxu0 %v2023
        %2057 = vmatprep.subr.mxu0 0.0
        %2058 = vmatpush1.msra.mxu0 %v2024
        %2059 = vmatprep.subr.mxu0 0.0
        %2060 = vmatpush1.msra.mxu0 %v2025
        %2061 = vmatprep.subr.mxu0 0.0
        %2062 = vmatpush1.msra.mxu0 %v2026
        %2063 = vmatprep.subr.mxu0 0.0
        %2064 = vmatpush1.msra.mxu0 %v2027
        %2065 = vmatprep.subr.mxu0 0.0
        %2066 = vmatpush1.msra.mxu0 %v2028
        %2067 = vmatprep.subr.mxu0 0.0
        %2068 = vmatpush1.msra.mxu0 %v2029
        %2069 = vmatprep.subr.mxu0 0.0
        %2070 = vmatpush1.msra.mxu0 %v2030
        %2071 = vmatprep.subr.mxu0 0.0
        %2072 = vmatpush1.msra.mxu0 0.0
        %2073 = vmatprep.subr.mxu0 0.0
        %2074 = vmatpush1.msra.mxu0 0.0
        %2075 = vmatprep.subr.mxu0 0.0
        %2076 = vmatpush1.msra.mxu0 0.0
        %2077 = vmatprep.subr.mxu0 0.0
        %2078 = vmatpush1.msra.mxu0 0.0
        %2079 = vmatprep.subr.mxu0 0.0
        %2080 = vmatpush1.msra.mxu0 0.0
        %2081 = vmatprep.subr.mxu0 0.0
        %2082 = vmatpush1.msra.mxu0 0.0
        %2083 = vmatprep.subr.mxu0 0.0
        %2084 = vmatpush1.msra.mxu0 0.0
        %2085 = vmatprep.subr.mxu0 0.0
        %2086 = vmatpush1.msra.mxu0 0.0
        %2087 = vmatprep.subr.mxu0 0.0
        %2088 = vmatpush1.msra.mxu0 0.0
        %2089 = vmatprep.subr.mxu0 0.0
        %2090 = vmatpush1.msra.mxu0 0.0
        %2091 = vmatprep.subr.mxu0 0.0
        %2092 = vmatpush1.msra.mxu0 0.0
        %2093 = vmatprep.subr.mxu0 0.0
        %2094 = vmatpush1.msra.mxu0 0.0
        %2095 = vmatprep.subr.mxu0 0.0
        %2096 = vmatpush1.msra.mxu0 0.0
        %2097 = vmatprep.subr.mxu0 0.0
        %2098 = vmatpush1.msra.mxu0 0.0
        %2099 = vmatprep.subr.mxu0 0.0
        %2100 = vmatpush1.msra.mxu0 0.0
        %2101 = vmatprep.subr.mxu0 0.0
        %2102 = vmatpush1.msra.mxu0 0.0
        %2103 = vmatprep.mubr.f32.mxu0 0.0
        %2104 = vmatmul.mubr.f32.gmra.mrb[0].mxu0 %v1974
        %v2105 = vpop.f32.mrb[0].mxu0
        %v2106 = vadd.f32 %v2037, %v2105
        %v2107 = vpop.f32.mrb[0].mxu0
        %2108 = vmatprep.mubr.f32.mxu0 0.0
        %2109 = vmatmul.mubr.f32.gmra.mrb[0].mxu0 %v1975
        %v2110 = vpop.f32.mrb[0].mxu0
        %v2111 = vadd.f32 %v2037, %v2110
        %v2112 = vpop.f32.mrb[0].mxu0
        %2113 = vmatprep.mubr.f32.mxu0 0.0
        %2114 = vmatmul.mubr.f32.gmra.mrb[0].mxu0 %v1976
        %v2115 = vpop.f32.mrb[0].mxu0
        %v2116 = vadd.f32 %v2037, %v2115
        %v2117 = vpop.f32.mrb[0].mxu0
        %2118 = vmatprep.mubr.f32.mxu0 0.0
        %2119 = vmatmul.mubr.f32.gmra.mrb[0].mxu0 %v1977
        %v2120 = vpop.f32.mrb[0].mxu0
        %v2121 = vadd.f32 %v2037, %v2120
        %v2122 = vpop.f32.mrb[0].mxu0
        %2123 = vmatprep.mubr.f32.mxu0 0.0
        %2124 = vmatmul.mubr.f32.gmra.mrb[0].mxu0 %v1978
        %v2125 = vpop.f32.mrb[0].mxu0
        %v2126 = vadd.f32 %v2037, %v2125
        %v2127 = vpop.f32.mrb[0].mxu0
        %2128 = vmatprep.mubr.f32.mxu0 0.0
        %2129 = vmatmul.mubr.f32.gmra.mrb[0].mxu0 %v1979
        %v2130 = vpop.f32.mrb[0].mxu0
        %v2131 = vadd.f32 %v2037, %v2130
        %v2132 = vpop.f32.mrb[0].mxu0
        %2133 = vmatprep.mubr.f32.mxu0 0.0
        %2134 = vmatmul.mubr.f32.gmra.mrb[0].mxu0 %v1980
        %v2135 = vpop.f32.mrb[0].mxu0
        %v2136 = vadd.f32 %v2037, %v2135
        %v2137 = vpop.f32.mrb[0].mxu0
        %2138 = vmatprep.mubr.f32.mxu0 0.0
        %2139 = vmatmul.mubr.f32.gmra.mrb[0].mxu0 %v1981
        %v2140 = vpop.f32.mrb[0].mxu0
        %v2141 = vadd.f32 %v2037, %v2140
        %v2142 = vpop.f32.mrb[0].mxu0
        %2143 = vmatprep.mubr.f32.mxu0 0.0
        %2144 = vmatmul.mubr.f32.gmra.mrb[0].mxu0 %v1982
        %v2145 = vpop.f32.mrb[0].mxu0
        %v2146 = vadd.f32 %v2037, %v2145
        %v2147 = vpop.f32.mrb[0].mxu0
        %2148 = vmatprep.mubr.f32.mxu0 0.0
        %2149 = vmatmul.mubr.f32.gmra.mrb[0].mxu0 %v1983
        %v2150 = vpop.f32.mrb[0].mxu0
        %v2151 = vadd.f32 %v2037, %v2150
        %v2152 = vpop.f32.mrb[0].mxu0
        %2153 = vmatprep.mubr.f32.mxu0 0.0
        %2154 = vmatmul.mubr.f32.gmra.mrb[0].mxu0 %v1984
        %v2155 = vpop.f32.mrb[0].mxu0
        %v2156 = vadd.f32 %v2037, %v2155
        %v2157 = vpop.f32.mrb[0].mxu0
        %2158 = vmatprep.mubr.f32.mxu0 0.0
        %2159 = vmatmul.mubr.f32.gmra.mrb[0].mxu0 %v1985
        %v2160 = vpop.f32.mrb[0].mxu0
        %v2161 = vadd.f32 %v2037, %v2160
        %v2162 = vpop.f32.mrb[0].mxu0
        %2163 = vmatprep.mubr.f32.mxu0 0.0
        %2164 = vmatmul.mubr.f32.gmra.mrb[0].mxu0 %v1986
        %v2165 = vpop.f32.mrb[0].mxu0
        %v2166 = vadd.f32 %v2037, %v2165
        %v2167 = vpop.f32.mrb[0].mxu0
        %2168 = vmatprep.mubr.f32.mxu0 0.0
        %2169 = vmatmul.mubr.f32.gmra.mrb[0].mxu0 %v1987
        %v2170 = vpop.f32.mrb[0].mxu0
        %v2171 = vadd.f32 %v2037, %v2170
        %v2172 = vpop.f32.mrb[0].mxu0
        %2173 = vmatprep.mubr.f32.mxu0 0.0
        %2174 = vmatmul.mubr.f32.gmra.mrb[0].mxu0 %v1988
        %v2175 = vpop.f32.mrb[0].mxu0
        %v2176 = vadd.f32 %v2037, %v2175
        %v2177 = vpop.f32.mrb[0].mxu0
        %2178 = vmatprep.mubr.f32.mxu0 0.0
        %2179 = vmatmul.mubr.f32.gmra.mrb[0].mxu0 %v1989
        %v2180 = vpop.f32.mrb[0].mxu0
        %v2181 = vadd.f32 %v2037, %v2180
        %v2182 = vpop.f32.mrb[0].mxu0
        %2183 = vmatprep.mubr.f32.mxu0 0.0
        %2184 = vmatmul.mubr.f32.gmra.mrb[0].mxu0 %v1990
        %v2185 = vpop.f32.mrb[0].mxu0
        %v2186 = vadd.f32 %v2037, %v2185
        %v2187 = vpop.f32.mrb[0].mxu0
        %2188 = vmatprep.mubr.f32.mxu0 0.0
        %2189 = vmatmul.mubr.f32.gmra.mrb[0].mxu0 %v1991
        %v2190 = vpop.f32.mrb[0].mxu0
        %v2191 = vadd.f32 %v2037, %v2190
        %v2192 = vpop.f32.mrb[0].mxu0
        %2193 = vmatprep.mubr.f32.mxu0 0.0
        %2194 = vmatmul.mubr.f32.gmra.mrb[0].mxu0 %v1992
        %v2195 = vpop.f32.mrb[0].mxu0
        %v2196 = vadd.f32 %v2037, %v2195
        %v2197 = vpop.f32.mrb[0].mxu0
        %2198 = vmatprep.mubr.f32.mxu0 0.0
        %2199 = vmatmul.mubr.f32.gmra.mrb[0].mxu0 %v1993
        %v2200 = vpop.f32.mrb[0].mxu0
        %v2201 = vadd.f32 %v2037, %v2200
        %v2202 = vpop.f32.mrb[0].mxu0
        %2203 = vmatprep.mubr.f32.mxu0 0.0
        %2204 = vmatmul.mubr.f32.gmra.mrb[0].mxu0 %v1994
        %v2205 = vpop.f32.mrb[0].mxu0
        %v2206 = vadd.f32 %v2037, %v2205
        %v2207 = vpop.f32.mrb[0].mxu0
        %2208 = vmatprep.mubr.f32.mxu0 0.0
        %2209 = vmatmul.mubr.f32.gmra.mrb[0].mxu0 %v1995
        %v2210 = vpop.f32.mrb[0].mxu0
        %v2211 = vadd.f32 %v2037, %v2210
        %v2212 = vpop.f32.mrb[0].mxu0
        %2213 = vmatprep.mubr.f32.mxu0 0.0
        %2214 = vmatmul.mubr.f32.gmra.mrb[0].mxu0 %v1996
        %v2215 = vpop.f32.mrb[0].mxu0
        %v2216 = vadd.f32 %v2037, %v2215
        %v2217 = vpop.f32.mrb[0].mxu0
        %2218 = vmatprep.mubr.f32.mxu0 0.0
        %2219 = vmatmul.mubr.f32.gmra.mrb[0].mxu0 %v1997
        %v2220 = vpop.f32.mrb[0].mxu0
        %v2221 = vadd.f32 %v2037, %v2220
        %v2222 = vpop.f32.mrb[0].mxu0
        %2223 = vmatprep.mubr.f32.mxu0 0.0
        %2224 = vmatmul.mubr.f32.gmra.mrb[0].mxu0 %v1998
        %v2225 = vpop.f32.mrb[0].mxu0
        %v2226 = vadd.f32 %v2037, %v2225
        %v2227 = vpop.f32.mrb[0].mxu0
        %2228 = vmatprep.mubr.f32.mxu0 0.0
        %2229 = vmatmul.mubr.f32.gmra.mrb[0].mxu0 %v1999
        %v2230 = vpop.f32.mrb[0].mxu0
        %v2231 = vadd.f32 %v2037, %v2230
        %v2232 = vpop.f32.mrb[0].mxu0
        %2233 = vmatprep.mubr.f32.mxu0 0.0
        %2234 = vmatmul.mubr.f32.gmra.mrb[0].mxu0 %v2000
        %v2235 = vpop.f32.mrb[0].mxu0
        %v2236 = vadd.f32 %v2037, %v2235
        %v2237 = vpop.f32.mrb[0].mxu0
        %2238 = vmatprep.mubr.f32.mxu0 0.0
        %2239 = vmatmul.mubr.f32.gmra.mrb[0].mxu0 %v2001
        %v2240 = vpop.f32.mrb[0].mxu0
        %v2241 = vadd.f32 %v2037, %v2240
        %v2242 = vpop.f32.mrb[0].mxu0
        %2243 = vmatprep.mubr.f32.mxu0 0.0
        %2244 = vmatmul.mubr.f32.gmra.mrb[0].mxu0 %v2002
        %v2245 = vpop.f32.mrb[0].mxu0
        %v2246 = vadd.f32 %v2037, %v2245
        %v2247 = vpop.f32.mrb[0].mxu0
        %2248 = vmatprep.mubr.f32.mxu0 0.0
        %2249 = vmatmul.mubr.f32.gmra.mrb[0].mxu0 %v2003
        %v2250 = vpop.f32.mrb[0].mxu0
        %v2251 = vadd.f32 %v2037, %v2250
        %v2252 = vpop.f32.mrb[0].mxu0
        %2253 = vmatprep.mubr.f32.mxu0 0.0
        %2254 = vmatmul.mubr.f32.gmra.mrb[0].mxu0 %v2004
        %v2255 = vpop.f32.mrb[0].mxu0
        %v2256 = vadd.f32 %v2037, %v2255
        %v2257 = vpop.f32.mrb[0].mxu0
        %2258 = vmatprep.mubr.f32.mxu0 0.0
        %2259 = vmatmul.mubr.f32.gmra.mrb[0].mxu0 %v2005
        %v2260 = vpop.f32.mrb[0].mxu0
        %v2261 = vadd.f32 %v2037, %v2260
        %v2262 = vpop.f32.mrb[0].mxu0
        %2263 = vdwg.mxu0
        %v2264 = vmax.f32 %v2106, 0.0
        %v2265 = vmax.f32 %v2111, 0.0
        %v2266 = vmax.f32 %v2116, 0.0
        %v2267 = vmax.f32 %v2121, 0.0
        %v2268 = vmax.f32 %v2126, 0.0
        %v2269 = vmax.f32 %v2131, 0.0
        %v2270 = vmax.f32 %v2136, 0.0
        %v2271 = vmax.f32 %v2141, 0.0
        %v2272 = vmax.f32 %v2146, 0.0
        %v2273 = vmax.f32 %v2151, 0.0
        %v2274 = vmax.f32 %v2156, 0.0
        %v2275 = vmax.f32 %v2161, 0.0
        %v2276 = vmax.f32 %v2166, 0.0
        %v2277 = vmax.f32 %v2171, 0.0
        %v2278 = vmax.f32 %v2176, 0.0
        %v2279 = vmax.f32 %v2181, 0.0
        %v2280 = vmax.f32 %v2186, 0.0
        %v2281 = vmax.f32 %v2191, 0.0
        %v2282 = vmax.f32 %v2196, 0.0
        %v2283 = vmax.f32 %v2201, 0.0
        %v2284 = vmax.f32 %v2206, 0.0
        %v2285 = vmax.f32 %v2211, 0.0
        %v2286 = vmax.f32 %v2216, 0.0
        %v2287 = vmax.f32 %v2221, 0.0
        %v2288 = vmax.f32 %v2226, 0.0
        %v2289 = vmax.f32 %v2231, 0.0
        %v2290 = vmax.f32 %v2236, 0.0
        %v2291 = vmax.f32 %v2241, 0.0
        %v2292 = vmax.f32 %v2246, 0.0
        %v2293 = vmax.f32 %v2251, 0.0
        %v2294 = vmax.f32 %v2256, 0.0
        %v2295 = vmax.f32 %v2261, 0.0
        %s2296 = scalar_lea.vmem [#allocation6], 224
        %v2297 = vld [vmem:[%s2296] sm:$0xff]
        %v2298 = vld [vmem:[%s2296 + $0x8] sm:$0xff]
        %v2299 = vld [vmem:[%s2296 + $0x10] sm:$0xff]
        %v2300 = vld [vmem:[%s2296 + $0x18] sm:$0xff]
        %2301 = vst [vmem:[#allocation2] sm:$0xff] %v2297
        %2302 = vst [vmem:[#allocation2 + $0x8] sm:$0xff] %v2298
        %2303 = vst [vmem:[#allocation2 + $0x10] sm:$0xff] %v2299
        %2304 = vst [vmem:[#allocation2 + $0x18] sm:$0xff] %v2300
        %v2305 = vld [vmem:[#allocation2] sm:$0xff]
        %v2306 = vld [vmem:[#allocation2 + $0x8] sm:$0xff]
        %v2307 = vld [vmem:[#allocation2 + $0x10] sm:$0xff]
        %v2308 = vld [vmem:[#allocation2 + $0x18] sm:$0xff]
        %v2309 = vld [vmem:[#allocation2 + $0x20] sm:$0xff]
        %v2310 = vld [vmem:[#allocation2 + $0x28] sm:$0xff]
        %v2311 = vld [vmem:[#allocation2 + $0x30] sm:$0xff]
        %v2312 = vld [vmem:[#allocation2 + $0x38] sm:$0xff]
        %v2313 = vld [vmem:[#allocation2 + $0x40] sm:$0xff]
        %v2314 = vld [vmem:[#allocation2 + $0x48] sm:$0xff]
        %v2315 = vld [vmem:[#allocation2 + $0x50] sm:$0xff]
        %v2316 = vld [vmem:[#allocation2 + $0x58] sm:$0xff]
        %v2317 = vld [vmem:[#allocation2 + $0x60] sm:$0xff]
        %v2318 = vld [vmem:[#allocation2 + $0x68] sm:$0xff]
        %v2319 = vld [vmem:[#allocation2 + $0x70] sm:$0xff]
        %v2320 = vld [vmem:[#allocation2 + $0x78] sm:$0xff]
        %s2321 = scalar_lea.vmem [#allocation8], 7
        %v2322 = vld [vmem:[%s2321] sm:$0x1]
        %v2324 = vlaneseq
        %v2325 = vshrl.u32 %v2324, 7
        %v2326 = vsub.s32 0, %v2325
        %v2327 = vrot.slane %v2322, %v2326
        %2329 = vmatprep.subr.mxu0 0.0
        %2330 = vmatpush1.msra.mxu0 %v2305
        %2331 = vmatprep.subr.mxu0 0.0
        %2332 = vmatpush1.msra.mxu0 %v2306
        %2333 = vmatprep.subr.mxu0 0.0
        %2334 = vmatpush1.msra.mxu0 %v2307
        %2335 = vmatprep.subr.mxu0 0.0
        %2336 = vmatpush1.msra.mxu0 %v2308
        %2337 = vmatprep.subr.mxu0 0.0
        %2338 = vmatpush1.msra.mxu0 %v2309
        %2339 = vmatprep.subr.mxu0 0.0
        %2340 = vmatpush1.msra.mxu0 %v2310
        %2341 = vmatprep.subr.mxu0 0.0
        %2342 = vmatpush1.msra.mxu0 %v2311
        %2343 = vmatprep.subr.mxu0 0.0
        %2344 = vmatpush1.msra.mxu0 %v2312
        %2345 = vmatprep.subr.mxu0 0.0
        %2346 = vmatpush1.msra.mxu0 %v2313
        %2347 = vmatprep.subr.mxu0 0.0
        %2348 = vmatpush1.msra.mxu0 %v2314
        %2349 = vmatprep.subr.mxu0 0.0
        %2350 = vmatpush1.msra.mxu0 %v2315
        %2351 = vmatprep.subr.mxu0 0.0
        %2352 = vmatpush1.msra.mxu0 %v2316
        %2353 = vmatprep.subr.mxu0 0.0
        %2354 = vmatpush1.msra.mxu0 %v2317
        %2355 = vmatprep.subr.mxu0 0.0
        %2356 = vmatpush1.msra.mxu0 %v2318
        %2357 = vmatprep.subr.mxu0 0.0
        %2358 = vmatpush1.msra.mxu0 %v2319
        %2359 = vmatprep.subr.mxu0 0.0
        %2360 = vmatpush1.msra.mxu0 %v2320
        %2361 = vmatprep.subr.mxu0 0.0
        %2362 = vmatpush1.msra.mxu0 0.0
        %2363 = vmatprep.subr.mxu0 0.0
        %2364 = vmatpush1.msra.mxu0 0.0
        %2365 = vmatprep.subr.mxu0 0.0
        %2366 = vmatpush1.msra.mxu0 0.0
        %2367 = vmatprep.subr.mxu0 0.0
        %2368 = vmatpush1.msra.mxu0 0.0
        %2369 = vmatprep.subr.mxu0 0.0
        %2370 = vmatpush1.msra.mxu0 0.0
        %2371 = vmatprep.subr.mxu0 0.0
        %2372 = vmatpush1.msra.mxu0 0.0
        %2373 = vmatprep.subr.mxu0 0.0
        %2374 = vmatpush1.msra.mxu0 0.0
        %2375 = vmatprep.subr.mxu0 0.0
        %2376 = vmatpush1.msra.mxu0 0.0
        %2377 = vmatprep.subr.mxu0 0.0
        %2378 = vmatpush1.msra.mxu0 0.0
        %2379 = vmatprep.subr.mxu0 0.0
        %2380 = vmatpush1.msra.mxu0 0.0
        %2381 = vmatprep.subr.mxu0 0.0
        %2382 = vmatpush1.msra.mxu0 0.0
        %2383 = vmatprep.subr.mxu0 0.0
        %2384 = vmatpush1.msra.mxu0 0.0
        %2385 = vmatprep.subr.mxu0 0.0
        %2386 = vmatpush1.msra.mxu0 0.0
        %2387 = vmatprep.subr.mxu0 0.0
        %2388 = vmatpush1.msra.mxu0 0.0
        %2389 = vmatprep.subr.mxu0 0.0
        %2390 = vmatpush1.msra.mxu0 0.0
        %2391 = vmatprep.subr.mxu0 0.0
        %2392 = vmatpush1.msra.mxu0 0.0
        %2393 = vmatprep.mubr.f32.mxu0 0.0
        %2394 = vmatmul.mubr.f32.gmra.mrb[0].mxu0 %v2264
        %v2395 = vpop.f32.mrb[0].mxu0
        %v2396 = vadd.f32 %v2327, %v2395
        %v2397 = vpop.f32.mrb[0].mxu0
        %2398 = vmatprep.mubr.f32.mxu0 0.0
        %2399 = vmatmul.mubr.f32.gmra.mrb[0].mxu0 %v2265
        %v2400 = vpop.f32.mrb[0].mxu0
        %v2401 = vadd.f32 %v2327, %v2400
        %v2402 = vpop.f32.mrb[0].mxu0
        %2403 = vmatprep.mubr.f32.mxu0 0.0
        %2404 = vmatmul.mubr.f32.gmra.mrb[0].mxu0 %v2266
        %v2405 = vpop.f32.mrb[0].mxu0
        %v2406 = vadd.f32 %v2327, %v2405
        %v2407 = vpop.f32.mrb[0].mxu0
        %2408 = vmatprep.mubr.f32.mxu0 0.0
        %2409 = vmatmul.mubr.f32.gmra.mrb[0].mxu0 %v2267
        %v2410 = vpop.f32.mrb[0].mxu0
        %v2411 = vadd.f32 %v2327, %v2410
        %v2412 = vpop.f32.mrb[0].mxu0
        %2413 = vmatprep.mubr.f32.mxu0 0.0
        %2414 = vmatmul.mubr.f32.gmra.mrb[0].mxu0 %v2268
        %v2415 = vpop.f32.mrb[0].mxu0
        %v2416 = vadd.f32 %v2327, %v2415
        %v2417 = vpop.f32.mrb[0].mxu0
        %2418 = vmatprep.mubr.f32.mxu0 0.0
        %2419 = vmatmul.mubr.f32.gmra.mrb[0].mxu0 %v2269
        %v2420 = vpop.f32.mrb[0].mxu0
        %v2421 = vadd.f32 %v2327, %v2420
        %v2422 = vpop.f32.mrb[0].mxu0
        %2423 = vmatprep.mubr.f32.mxu0 0.0
        %2424 = vmatmul.mubr.f32.gmra.mrb[0].mxu0 %v2270
        %v2425 = vpop.f32.mrb[0].mxu0
        %v2426 = vadd.f32 %v2327, %v2425
        %v2427 = vpop.f32.mrb[0].mxu0
        %2428 = vmatprep.mubr.f32.mxu0 0.0
        %2429 = vmatmul.mubr.f32.gmra.mrb[0].mxu0 %v2271
        %v2430 = vpop.f32.mrb[0].mxu0
        %v2431 = vadd.f32 %v2327, %v2430
        %v2432 = vpop.f32.mrb[0].mxu0
        %2433 = vmatprep.mubr.f32.mxu0 0.0
        %2434 = vmatmul.mubr.f32.gmra.mrb[0].mxu0 %v2272
        %v2435 = vpop.f32.mrb[0].mxu0
        %v2436 = vadd.f32 %v2327, %v2435
        %v2437 = vpop.f32.mrb[0].mxu0
        %2438 = vmatprep.mubr.f32.mxu0 0.0
        %2439 = vmatmul.mubr.f32.gmra.mrb[0].mxu0 %v2273
        %v2440 = vpop.f32.mrb[0].mxu0
        %v2441 = vadd.f32 %v2327, %v2440
        %v2442 = vpop.f32.mrb[0].mxu0
        %2443 = vmatprep.mubr.f32.mxu0 0.0
        %2444 = vmatmul.mubr.f32.gmra.mrb[0].mxu0 %v2274
        %v2445 = vpop.f32.mrb[0].mxu0
        %v2446 = vadd.f32 %v2327, %v2445
        %v2447 = vpop.f32.mrb[0].mxu0
        %2448 = vmatprep.mubr.f32.mxu0 0.0
        %2449 = vmatmul.mubr.f32.gmra.mrb[0].mxu0 %v2275
        %v2450 = vpop.f32.mrb[0].mxu0
        %v2451 = vadd.f32 %v2327, %v2450
        %v2452 = vpop.f32.mrb[0].mxu0
        %2453 = vmatprep.mubr.f32.mxu0 0.0
        %2454 = vmatmul.mubr.f32.gmra.mrb[0].mxu0 %v2276
        %v2455 = vpop.f32.mrb[0].mxu0
        %v2456 = vadd.f32 %v2327, %v2455
        %v2457 = vpop.f32.mrb[0].mxu0
        %2458 = vmatprep.mubr.f32.mxu0 0.0
        %2459 = vmatmul.mubr.f32.gmra.mrb[0].mxu0 %v2277
        %v2460 = vpop.f32.mrb[0].mxu0
        %v2461 = vadd.f32 %v2327, %v2460
        %v2462 = vpop.f32.mrb[0].mxu0
        %2463 = vmatprep.mubr.f32.mxu0 0.0
        %2464 = vmatmul.mubr.f32.gmra.mrb[0].mxu0 %v2278
        %v2465 = vpop.f32.mrb[0].mxu0
        %v2466 = vadd.f32 %v2327, %v2465
        %v2467 = vpop.f32.mrb[0].mxu0
        %2468 = vmatprep.mubr.f32.mxu0 0.0
        %2469 = vmatmul.mubr.f32.gmra.mrb[0].mxu0 %v2279
        %v2470 = vpop.f32.mrb[0].mxu0
        %v2471 = vadd.f32 %v2327, %v2470
        %v2472 = vpop.f32.mrb[0].mxu0
        %2473 = vmatprep.mubr.f32.mxu0 0.0
        %2474 = vmatmul.mubr.f32.gmra.mrb[0].mxu0 %v2280
        %v2475 = vpop.f32.mrb[0].mxu0
        %v2476 = vadd.f32 %v2327, %v2475
        %v2477 = vpop.f32.mrb[0].mxu0
        %2478 = vmatprep.mubr.f32.mxu0 0.0
        %2479 = vmatmul.mubr.f32.gmra.mrb[0].mxu0 %v2281
        %v2480 = vpop.f32.mrb[0].mxu0
        %v2481 = vadd.f32 %v2327, %v2480
        %v2482 = vpop.f32.mrb[0].mxu0
        %2483 = vmatprep.mubr.f32.mxu0 0.0
        %2484 = vmatmul.mubr.f32.gmra.mrb[0].mxu0 %v2282
        %v2485 = vpop.f32.mrb[0].mxu0
        %v2486 = vadd.f32 %v2327, %v2485
        %v2487 = vpop.f32.mrb[0].mxu0
        %2488 = vmatprep.mubr.f32.mxu0 0.0
        %2489 = vmatmul.mubr.f32.gmra.mrb[0].mxu0 %v2283
        %v2490 = vpop.f32.mrb[0].mxu0
        %v2491 = vadd.f32 %v2327, %v2490
        %v2492 = vpop.f32.mrb[0].mxu0
        %2493 = vmatprep.mubr.f32.mxu0 0.0
        %2494 = vmatmul.mubr.f32.gmra.mrb[0].mxu0 %v2284
        %v2495 = vpop.f32.mrb[0].mxu0
        %v2496 = vadd.f32 %v2327, %v2495
        %v2497 = vpop.f32.mrb[0].mxu0
        %2498 = vmatprep.mubr.f32.mxu0 0.0
        %2499 = vmatmul.mubr.f32.gmra.mrb[0].mxu0 %v2285
        %v2500 = vpop.f32.mrb[0].mxu0
        %v2501 = vadd.f32 %v2327, %v2500
        %v2502 = vpop.f32.mrb[0].mxu0
        %2503 = vmatprep.mubr.f32.mxu0 0.0
        %2504 = vmatmul.mubr.f32.gmra.mrb[0].mxu0 %v2286
        %v2505 = vpop.f32.mrb[0].mxu0
        %v2506 = vadd.f32 %v2327, %v2505
        %v2507 = vpop.f32.mrb[0].mxu0
        %2508 = vmatprep.mubr.f32.mxu0 0.0
        %2509 = vmatmul.mubr.f32.gmra.mrb[0].mxu0 %v2287
        %v2510 = vpop.f32.mrb[0].mxu0
        %v2511 = vadd.f32 %v2327, %v2510
        %v2512 = vpop.f32.mrb[0].mxu0
        %2513 = vmatprep.mubr.f32.mxu0 0.0
        %2514 = vmatmul.mubr.f32.gmra.mrb[0].mxu0 %v2288
        %v2515 = vpop.f32.mrb[0].mxu0
        %v2516 = vadd.f32 %v2327, %v2515
        %v2517 = vpop.f32.mrb[0].mxu0
        %2518 = vmatprep.mubr.f32.mxu0 0.0
        %2519 = vmatmul.mubr.f32.gmra.mrb[0].mxu0 %v2289
        %v2520 = vpop.f32.mrb[0].mxu0
        %v2521 = vadd.f32 %v2327, %v2520
        %v2522 = vpop.f32.mrb[0].mxu0
        %2523 = vmatprep.mubr.f32.mxu0 0.0
        %2524 = vmatmul.mubr.f32.gmra.mrb[0].mxu0 %v2290
        %v2525 = vpop.f32.mrb[0].mxu0
        %v2526 = vadd.f32 %v2327, %v2525
        %v2527 = vpop.f32.mrb[0].mxu0
        %2528 = vmatprep.mubr.f32.mxu0 0.0
        %2529 = vmatmul.mubr.f32.gmra.mrb[0].mxu0 %v2291
        %v2530 = vpop.f32.mrb[0].mxu0
        %v2531 = vadd.f32 %v2327, %v2530
        %v2532 = vpop.f32.mrb[0].mxu0
        %2533 = vmatprep.mubr.f32.mxu0 0.0
        %2534 = vmatmul.mubr.f32.gmra.mrb[0].mxu0 %v2292
        %v2535 = vpop.f32.mrb[0].mxu0
        %v2536 = vadd.f32 %v2327, %v2535
        %v2537 = vpop.f32.mrb[0].mxu0
        %2538 = vmatprep.mubr.f32.mxu0 0.0
        %2539 = vmatmul.mubr.f32.gmra.mrb[0].mxu0 %v2293
        %v2540 = vpop.f32.mrb[0].mxu0
        %v2541 = vadd.f32 %v2327, %v2540
        %v2542 = vpop.f32.mrb[0].mxu0
        %2543 = vmatprep.mubr.f32.mxu0 0.0
        %2544 = vmatmul.mubr.f32.gmra.mrb[0].mxu0 %v2294
        %v2545 = vpop.f32.mrb[0].mxu0
        %v2546 = vadd.f32 %v2327, %v2545
        %v2547 = vpop.f32.mrb[0].mxu0
        %2548 = vmatprep.mubr.f32.mxu0 0.0
        %2549 = vmatmul.mubr.f32.gmra.mrb[0].mxu0 %v2295
        %v2550 = vpop.f32.mrb[0].mxu0
        %v2551 = vadd.f32 %v2327, %v2550
        %v2552 = vpop.f32.mrb[0].mxu0
        %2553 = vdwg.mxu0
        %v2554 = vmax.f32 %v2396, 0.0
        %v2555 = vmax.f32 %v2401, 0.0
        %v2556 = vmax.f32 %v2406, 0.0
        %v2557 = vmax.f32 %v2411, 0.0
        %v2558 = vmax.f32 %v2416, 0.0
        %v2559 = vmax.f32 %v2421, 0.0
        %v2560 = vmax.f32 %v2426, 0.0
        %v2561 = vmax.f32 %v2431, 0.0
        %v2562 = vmax.f32 %v2436, 0.0
        %v2563 = vmax.f32 %v2441, 0.0
        %v2564 = vmax.f32 %v2446, 0.0
        %v2565 = vmax.f32 %v2451, 0.0
        %v2566 = vmax.f32 %v2456, 0.0
        %v2567 = vmax.f32 %v2461, 0.0
        %v2568 = vmax.f32 %v2466, 0.0
        %v2569 = vmax.f32 %v2471, 0.0
        %v2570 = vmax.f32 %v2476, 0.0
        %v2571 = vmax.f32 %v2481, 0.0
        %v2572 = vmax.f32 %v2486, 0.0
        %v2573 = vmax.f32 %v2491, 0.0
        %v2574 = vmax.f32 %v2496, 0.0
        %v2575 = vmax.f32 %v2501, 0.0
        %v2576 = vmax.f32 %v2506, 0.0
        %v2577 = vmax.f32 %v2511, 0.0
        %v2578 = vmax.f32 %v2516, 0.0
        %v2579 = vmax.f32 %v2521, 0.0
        %v2580 = vmax.f32 %v2526, 0.0
        %v2581 = vmax.f32 %v2531, 0.0
        %v2582 = vmax.f32 %v2536, 0.0
        %v2583 = vmax.f32 %v2541, 0.0
        %v2584 = vmax.f32 %v2546, 0.0
        %v2585 = vmax.f32 %v2551, 0.0
        %s2586 = scalar_lea.vmem [#allocation6], 256
        %v2587 = vld [vmem:[%s2586] sm:$0xff]
        %v2588 = vld [vmem:[%s2586 + $0x8] sm:$0xff]
        %v2589 = vld [vmem:[%s2586 + $0x10] sm:$0xff]
        %v2590 = vld [vmem:[%s2586 + $0x18] sm:$0xff]
        %2591 = vst [vmem:[#allocation2] sm:$0xff] %v2587
        %2592 = vst [vmem:[#allocation2 + $0x8] sm:$0xff] %v2588
        %2593 = vst [vmem:[#allocation2 + $0x10] sm:$0xff] %v2589
        %2594 = vst [vmem:[#allocation2 + $0x18] sm:$0xff] %v2590
        %v2595 = vld [vmem:[#allocation2] sm:$0xff]
        %v2596 = vld [vmem:[#allocation2 + $0x8] sm:$0xff]
        %v2597 = vld [vmem:[#allocation2 + $0x10] sm:$0xff]
        %v2598 = vld [vmem:[#allocation2 + $0x18] sm:$0xff]
        %v2599 = vld [vmem:[#allocation2 + $0x20] sm:$0xff]
        %v2600 = vld [vmem:[#allocation2 + $0x28] sm:$0xff]
        %v2601 = vld [vmem:[#allocation2 + $0x30] sm:$0xff]
        %v2602 = vld [vmem:[#allocation2 + $0x38] sm:$0xff]
        %v2603 = vld [vmem:[#allocation2 + $0x40] sm:$0xff]
        %v2604 = vld [vmem:[#allocation2 + $0x48] sm:$0xff]
        %v2605 = vld [vmem:[#allocation2 + $0x50] sm:$0xff]
        %v2606 = vld [vmem:[#allocation2 + $0x58] sm:$0xff]
        %v2607 = vld [vmem:[#allocation2 + $0x60] sm:$0xff]
        %v2608 = vld [vmem:[#allocation2 + $0x68] sm:$0xff]
        %v2609 = vld [vmem:[#allocation2 + $0x70] sm:$0xff]
        %v2610 = vld [vmem:[#allocation2 + $0x78] sm:$0xff]
        %s2611 = scalar_lea.vmem [#allocation8], 8
        %v2612 = vld [vmem:[%s2611] sm:$0x1]
        %v2614 = vlaneseq
        %v2615 = vshrl.u32 %v2614, 7
        %v2616 = vsub.s32 0, %v2615
        %v2617 = vrot.slane %v2612, %v2616
        %2619 = vmatprep.subr.mxu0 0.0
        %2620 = vmatpush1.msra.mxu0 %v2595
        %2621 = vmatprep.subr.mxu0 0.0
        %2622 = vmatpush1.msra.mxu0 %v2596
        %2623 = vmatprep.subr.mxu0 0.0
        %2624 = vmatpush1.msra.mxu0 %v2597
        %2625 = vmatprep.subr.mxu0 0.0
        %2626 = vmatpush1.msra.mxu0 %v2598
        %2627 = vmatprep.subr.mxu0 0.0
        %2628 = vmatpush1.msra.mxu0 %v2599
        %2629 = vmatprep.subr.mxu0 0.0
        %2630 = vmatpush1.msra.mxu0 %v2600
        %2631 = vmatprep.subr.mxu0 0.0
        %2632 = vmatpush1.msra.mxu0 %v2601
        %2633 = vmatprep.subr.mxu0 0.0
        %2634 = vmatpush1.msra.mxu0 %v2602
        %2635 = vmatprep.subr.mxu0 0.0
        %2636 = vmatpush1.msra.mxu0 %v2603
        %2637 = vmatprep.subr.mxu0 0.0
        %2638 = vmatpush1.msra.mxu0 %v2604
        %2639 = vmatprep.subr.mxu0 0.0
        %2640 = vmatpush1.msra.mxu0 %v2605
        %2641 = vmatprep.subr.mxu0 0.0
        %2642 = vmatpush1.msra.mxu0 %v2606
        %2643 = vmatprep.subr.mxu0 0.0
        %2644 = vmatpush1.msra.mxu0 %v2607
        %2645 = vmatprep.subr.mxu0 0.0
        %2646 = vmatpush1.msra.mxu0 %v2608
        %2647 = vmatprep.subr.mxu0 0.0
        %2648 = vmatpush1.msra.mxu0 %v2609
        %2649 = vmatprep.subr.mxu0 0.0
        %2650 = vmatpush1.msra.mxu0 %v2610
        %2651 = vmatprep.subr.mxu0 0.0
        %2652 = vmatpush1.msra.mxu0 0.0
        %2653 = vmatprep.subr.mxu0 0.0
        %2654 = vmatpush1.msra.mxu0 0.0
        %2655 = vmatprep.subr.mxu0 0.0
        %2656 = vmatpush1.msra.mxu0 0.0
        %2657 = vmatprep.subr.mxu0 0.0
        %2658 = vmatpush1.msra.mxu0 0.0
        %2659 = vmatprep.subr.mxu0 0.0
        %2660 = vmatpush1.msra.mxu0 0.0
        %2661 = vmatprep.subr.mxu0 0.0
        %2662 = vmatpush1.msra.mxu0 0.0
        %2663 = vmatprep.subr.mxu0 0.0
        %2664 = vmatpush1.msra.mxu0 0.0
        %2665 = vmatprep.subr.mxu0 0.0
        %2666 = vmatpush1.msra.mxu0 0.0
        %2667 = vmatprep.subr.mxu0 0.0
        %2668 = vmatpush1.msra.mxu0 0.0
        %2669 = vmatprep.subr.mxu0 0.0
        %2670 = vmatpush1.msra.mxu0 0.0
        %2671 = vmatprep.subr.mxu0 0.0
        %2672 = vmatpush1.msra.mxu0 0.0
        %2673 = vmatprep.subr.mxu0 0.0
        %2674 = vmatpush1.msra.mxu0 0.0
        %2675 = vmatprep.subr.mxu0 0.0
        %2676 = vmatpush1.msra.mxu0 0.0
        %2677 = vmatprep.subr.mxu0 0.0
        %2678 = vmatpush1.msra.mxu0 0.0
        %2679 = vmatprep.subr.mxu0 0.0
        %2680 = vmatpush1.msra.mxu0 0.0
        %2681 = vmatprep.subr.mxu0 0.0
        %2682 = vmatpush1.msra.mxu0 0.0
        %2683 = vmatprep.mubr.f32.mxu0 0.0
        %2684 = vmatmul.mubr.f32.gmra.mrb[0].mxu0 %v2554
        %v2685 = vpop.f32.mrb[0].mxu0
        %v2686 = vadd.f32 %v2617, %v2685
        %v2687 = vpop.f32.mrb[0].mxu0
        %2688 = vmatprep.mubr.f32.mxu0 0.0
        %2689 = vmatmul.mubr.f32.gmra.mrb[0].mxu0 %v2555
        %v2690 = vpop.f32.mrb[0].mxu0
        %v2691 = vadd.f32 %v2617, %v2690
        %v2692 = vpop.f32.mrb[0].mxu0
        %2693 = vmatprep.mubr.f32.mxu0 0.0
        %2694 = vmatmul.mubr.f32.gmra.mrb[0].mxu0 %v2556
        %v2695 = vpop.f32.mrb[0].mxu0
        %v2696 = vadd.f32 %v2617, %v2695
        %v2697 = vpop.f32.mrb[0].mxu0
        %2698 = vmatprep.mubr.f32.mxu0 0.0
        %2699 = vmatmul.mubr.f32.gmra.mrb[0].mxu0 %v2557
        %v2700 = vpop.f32.mrb[0].mxu0
        %v2701 = vadd.f32 %v2617, %v2700
        %v2702 = vpop.f32.mrb[0].mxu0
        %2703 = vmatprep.mubr.f32.mxu0 0.0
        %2704 = vmatmul.mubr.f32.gmra.mrb[0].mxu0 %v2558
        %v2705 = vpop.f32.mrb[0].mxu0
        %v2706 = vadd.f32 %v2617, %v2705
        %v2707 = vpop.f32.mrb[0].mxu0
        %2708 = vmatprep.mubr.f32.mxu0 0.0
        %2709 = vmatmul.mubr.f32.gmra.mrb[0].mxu0 %v2559
        %v2710 = vpop.f32.mrb[0].mxu0
        %v2711 = vadd.f32 %v2617, %v2710
        %v2712 = vpop.f32.mrb[0].mxu0
        %2713 = vmatprep.mubr.f32.mxu0 0.0
        %2714 = vmatmul.mubr.f32.gmra.mrb[0].mxu0 %v2560
        %v2715 = vpop.f32.mrb[0].mxu0
        %v2716 = vadd.f32 %v2617, %v2715
        %v2717 = vpop.f32.mrb[0].mxu0
        %2718 = vmatprep.mubr.f32.mxu0 0.0
        %2719 = vmatmul.mubr.f32.gmra.mrb[0].mxu0 %v2561
        %v2720 = vpop.f32.mrb[0].mxu0
        %v2721 = vadd.f32 %v2617, %v2720
        %v2722 = vpop.f32.mrb[0].mxu0
        %2723 = vmatprep.mubr.f32.mxu0 0.0
        %2724 = vmatmul.mubr.f32.gmra.mrb[0].mxu0 %v2562
        %v2725 = vpop.f32.mrb[0].mxu0
        %v2726 = vadd.f32 %v2617, %v2725
        %v2727 = vpop.f32.mrb[0].mxu0
        %2728 = vmatprep.mubr.f32.mxu0 0.0
        %2729 = vmatmul.mubr.f32.gmra.mrb[0].mxu0 %v2563
        %v2730 = vpop.f32.mrb[0].mxu0
        %v2731 = vadd.f32 %v2617, %v2730
        %v2732 = vpop.f32.mrb[0].mxu0
        %2733 = vmatprep.mubr.f32.mxu0 0.0
        %2734 = vmatmul.mubr.f32.gmra.mrb[0].mxu0 %v2564
        %v2735 = vpop.f32.mrb[0].mxu0
        %v2736 = vadd.f32 %v2617, %v2735
        %v2737 = vpop.f32.mrb[0].mxu0
        %2738 = vmatprep.mubr.f32.mxu0 0.0
        %2739 = vmatmul.mubr.f32.gmra.mrb[0].mxu0 %v2565
        %v2740 = vpop.f32.mrb[0].mxu0
        %v2741 = vadd.f32 %v2617, %v2740
        %v2742 = vpop.f32.mrb[0].mxu0
        %2743 = vmatprep.mubr.f32.mxu0 0.0
        %2744 = vmatmul.mubr.f32.gmra.mrb[0].mxu0 %v2566
        %v2745 = vpop.f32.mrb[0].mxu0
        %v2746 = vadd.f32 %v2617, %v2745
        %v2747 = vpop.f32.mrb[0].mxu0
        %2748 = vmatprep.mubr.f32.mxu0 0.0
        %2749 = vmatmul.mubr.f32.gmra.mrb[0].mxu0 %v2567
        %v2750 = vpop.f32.mrb[0].mxu0
        %v2751 = vadd.f32 %v2617, %v2750
        %v2752 = vpop.f32.mrb[0].mxu0
        %2753 = vmatprep.mubr.f32.mxu0 0.0
        %2754 = vmatmul.mubr.f32.gmra.mrb[0].mxu0 %v2568
        %v2755 = vpop.f32.mrb[0].mxu0
        %v2756 = vadd.f32 %v2617, %v2755
        %v2757 = vpop.f32.mrb[0].mxu0
        %2758 = vmatprep.mubr.f32.mxu0 0.0
        %2759 = vmatmul.mubr.f32.gmra.mrb[0].mxu0 %v2569
        %v2760 = vpop.f32.mrb[0].mxu0
        %v2761 = vadd.f32 %v2617, %v2760
        %v2762 = vpop.f32.mrb[0].mxu0
        %2763 = vmatprep.mubr.f32.mxu0 0.0
        %2764 = vmatmul.mubr.f32.gmra.mrb[0].mxu0 %v2570
        %v2765 = vpop.f32.mrb[0].mxu0
        %v2766 = vadd.f32 %v2617, %v2765
        %v2767 = vpop.f32.mrb[0].mxu0
        %2768 = vmatprep.mubr.f32.mxu0 0.0
        %2769 = vmatmul.mubr.f32.gmra.mrb[0].mxu0 %v2571
        %v2770 = vpop.f32.mrb[0].mxu0
        %v2771 = vadd.f32 %v2617, %v2770
        %v2772 = vpop.f32.mrb[0].mxu0
        %2773 = vmatprep.mubr.f32.mxu0 0.0
        %2774 = vmatmul.mubr.f32.gmra.mrb[0].mxu0 %v2572
        %v2775 = vpop.f32.mrb[0].mxu0
        %v2776 = vadd.f32 %v2617, %v2775
        %v2777 = vpop.f32.mrb[0].mxu0
        %2778 = vmatprep.mubr.f32.mxu0 0.0
        %2779 = vmatmul.mubr.f32.gmra.mrb[0].mxu0 %v2573
        %v2780 = vpop.f32.mrb[0].mxu0
        %v2781 = vadd.f32 %v2617, %v2780
        %v2782 = vpop.f32.mrb[0].mxu0
        %2783 = vmatprep.mubr.f32.mxu0 0.0
        %2784 = vmatmul.mubr.f32.gmra.mrb[0].mxu0 %v2574
        %v2785 = vpop.f32.mrb[0].mxu0
        %v2786 = vadd.f32 %v2617, %v2785
        %v2787 = vpop.f32.mrb[0].mxu0
        %2788 = vmatprep.mubr.f32.mxu0 0.0
        %2789 = vmatmul.mubr.f32.gmra.mrb[0].mxu0 %v2575
        %v2790 = vpop.f32.mrb[0].mxu0
        %v2791 = vadd.f32 %v2617, %v2790
        %v2792 = vpop.f32.mrb[0].mxu0
        %2793 = vmatprep.mubr.f32.mxu0 0.0
        %2794 = vmatmul.mubr.f32.gmra.mrb[0].mxu0 %v2576
        %v2795 = vpop.f32.mrb[0].mxu0
        %v2796 = vadd.f32 %v2617, %v2795
        %v2797 = vpop.f32.mrb[0].mxu0
        %2798 = vmatprep.mubr.f32.mxu0 0.0
        %2799 = vmatmul.mubr.f32.gmra.mrb[0].mxu0 %v2577
        %v2800 = vpop.f32.mrb[0].mxu0
        %v2801 = vadd.f32 %v2617, %v2800
        %v2802 = vpop.f32.mrb[0].mxu0
        %2803 = vmatprep.mubr.f32.mxu0 0.0
        %2804 = vmatmul.mubr.f32.gmra.mrb[0].mxu0 %v2578
        %v2805 = vpop.f32.mrb[0].mxu0
        %v2806 = vadd.f32 %v2617, %v2805
        %v2807 = vpop.f32.mrb[0].mxu0
        %2808 = vmatprep.mubr.f32.mxu0 0.0
        %2809 = vmatmul.mubr.f32.gmra.mrb[0].mxu0 %v2579
        %v2810 = vpop.f32.mrb[0].mxu0
        %v2811 = vadd.f32 %v2617, %v2810
        %v2812 = vpop.f32.mrb[0].mxu0
        %2813 = vmatprep.mubr.f32.mxu0 0.0
        %2814 = vmatmul.mubr.f32.gmra.mrb[0].mxu0 %v2580
        %v2815 = vpop.f32.mrb[0].mxu0
        %v2816 = vadd.f32 %v2617, %v2815
        %v2817 = vpop.f32.mrb[0].mxu0
        %2818 = vmatprep.mubr.f32.mxu0 0.0
        %2819 = vmatmul.mubr.f32.gmra.mrb[0].mxu0 %v2581
        %v2820 = vpop.f32.mrb[0].mxu0
        %v2821 = vadd.f32 %v2617, %v2820
        %v2822 = vpop.f32.mrb[0].mxu0
        %2823 = vmatprep.mubr.f32.mxu0 0.0
        %2824 = vmatmul.mubr.f32.gmra.mrb[0].mxu0 %v2582
        %v2825 = vpop.f32.mrb[0].mxu0
        %v2826 = vadd.f32 %v2617, %v2825
        %v2827 = vpop.f32.mrb[0].mxu0
        %2828 = vmatprep.mubr.f32.mxu0 0.0
        %2829 = vmatmul.mubr.f32.gmra.mrb[0].mxu0 %v2583
        %v2830 = vpop.f32.mrb[0].mxu0
        %v2831 = vadd.f32 %v2617, %v2830
        %v2832 = vpop.f32.mrb[0].mxu0
        %2833 = vmatprep.mubr.f32.mxu0 0.0
        %2834 = vmatmul.mubr.f32.gmra.mrb[0].mxu0 %v2584
        %v2835 = vpop.f32.mrb[0].mxu0
        %v2836 = vadd.f32 %v2617, %v2835
        %v2837 = vpop.f32.mrb[0].mxu0
        %2838 = vmatprep.mubr.f32.mxu0 0.0
        %2839 = vmatmul.mubr.f32.gmra.mrb[0].mxu0 %v2585
        %v2840 = vpop.f32.mrb[0].mxu0
        %v2841 = vadd.f32 %v2617, %v2840
        %v2842 = vpop.f32.mrb[0].mxu0
        %2843 = vdwg.mxu0
        %2844 = vst [vmem:[%s217] sm:$0xff] %v2686
        %2845 = vst [vmem:[%s217 + $0x8] sm:$0xff] %v2691
        %2846 = vst [vmem:[%s217 + $0x10] sm:$0xff] %v2696
        %2847 = vst [vmem:[%s217 + $0x18] sm:$0xff] %v2701
        %2848 = vst [vmem:[%s217 + $0x20] sm:$0xff] %v2706
        %2849 = vst [vmem:[%s217 + $0x28] sm:$0xff] %v2711
        %2850 = vst [vmem:[%s217 + $0x30] sm:$0xff] %v2716
        %2851 = vst [vmem:[%s217 + $0x38] sm:$0xff] %v2721
        %2852 = vst [vmem:[%s217 + $0x40] sm:$0xff] %v2726
        %2853 = vst [vmem:[%s217 + $0x48] sm:$0xff] %v2731
        %2854 = vst [vmem:[%s217 + $0x50] sm:$0xff] %v2736
        %2855 = vst [vmem:[%s217 + $0x58] sm:$0xff] %v2741
        %2856 = vst [vmem:[%s217 + $0x60] sm:$0xff] %v2746
        %2857 = vst [vmem:[%s217 + $0x68] sm:$0xff] %v2751
        %2858 = vst [vmem:[%s217 + $0x70] sm:$0xff] %v2756
        %2859 = vst [vmem:[%s217 + $0x78] sm:$0xff] %v2761
        %2860 = vst [vmem:[%s217 + $0x80] sm:$0xff] %v2766
        %2861 = vst [vmem:[%s217 + $0x88] sm:$0xff] %v2771
        %2862 = vst [vmem:[%s217 + $0x90] sm:$0xff] %v2776
        %2863 = vst [vmem:[%s217 + $0x98] sm:$0xff] %v2781
        %2864 = vst [vmem:[%s217 + $0xa0] sm:$0xff] %v2786
        %2865 = vst [vmem:[%s217 + $0xa8] sm:$0xff] %v2791
        %2866 = vst [vmem:[%s217 + $0xb0] sm:$0xff] %v2796
        %2867 = vst [vmem:[%s217 + $0xb8] sm:$0xff] %v2801
        %2868 = vst [vmem:[%s217 + $0xc0] sm:$0xff] %v2806
        %2869 = vst [vmem:[%s217 + $0xc8] sm:$0xff] %v2811
        %2870 = vst [vmem:[%s217 + $0xd0] sm:$0xff] %v2816
        %2871 = vst [vmem:[%s217 + $0xd8] sm:$0xff] %v2821
        %2872 = vst [vmem:[%s217 + $0xe0] sm:$0xff] %v2826
        %2873 = vst [vmem:[%s217 + $0xe8] sm:$0xff] %v2831
        %2874 = vst [vmem:[%s217 + $0xf0] sm:$0xff] %v2836
        %2875 = vst [vmem:[%s217 + $0xf8] sm:$0xff] %v2841
        %s2876 = sand.u32 %s97, 1
        %s2877 = scalar_lea.sflag [#allocation5], %s2876
        %s2878 = sand.u32 %s97, 1
        %s2879 = smul.addr %s2878, 256
        %s2880 = scalar_lea.vmem [#allocation9], %s2879
        // Predicated region
        $region45: #{tpu_custom_call.1} parent=31 // pred_check
          %p2881 = pneg %p107
        $region46: #{tpu_custom_call.1} parent=31 // pred_check_branch
          %2883 = sbr.rel (%p2881) target = $region48
        $region47: #{tpu_custom_call.1} parent=31 // pred_region
          %s2884 = smul.u32 32, %s21
          %s2886 = ssub.s32 4096, 4096
          %2887 = vsyncadd %s2877, %s2886
          %s2888 = smul.addr %s2884, 128
          %s2889 = scalar_lea.hbm %s3, %s2888
          %s2890 = sshll.u32 %s2880, 4
          %s2891 = int_to_ptr.vmem [resolvable:$true] %s2890
          %2896 = dma.vmem_to_hbm [thread:$0]  %s2891, 4096, %s2889, %s2877, 128, 128, 8
        $region48: #{tpu_custom_call.1} parent=31 // pred_fallthru
          _
      $region32: #{tpu_custom_call.1} parent=5 // pred_fallthru
        _
      %p2897 = scmp.le.s32.totalorder 2, %s16
      // Predicated region
      $region49: #{tpu_custom_call.1} parent=5 // pred_check
        %p2898 = pneg %p2897
      $region50: #{tpu_custom_call.1} parent=5 // pred_check_branch
        %2900 = sbr.rel (%p2898) target = $region52
      $region51: #{tpu_custom_call.1} parent=5 // pred_region
        %s2901 = ssub.s32 %s16, 2
        // Predicated region
        $region53: #{tpu_custom_call.1} parent=51 // pred_check
          %p2902 = pneg %p113
        $region54: #{tpu_custom_call.1} parent=51 // pred_check_branch
          %2904 = sbr.rel (%p2902) target = $region56
        $region55: #{tpu_custom_call.1} parent=51 // pred_region
          %s2905 = sand.u32 %s98, 1
          %s2906 = scalar_lea.sflag [#allocation5], %s2905
          %s2907 = sand.u32 %s98, 1
          %s2908 = smul.addr %s2907, 256
          %s2909 = scalar_lea.vmem [#allocation9], %s2908
          %2910 = dma.done %s2906, 4096
        $region56: #{tpu_custom_call.1} parent=51 // pred_fallthru
          _
      $region52: #{tpu_custom_call.1} parent=5 // pred_fallthru
        _
    $region6: #{tpu_custom_call.1} parent=1 // loop_footer
      %s20 = sadd.s32 1, %s16
    $region7: #{tpu_custom_call.1} parent=1 // loop_footer_branch
      %15 = sbr.rel target = $region3
    $region8: #{tpu_custom_call.1} parent=1 // loop_exit
      _
    %2911 = vsyncpa [#allocation4], 1
    %s2912 = scalar_lea.sflag [#allocation4], 1
    %2913 = vsyncpa %s2912, 1
    %2914 = vsyncpa [#allocation7], 1
    %2915 = vsyncpa [#allocation5], 1
    %s2916 = scalar_lea.sflag [#allocation5], 1
    %2917 = vsyncpa %s2916, 1

</llo_original>
